<compile_context>
chip_gen: v5e
topology: v5e:2x2
jax: 0.10.0
libtpu: 0.0.40
codegen_flags: <defaults>
</compile_context>

<pallas_src>
import functools

import jax
import jax.numpy as jnp
from jax import lax
from jax.experimental import pallas as pl
from jax.experimental.pallas import tpu as pltpu


# ----------------------------------------------------------------------------
# Fused Pallas kernel: 2-layer BiLSTM + output projection, fully VMEM-resident
# ----------------------------------------------------------------------------
def _bilstm_fused_kernel(*refs, seq_len, batch, hidden, num_layers):
    """refs layout (positional, as passed by pallas_call):

      refs[0]                      x_flat   (T*Bp, E)    bf16  time-major rows
      refs[1+3l : 4+3l]            layer l: wih (In,8H) bf16,
                                            whh (2H,8H) bf16 (block-diagonal),
                                            bias (1,8H) f32
      refs[1+3L], refs[2+3L]       w_out_t (2H, O) bf16, b_out (1, O) f32
      refs[3+3L]                   out_ref (T*Bp, O) f32
      refs[4+3L], refs[5+3L]       scratch: gx (T*Bp, 8H) f32, h (T*Bp, 2H) f32

    Combined 8H gate-column order is [i_f,i_b, f_f,f_b, g_f,g_b, o_f,o_b]
    (each block H wide), so the fused fwd/bwd state [h_f | h_b] (2H lanes)
    goes through ONE matmul per step and the gate math stays full-width.
    """
    T, Bp, H = seq_len, batch, hidden
    H2, H8 = 2 * H, 8 * H

    x_ref = refs[0]
    layer_refs = [refs[1 + 3 * l: 4 + 3 * l] for l in range(num_layers)]
    wout_ref = refs[1 + 3 * num_layers]
    bout_ref = refs[2 + 3 * num_layers]
    out_ref = refs[3 + 3 * num_layers]
    gx_ref = refs[4 + 3 * num_layers]      # hoisted input-gate projections
    h_ref = refs[5 + 3 * num_layers]       # layer output [h_f | h_b] per (t,b)

    # Lane mask, computed once (hoisted): within each 2H-wide gate group the
    # first H lanes belong to the forward direction, the last H to backward.
    lane = lax.broadcasted_iota(jnp.int32, (Bp, H8), 1)
    fwd_mask = (lane % H2) < H

    def run_layer(wih_ref, whh_ref, b_ref, layer_in):
        # --- hoisted input projection: one MXU call for all T steps + bias ---
        gx_ref[...] = (
            jnp.dot(layer_in, wih_ref[...], preferred_element_type=jnp.float32)
            + b_ref[...])

        whh = whh_ref[...]                             # (2H, 8H) bf16

        def step(s, carry):
            h_fb, c_fb = carry                         # (Bp, 2H) f32
            r = T - 1 - s
            row_f = pl.multiple_of(s * Bp, Bp)
            row_b = pl.multiple_of(r * Bp, Bp)

            # Single 256-lane recurrence matmul for both directions.
            g_rec = jnp.dot(h_fb.astype(whh.dtype), whh,
                            preferred_element_type=jnp.float32)   # (Bp, 8H)
            gx_fwd = gx_ref[pl.ds(row_f, Bp), :]
            gx_bwd = gx_ref[pl.ds(row_b, Bp), :]
            gates = g_rec + jnp.where(fwd_mask, gx_fwd, gx_bwd)

            # PyTorch gate order i, f, g, o; each slice covers both directions.
            i_g = jax.nn.sigmoid(gates[:, 0 * H2:1 * H2])
            f_g = jax.nn.sigmoid(gates[:, 1 * H2:2 * H2])
            g_g = jnp.tanh(gates[:, 2 * H2:3 * H2])
            o_g = jax.nn.sigmoid(gates[:, 3 * H2:4 * H2])

            c_new = f_g * c_fb + i_g * g_g
            h_new = o_g * jnp.tanh(c_new)

            # fwd hidden belongs to time s, bwd hidden to time T-1-s.
            h_ref[pl.ds(row_f, Bp), 0:H] = h_new[:, 0:H]
            h_ref[pl.ds(row_b, Bp), H:H2] = h_new[:, H:H2]
            return h_new, c_new

        zeros = jnp.zeros((Bp, H2), jnp.float32)
        lax.fori_loop(0, T, step, (zeros, zeros), unroll=True)

    # Layer 0 consumes the embedded tokens.
    run_layer(*layer_refs[0], x_ref[...])
    # Later layers consume the previous layer's [h_f | h_b] output.
    # (inter-layer LSTM dropout is identity in eval mode)
    for l in range(1, num_layers):
        run_layer(*layer_refs[l], h_ref[...].astype(jnp.bfloat16))

    # Final linear over all (t, b) rows at once.
    out_ref[...] = (
        jnp.dot(h_ref[...].astype(wout_ref.dtype), wout_ref[...],
                preferred_element_type=jnp.float32)
        + bout_ref[...]).astype(out_ref.dtype)


# ----------------------------------------------------------------------------
# Parameter construction (deterministic, synthetic, PyTorch layout)
# ----------------------------------------------------------------------------
def init_params(key, *, vocab_size, embedding_dim, hidden_dim, num_layers,
                output_dim, padding_idx):
    keys = jax.random.split(key, 64)
    ki = iter(keys)

    emb = 0.1 * jax.random.normal(next(ki), (vocab_size, embedding_dim),
                                  jnp.float32)
    emb = emb.at[padding_idx].set(0.0)          # padding_idx row zeroed

    k = 1.0 / jnp.sqrt(hidden_dim)
    layers = []
    for layer in range(num_layers):
        in_dim = embedding_dim if layer == 0 else 2 * hidden_dim
        dirs = {}
        for name in ("fwd", "bwd"):
            dirs[name] = dict(
                w_ih=jax.random.uniform(next(ki), (4 * hidden_dim, in_dim),
                                        jnp.float32, -k, k),
                w_hh=jax.random.uniform(next(ki), (4 * hidden_dim, hidden_dim),
                                        jnp.float32, -k, k),
                b_ih=jax.random.uniform(next(ki), (4 * hidden_dim,),
                                        jnp.float32, -k, k),
                b_hh=jax.random.uniform(next(ki), (4 * hidden_dim,),
                                        jnp.float32, -k, k),
            )
        layers.append(dirs)

    kout = 1.0 / jnp.sqrt(2 * hidden_dim)
    w_out = jax.random.uniform(next(ki), (output_dim, 2 * hidden_dim),
                               jnp.float32, -kout, kout)
    b_out = jax.random.uniform(next(ki), (output_dim,), jnp.float32,
                               -kout, kout)
    return dict(embedding=emb, lstm=layers, w_out=w_out, b_out=b_out)


# ----------------------------------------------------------------------------
# Kernel-side weight packing (done once, outside jit)
# ----------------------------------------------------------------------------
def _interleave_gate_cols(f_t, b_t, H):
    """f_t/b_t: (K, 4H) -> (K, 8H), columns [i_f,i_b,f_f,f_b,g_f,g_b,o_f,o_b]."""
    blocks = []
    for g in range(4):
        blocks.append(f_t[:, g * H:(g + 1) * H])
        blocks.append(b_t[:, g * H:(g + 1) * H])
    return jnp.concatenate(blocks, axis=1)


def _blockdiag_hh(w_hh_f, w_hh_b, H):
    """(4H, H) PyTorch W_hh per direction -> (2H, 8H) block-diagonal combined."""
    f_t, b_t = w_hh_f.T, w_hh_b.T                  # (H, 4H)
    z = jnp.zeros((H, H), f_t.dtype)
    blocks = []
    for g in range(4):
        blocks.append(jnp.concatenate([f_t[:, g * H:(g + 1) * H], z], axis=0))
        blocks.append(jnp.concatenate([z, b_t[:, g * H:(g + 1) * H]], axis=0))
    return jnp.concatenate(blocks, axis=1)         # (2H, 8H)


def pack_params(params):
    H = params["lstm"][0]["fwd"]["w_hh"].shape[1]
    layers = []
    for lyr in params["lstm"]:
        f, b = lyr["fwd"], lyr["bwd"]
        wih = _interleave_gate_cols(f["w_ih"].T, b["w_ih"].T, H)
        whh = _blockdiag_hh(f["w_hh"], b["w_hh"], H)
        bias = _interleave_gate_cols((f["b_ih"] + f["b_hh"])[None, :],
                                     (b["b_ih"] + b["b_hh"])[None, :], H)
        layers.append(dict(wih=wih.astype(jnp.bfloat16),
                           whh=whh.astype(jnp.bfloat16),
                           bias=bias))                      # f32 (1, 8H)
    return dict(
        embedding=params["embedding"],
        layers=layers,
        w_out_t=params["w_out"].T.astype(jnp.bfloat16),     # (2H, O)
        b_out=params["b_out"][None, :],                     # (1, O) f32
    )


# ----------------------------------------------------------------------------
# Forward pass (single Pallas kernel + thin JAX glue)
# ----------------------------------------------------------------------------
def bilstm_forward(packed, sents):
    B, T = sents.shape
    H = packed["layers"][0]["whh"].shape[0] // 2
    O = packed["w_out_t"].shape[1]
    E = packed["embedding"].shape[1]
    Bp = ((B + 7) // 8) * 8        # pad batch to a full sublane group

    # Embedding lookup (gather) -- glue, plain JAX.
    x = jnp.take(packed["embedding"], sents, axis=0)           # (B, T, E)
    x = jnp.pad(x, ((0, Bp - B), (0, 0), (0, 0)))              # (Bp, T, E)
    x_flat = (jnp.transpose(x, (1, 0, 2))
              .reshape(T * Bp, E).astype(jnp.bfloat16))        # time-major rows

    num_layers = len(packed["layers"])
    kernel = functools.partial(_bilstm_fused_kernel, seq_len=T, batch=Bp,
                               hidden=H, num_layers=num_layers)

    operands = [x_flat]
    for lyr in packed["layers"]:
        operands += [lyr["wih"], lyr["whh"], lyr["bias"]]
    operands += [packed["w_out_t"], packed["b_out"]]

    logits = pl.pallas_call(
        kernel,
        out_shape=jax.ShapeDtypeStruct((T * Bp, O), jnp.float32),
        grid=(1,),
        in_specs=[pl.BlockSpec(a.shape, lambda i: (0, 0)) for a in operands],
        out_specs=pl.BlockSpec((T * Bp, O), lambda i: (0, 0)),
        scratch_shapes=[
            pltpu.VMEM((T * Bp, 8 * H), jnp.float32),   # hoisted input gates
            pltpu.VMEM((T * Bp, 2 * H), jnp.float32),   # layer output [h_f|h_b]
        ],
        compiler_params=pltpu.CompilerParams(
            dimension_semantics=("arbitrary",)),
    )(*operands)

    logits = logits.reshape(T, Bp, O)[:, :B]                   # (T, B, O)
    # TODO(synk): for realistic seq lengths compute the projection transposed
    # in-kernel so the output is already (B, O, T) with T lane-dense.
    return jnp.transpose(logits, (1, 2, 0))                    # (B, O, T)


# ----------------------------------------------------------------------------
# Pure-JAX reference (same math, no Pallas, raw per-direction weights)
# ----------------------------------------------------------------------------
def _ref_lstm_dir(x_tm, wd, reverse):
    T, B, _ = x_tm.shape
    H = wd["w_hh"].shape[1]
    wih_t, whh_t = wd["w_ih"].T, wd["w_hh"].T
    bias = (wd["b_ih"] + wd["b_hh"])[None, :]
    h = jnp.zeros((B, H), jnp.float32)
    c = jnp.zeros((B, H), jnp.float32)
    outs = [None] * T
    order = range(T - 1, -1, -1) if reverse else range(T)
    for t in order:
        gates = x_tm[t] @ wih_t + h @ whh_t + bias
        i_g = jax.nn.sigmoid(gates[:, 0 * H:1 * H])
        f_g = jax.nn.sigmoid(gates[:, 1 * H:2 * H])
        g_g = jnp.tanh(gates[:, 2 * H:3 * H])
        o_g = jax.nn.sigmoid(gates[:, 3 * H:4 * H])
        c = f_g * c + i_g * g_g
        h = o_g * jnp.tanh(c)
        outs[t] = h
    return jnp.stack(outs, axis=0)


def bilstm_forward_ref(params, sents):
    x = jnp.take(params["embedding"], sents, axis=0)
    h = jnp.transpose(x, (1, 0, 2))
    for layer in params["lstm"]:
        fwd = _ref_lstm_dir(h, layer["fwd"], reverse=False)
        bwd = _ref_lstm_dir(h, layer["bwd"], reverse=True)
        h = jnp.concatenate([fwd, bwd], axis=-1)
    outputs = jnp.transpose(h, (1, 0, 2))
    B, T, D = outputs.shape
    logits = outputs.reshape(B * T, D) @ params["w_out"].T + params["b_out"]
    return jnp.transpose(logits.reshape(B, T, -1), (0, 2, 1))


# ----------------------------------------------------------------------------
if __name__ == "__main__":
    B, T = 2, 8
    VOCAB, EMB_DIM, HIDDEN, LAYERS, OUT_DIM = 40, 32, 32, 2, 5
    PADDING_IDX = 0

    key = jax.random.PRNGKey(0)
    pkey, skey = jax.random.split(key)
    params = init_params(pkey, vocab_size=VOCAB, embedding_dim=EMB_DIM,
                         hidden_dim=HIDDEN, num_layers=LAYERS,
                         output_dim=OUT_DIM, padding_idx=PADDING_IDX)
    packed = pack_params(params)

    sents = jax.random.randint(skey, (B, T), 0, VOCAB, dtype=jnp.int32)

    preds = jax.jit(bilstm_forward)(packed, sents)
    preds = jax.block_until_ready(preds)

    assert preds.shape == (B, OUT_DIM, T), preds.shape
    assert bool(jnp.all(jnp.isfinite(preds)))

    ref = jax.jit(bilstm_forward_ref)(params, sents)
    assert bool(jnp.allclose(preds, ref, atol=5e-2, rtol=5e-2)), (
        float(jnp.max(jnp.abs(preds - ref))))

    print("KERNEL_OK")
</pallas_src>

<mosaic_0001>
module attributes {stable_mosaic.version = 11 : i64} {
  func.func @_bilstm_fused_kernel(%arg0: i32, %arg1: memref<64x32xbf16, #tpu.memory_space<vmem>>, %arg2: memref<32x256xbf16, #tpu.memory_space<vmem>>, %arg3: memref<64x256xbf16, #tpu.memory_space<vmem>>, %arg4: memref<1x256xf32, #tpu.memory_space<vmem>>, %arg5: memref<64x256xbf16, #tpu.memory_space<vmem>>, %arg6: memref<64x256xbf16, #tpu.memory_space<vmem>>, %arg7: memref<1x256xf32, #tpu.memory_space<vmem>>, %arg8: memref<64x5xbf16, #tpu.memory_space<vmem>>, %arg9: memref<1x5xf32, #tpu.memory_space<vmem>>, %arg10: memref<64x5xf32, #tpu.memory_space<vmem>>, %arg11: memref<64x256xf32, #tpu.memory_space<vmem>>, %arg12: memref<64x64xf32, #tpu.memory_space<vmem>>) attributes {dimension_semantics = [#tpu.dimension_semantics<arbitrary>], iteration_bounds = array<i64: 1>, scalar_prefetch = 0 : i64, scratch_operands = 2 : i64, tpu.core_type = #tpu.core_type<tc>, window_params = [{pipeline_mode = #tpu.pipeline_mode<synchronous>, transform_indices = @transform_0, window_bounds = array<i64: 64, 32>}, {pipeline_mode = #tpu.pipeline_mode<synchronous>, transform_indices = @transform_1, window_bounds = array<i64: 32, 256>}, {pipeline_mode = #tpu.pipeline_mode<synchronous>, transform_indices = @transform_2, window_bounds = array<i64: 64, 256>}, {pipeline_mode = #tpu.pipeline_mode<synchronous>, transform_indices = @transform_3, window_bounds = array<i64: 1, 256>}, {pipeline_mode = #tpu.pipeline_mode<synchronous>, transform_indices = @transform_4, window_bounds = array<i64: 64, 256>}, {pipeline_mode = #tpu.pipeline_mode<synchronous>, transform_indices = @transform_5, window_bounds = array<i64: 64, 256>}, {pipeline_mode = #tpu.pipeline_mode<synchronous>, transform_indices = @transform_6, window_bounds = array<i64: 1, 256>}, {pipeline_mode = #tpu.pipeline_mode<synchronous>, transform_indices = @transform_7, window_bounds = array<i64: 64, 5>}, {pipeline_mode = #tpu.pipeline_mode<synchronous>, transform_indices = @transform_8, window_bounds = array<i64: 1, 5>}, {pipeline_mode = #tpu.pipeline_mode<synchronous>, transform_indices = @transform_9, window_bounds = array<i64: 64, 5>}]} {
    %0 = tpu.iota {dimensions = array<i32: 1>} : vector<8x256xi32>
    %c64_i32 = arith.constant 64 : i32
    %c0_i32 = arith.constant 0 : i32
    %1 = arith.cmpi eq, %c64_i32, %c0_i32 : i32
    %c1_i32 = arith.constant 1 : i32
    %2 = arith.select %1, %c1_i32, %c64_i32 : i32
    %3 = vector.broadcast %2 : i32 to vector<8x256xi32>
    %4 = arith.remsi %0, %3 : vector<8x256xi32>
    %c0_i32_0 = arith.constant 0 : i32
    %5 = vector.broadcast %c0_i32_0 : i32 to vector<8x256xi32>
    %6 = arith.cmpi ne, %4, %5 : vector<8x256xi32>
    %c0_i32_1 = arith.constant 0 : i32
    %7 = vector.broadcast %c0_i32_1 : i32 to vector<8x256xi32>
    %8 = arith.cmpi slt, %4, %7 : vector<8x256xi32>
    %c0_i32_2 = arith.constant 0 : i32
    %9 = arith.cmpi slt, %2, %c0_i32_2 : i32
    %10 = vector.broadcast %9 : i1 to vector<8x256xi1>
    %11 = vector.broadcast %10 : vector<8x256xi1> to vector<8x256xi1>
    %12 = arith.xori %8, %11 : vector<8x256xi1>
    %13 = arith.andi %12, %6 : vector<8x256xi1>
    %14 = vector.broadcast %2 : i32 to vector<8x256xi32>
    %15 = arith.addi %4, %14 : vector<8x256xi32>
    %16 = arith.select %13, %15, %4 : vector<8x256xi1>, vector<8x256xi32>
    %c32_i32 = arith.constant 32 : i32
    %17 = vector.broadcast %c32_i32 : i32 to vector<8x256xi32>
    %18 = arith.cmpi slt, %16, %17 : vector<8x256xi32>
    %c0 = arith.constant 0 : index
    %c0_3 = arith.constant 0 : index
    %19 = vector.load %arg1[%c0, %c0_3] : memref<64x32xbf16, #tpu.memory_space<vmem>>, vector<64x32xbf16>
    %c0_4 = arith.constant 0 : index
    %c0_5 = arith.constant 0 : index
    %20 = vector.load %arg2[%c0_4, %c0_5] : memref<32x256xbf16, #tpu.memory_space<vmem>>, vector<32x256xbf16>
    %cst = arith.constant dense<0.000000e+00> : vector<64x256xf32>
    %21 = tpu.matmul %19, %20, %cst {dimension_numbers = #tpu.dot_dimension_numbers<[1], [0], [0], [1], [0, 0, 1, 1], [], []>} : vector<64x32xbf16>, vector<32x256xbf16>, vector<64x256xf32> -> vector<64x256xf32>
    %c0_6 = arith.constant 0 : index
    %c0_7 = arith.constant 0 : index
    %22 = vector.load %arg4[%c0_6, %c0_7] : memref<1x256xf32, #tpu.memory_space<vmem>>, vector<1x256xf32>
    %23 = vector.broadcast %22 : vector<1x256xf32> to vector<64x256xf32>
    %24 = arith.addf %21, %23 : vector<64x256xf32>
    %c0_8 = arith.constant 0 : index
    %c0_9 = arith.constant 0 : index
    %25 = vector.load %arg11[%c0_8, %c0_9] : memref<64x256xf32, #tpu.memory_space<vmem>>, vector<64x256xf32>
    tpu.vector_store %arg11[%c0_8, %c0_9], %24 {strides = array<i32>} : memref<64x256xf32, #tpu.memory_space<vmem>>, vector<64x256xf32>,
    %c0_10 = arith.constant 0 : index
    %c0_11 = arith.constant 0 : index
    %26 = vector.load %arg3[%c0_10, %c0_11] : memref<64x256xbf16, #tpu.memory_space<vmem>>, vector<64x256xbf16>
    %cst_12 = arith.constant 0.000000e+00 : f32
    %27 = vector.broadcast %cst_12 : f32 to vector<8x64xf32>
    %c0_i32_13 = arith.constant 0 : i32
    %c7_i32 = arith.constant 7 : i32
    %28 = arith.subi %c7_i32, %c0_i32_13 : i32
    %c8_i32 = arith.constant 8 : i32
    %29 = arith.muli %c0_i32_13, %c8_i32 : i32
    %30 = tpu.assume_multiple %29, 8 : i32
    %c8_i32_14 = arith.constant 8 : i32
    %31 = arith.muli %28, %c8_i32_14 : i32
    %32 = tpu.assume_multiple %31, 8 : i32
    %33 = arith.truncf %27 : vector<8x64xf32> to vector<8x64xbf16>
    %cst_15 = arith.constant dense<0.000000e+00> : vector<8x256xf32>
    %34 = tpu.matmul %33, %26, %cst_15 {dimension_numbers = #tpu.dot_dimension_numbers<[1], [0], [0], [1], [0, 0, 1, 1], [], []>} : vector<8x64xbf16>, vector<64x256xbf16>, vector<8x256xf32> -> vector<8x256xf32>
    %35 = arith.index_cast %30 : i32 to index
    %c0_16 = arith.constant 0 : index
    %36 = vector.load %arg11[%35, %c0_16] : memref<64x256xf32, #tpu.memory_space<vmem>>, vector<8x256xf32>
    %37 = arith.index_cast %32 : i32 to index
    %c0_17 = arith.constant 0 : index
    %38 = vector.load %arg11[%37, %c0_17] : memref<64x256xf32, #tpu.memory_space<vmem>>, vector<8x256xf32>
    %39 = arith.select %18, %36, %38 : vector<8x256xi1>, vector<8x256xf32>
    %40 = arith.addf %34, %39 : vector<8x256xf32>
    %41 = vector.extract_strided_slice %40 {offsets = [0, 0], sizes = [8, 64], strides = [1, 1]} : vector<8x256xf32> to vector<8x64xf32>
    %42 = arith.negf %41 : vector<8x64xf32>
    %43 = math.exp %42 : vector<8x64xf32>
    %cst_18 = arith.constant 1.000000e+00 : f32
    %44 = vector.broadcast %cst_18 : f32 to vector<8x64xf32>
    %45 = arith.addf %44, %43 : vector<8x64xf32>
    %46 = arith.divf %44, %45 : vector<8x64xf32>
    %47 = vector.extract_strided_slice %40 {offsets = [0, 64], sizes = [8, 64], strides = [1, 1]} : vector<8x256xf32> to vector<8x64xf32>
    %48 = arith.negf %47 : vector<8x64xf32>
    %49 = math.exp %48 : vector<8x64xf32>
    %cst_19 = arith.constant 1.000000e+00 : f32
    %50 = vector.broadcast %cst_19 : f32 to vector<8x64xf32>
    %51 = arith.addf %50, %49 : vector<8x64xf32>
    %52 = arith.divf %50, %51 : vector<8x64xf32>
    %53 = vector.extract_strided_slice %40 {offsets = [0, 128], sizes = [8, 64], strides = [1, 1]} : vector<8x256xf32> to vector<8x64xf32>
    %54 = math.tanh %53 : vector<8x64xf32>
    %55 = vector.extract_strided_slice %40 {offsets = [0, 192], sizes = [8, 64], strides = [1, 1]} : vector<8x256xf32> to vector<8x64xf32>
    %56 = arith.negf %55 : vector<8x64xf32>
    %57 = math.exp %56 : vector<8x64xf32>
    %cst_20 = arith.constant 1.000000e+00 : f32
    %58 = vector.broadcast %cst_20 : f32 to vector<8x64xf32>
    %59 = arith.addf %58, %57 : vector<8x64xf32>
    %60 = arith.divf %58, %59 : vector<8x64xf32>
    %61 = arith.mulf %52, %27 : vector<8x64xf32>
    %62 = arith.mulf %46, %54 : vector<8x64xf32>
    %63 = arith.addf %61, %62 : vector<8x64xf32>
    %64 = math.tanh %63 : vector<8x64xf32>
    %65 = arith.mulf %60, %64 : vector<8x64xf32>
    %66 = vector.extract_strided_slice %65 {offsets = [0, 0], sizes = [8, 32], strides = [1, 1]} : vector<8x64xf32> to vector<8x32xf32>
    %67 = arith.index_cast %30 : i32 to index
    %c0_21 = arith.constant 0 : index
    %68 = vector.load %arg12[%67, %c0_21] : memref<64x64xf32, #tpu.memory_space<vmem>>, vector<8x32xf32>
    tpu.vector_store %arg12[%67, %c0_21], %66 {strides = array<i32>} : memref<64x64xf32, #tpu.memory_space<vmem>>, vector<8x32xf32>,
    %69 = vector.extract_strided_slice %65 {offsets = [0, 32], sizes = [8, 32], strides = [1, 1]} : vector<8x64xf32> to vector<8x32xf32>
    %70 = arith.index_cast %32 : i32 to index
    %c32 = arith.constant 32 : index
    %71 = vector.load %arg12[%70, %c32] : memref<64x64xf32, #tpu.memory_space<vmem>>, vector<8x32xf32>
    tpu.vector_store %arg12[%70, %c32], %69 {strides = array<i32>} : memref<64x64xf32, #tpu.memory_space<vmem>>, vector<8x32xf32>,
    %c1_i32_22 = arith.constant 1 : i32
    %c7_i32_23 = arith.constant 7 : i32
    %72 = arith.subi %c7_i32_23, %c1_i32_22 : i32
    %c8_i32_24 = arith.constant 8 : i32
    %73 = arith.muli %c1_i32_22, %c8_i32_24 : i32
    %74 = tpu.assume_multiple %73, 8 : i32
    %c8_i32_25 = arith.constant 8 : i32
    %75 = arith.muli %72, %c8_i32_25 : i32
    %76 = tpu.assume_multiple %75, 8 : i32
    %77 = arith.truncf %65 : vector<8x64xf32> to vector<8x64xbf16>
    %cst_26 = arith.constant dense<0.000000e+00> : vector<8x256xf32>
    %78 = tpu.matmul %77, %26, %cst_26 {dimension_numbers = #tpu.dot_dimension_numbers<[1], [0], [0], [1], [0, 0, 1, 1], [], []>} : vector<8x64xbf16>, vector<64x256xbf16>, vector<8x256xf32> -> vector<8x256xf32>
    %79 = arith.index_cast %74 : i32 to index
    %c0_27 = arith.constant 0 : index
    %80 = vector.load %arg11[%79, %c0_27] : memref<64x256xf32, #tpu.memory_space<vmem>>, vector<8x256xf32>
    %81 = arith.index_cast %76 : i32 to index
    %c0_28 = arith.constant 0 : index
    %82 = vector.load %arg11[%81, %c0_28] : memref<64x256xf32, #tpu.memory_space<vmem>>, vector<8x256xf32>
    %83 = arith.select %18, %80, %82 : vector<8x256xi1>, vector<8x256xf32>
    %84 = arith.addf %78, %83 : vector<8x256xf32>
    %85 = vector.extract_strided_slice %84 {offsets = [0, 0], sizes = [8, 64], strides = [1, 1]} : vector<8x256xf32> to vector<8x64xf32>
    %86 = arith.negf %85 : vector<8x64xf32>
    %87 = math.exp %86 : vector<8x64xf32>
    %cst_29 = arith.constant 1.000000e+00 : f32
    %88 = vector.broadcast %cst_29 : f32 to vector<8x64xf32>
    %89 = arith.addf %88, %87 : vector<8x64xf32>
    %90 = arith.divf %88, %89 : vector<8x64xf32>
    %91 = vector.extract_strided_slice %84 {offsets = [0, 64], sizes = [8, 64], strides = [1, 1]} : vector<8x256xf32> to vector<8x64xf32>
    %92 = arith.negf %91 : vector<8x64xf32>
    %93 = math.exp %92 : vector<8x64xf32>
    %cst_30 = arith.constant 1.000000e+00 : f32
    %94 = vector.broadcast %cst_30 : f32 to vector<8x64xf32>
    %95 = arith.addf %94, %93 : vector<8x64xf32>
    %96 = arith.divf %94, %95 : vector<8x64xf32>
    %97 = vector.extract_strided_slice %84 {offsets = [0, 128], sizes = [8, 64], strides = [1, 1]} : vector<8x256xf32> to vector<8x64xf32>
    %98 = math.tanh %97 : vector<8x64xf32>
    %99 = vector.extract_strided_slice %84 {offsets = [0, 192], sizes = [8, 64], strides = [1, 1]} : vector<8x256xf32> to vector<8x64xf32>
    %100 = arith.negf %99 : vector<8x64xf32>
    %101 = math.exp %100 : vector<8x64xf32>
    %cst_31 = arith.constant 1.000000e+00 : f32
    %102 = vector.broadcast %cst_31 : f32 to vector<8x64xf32>
    %103 = arith.addf %102, %101 : vector<8x64xf32>
    %104 = arith.divf %102, %103 : vector<8x64xf32>
    %105 = arith.mulf %96, %63 : vector<8x64xf32>
    %106 = arith.mulf %90, %98 : vector<8x64xf32>
    %107 = arith.addf %105, %106 : vector<8x64xf32>
    %108 = math.tanh %107 : vector<8x64xf32>
    %109 = arith.mulf %104, %108 : vector<8x64xf32>
    %110 = vector.extract_strided_slice %109 {offsets = [0, 0], sizes = [8, 32], strides = [1, 1]} : vector<8x64xf32> to vector<8x32xf32>
    %111 = arith.index_cast %74 : i32 to index
    %c0_32 = arith.constant 0 : index
    %112 = vector.load %arg12[%111, %c0_32] : memref<64x64xf32, #tpu.memory_space<vmem>>, vector<8x32xf32>
    tpu.vector_store %arg12[%111, %c0_32], %110 {strides = array<i32>} : memref<64x64xf32, #tpu.memory_space<vmem>>, vector<8x32xf32>,
    %113 = vector.extract_strided_slice %109 {offsets = [0, 32], sizes = [8, 32], strides = [1, 1]} : vector<8x64xf32> to vector<8x32xf32>
    %114 = arith.index_cast %76 : i32 to index
    %c32_33 = arith.constant 32 : index
    %115 = vector.load %arg12[%114, %c32_33] : memref<64x64xf32, #tpu.memory_space<vmem>>, vector<8x32xf32>
    tpu.vector_store %arg12[%114, %c32_33], %113 {strides = array<i32>} : memref<64x64xf32, #tpu.memory_space<vmem>>, vector<8x32xf32>,
    %c2_i32 = arith.constant 2 : i32
    %c7_i32_34 = arith.constant 7 : i32
    %116 = arith.subi %c7_i32_34, %c2_i32 : i32
    %c8_i32_35 = arith.constant 8 : i32
    %117 = arith.muli %c2_i32, %c8_i32_35 : i32
    %118 = tpu.assume_multiple %117, 8 : i32
    %c8_i32_36 = arith.constant 8 : i32
    %119 = arith.muli %116, %c8_i32_36 : i32
    %120 = tpu.assume_multiple %119, 8 : i32
    %121 = arith.truncf %109 : vector<8x64xf32> to vector<8x64xbf16>
    %cst_37 = arith.constant dense<0.000000e+00> : vector<8x256xf32>
    %122 = tpu.matmul %121, %26, %cst_37 {dimension_numbers = #tpu.dot_dimension_numbers<[1], [0], [0], [1], [0, 0, 1, 1], [], []>} : vector<8x64xbf16>, vector<64x256xbf16>, vector<8x256xf32> -> vector<8x256xf32>
    %123 = arith.index_cast %118 : i32 to index
    %c0_38 = arith.constant 0 : index
    %124 = vector.load %arg11[%123, %c0_38] : memref<64x256xf32, #tpu.memory_space<vmem>>, vector<8x256xf32>
    %125 = arith.index_cast %120 : i32 to index
    %c0_39 = arith.constant 0 : index
    %126 = vector.load %arg11[%125, %c0_39] : memref<64x256xf32, #tpu.memory_space<vmem>>, vector<8x256xf32>
    %127 = arith.select %18, %124, %126 : vector<8x256xi1>, vector<8x256xf32>
    %128 = arith.addf %122, %127 : vector<8x256xf32>
    %129 = vector.extract_strided_slice %128 {offsets = [0, 0], sizes = [8, 64], strides = [1, 1]} : vector<8x256xf32> to vector<8x64xf32>
    %130 = arith.negf %129 : vector<8x64xf32>
    %131 = math.exp %130 : vector<8x64xf32>
    %cst_40 = arith.constant 1.000000e+00 : f32
    %132 = vector.broadcast %cst_40 : f32 to vector<8x64xf32>
    %133 = arith.addf %132, %131 : vector<8x64xf32>
    %134 = arith.divf %132, %133 : vector<8x64xf32>
    %135 = vector.extract_strided_slice %128 {offsets = [0, 64], sizes = [8, 64], strides = [1, 1]} : vector<8x256xf32> to vector<8x64xf32>
    %136 = arith.negf %135 : vector<8x64xf32>
    %137 = math.exp %136 : vector<8x64xf32>
    %cst_41 = arith.constant 1.000000e+00 : f32
    %138 = vector.broadcast %cst_41 : f32 to vector<8x64xf32>
    %139 = arith.addf %138, %137 : vector<8x64xf32>
    %140 = arith.divf %138, %139 : vector<8x64xf32>
    %141 = vector.extract_strided_slice %128 {offsets = [0, 128], sizes = [8, 64], strides = [1, 1]} : vector<8x256xf32> to vector<8x64xf32>
    %142 = math.tanh %141 : vector<8x64xf32>
    %143 = vector.extract_strided_slice %128 {offsets = [0, 192], sizes = [8, 64], strides = [1, 1]} : vector<8x256xf32> to vector<8x64xf32>
    %144 = arith.negf %143 : vector<8x64xf32>
    %145 = math.exp %144 : vector<8x64xf32>
    %cst_42 = arith.constant 1.000000e+00 : f32
    %146 = vector.broadcast %cst_42 : f32 to vector<8x64xf32>
    %147 = arith.addf %146, %145 : vector<8x64xf32>
    %148 = arith.divf %146, %147 : vector<8x64xf32>
    %149 = arith.mulf %140, %107 : vector<8x64xf32>
    %150 = arith.mulf %134, %142 : vector<8x64xf32>
    %151 = arith.addf %149, %150 : vector<8x64xf32>
    %152 = math.tanh %151 : vector<8x64xf32>
    %153 = arith.mulf %148, %152 : vector<8x64xf32>
    %154 = vector.extract_strided_slice %153 {offsets = [0, 0], sizes = [8, 32], strides = [1, 1]} : vector<8x64xf32> to vector<8x32xf32>
    %155 = arith.index_cast %118 : i32 to index
    %c0_43 = arith.constant 0 : index
    %156 = vector.load %arg12[%155, %c0_43] : memref<64x64xf32, #tpu.memory_space<vmem>>, vector<8x32xf32>
    tpu.vector_store %arg12[%155, %c0_43], %154 {strides = array<i32>} : memref<64x64xf32, #tpu.memory_space<vmem>>, vector<8x32xf32>,
    %157 = vector.extract_strided_slice %153 {offsets = [0, 32], sizes = [8, 32], strides = [1, 1]} : vector<8x64xf32> to vector<8x32xf32>
    %158 = arith.index_cast %120 : i32 to index
    %c32_44 = arith.constant 32 : index
    %159 = vector.load %arg12[%158, %c32_44] : memref<64x64xf32, #tpu.memory_space<vmem>>, vector<8x32xf32>
    tpu.vector_store %arg12[%158, %c32_44], %157 {strides = array<i32>} : memref<64x64xf32, #tpu.memory_space<vmem>>, vector<8x32xf32>,
    %c3_i32 = arith.constant 3 : i32
    %c7_i32_45 = arith.constant 7 : i32
    %160 = arith.subi %c7_i32_45, %c3_i32 : i32
    %c8_i32_46 = arith.constant 8 : i32
    %161 = arith.muli %c3_i32, %c8_i32_46 : i32
    %162 = tpu.assume_multiple %161, 8 : i32
    %c8_i32_47 = arith.constant 8 : i32
    %163 = arith.muli %160, %c8_i32_47 : i32
    %164 = tpu.assume_multiple %163, 8 : i32
    %165 = arith.truncf %153 : vector<8x64xf32> to vector<8x64xbf16>
    %cst_48 = arith.constant dense<0.000000e+00> : vector<8x256xf32>
    %166 = tpu.matmul %165, %26, %cst_48 {dimension_numbers = #tpu.dot_dimension_numbers<[1], [0], [0], [1], [0, 0, 1, 1], [], []>} : vector<8x64xbf16>, vector<64x256xbf16>, vector<8x256xf32> -> vector<8x256xf32>
    %167 = arith.index_cast %162 : i32 to index
    %c0_49 = arith.constant 0 : index
    %168 = vector.load %arg11[%167, %c0_49] : memref<64x256xf32, #tpu.memory_space<vmem>>, vector<8x256xf32>
    %169 = arith.index_cast %164 : i32 to index
    %c0_50 = arith.constant 0 : index
    %170 = vector.load %arg11[%169, %c0_50] : memref<64x256xf32, #tpu.memory_space<vmem>>, vector<8x256xf32>
    %171 = arith.select %18, %168, %170 : vector<8x256xi1>, vector<8x256xf32>
    %172 = arith.addf %166, %171 : vector<8x256xf32>
    %173 = vector.extract_strided_slice %172 {offsets = [0, 0], sizes = [8, 64], strides = [1, 1]} : vector<8x256xf32> to vector<8x64xf32>
    %174 = arith.negf %173 : vector<8x64xf32>
    %175 = math.exp %174 : vector<8x64xf32>
    %cst_51 = arith.constant 1.000000e+00 : f32
    %176 = vector.broadcast %cst_51 : f32 to vector<8x64xf32>
    %177 = arith.addf %176, %175 : vector<8x64xf32>
    %178 = arith.divf %176, %177 : vector<8x64xf32>
    %179 = vector.extract_strided_slice %172 {offsets = [0, 64], sizes = [8, 64], strides = [1, 1]} : vector<8x256xf32> to vector<8x64xf32>
    %180 = arith.negf %179 : vector<8x64xf32>
    %181 = math.exp %180 : vector<8x64xf32>
    %cst_52 = arith.constant 1.000000e+00 : f32
    %182 = vector.broadcast %cst_52 : f32 to vector<8x64xf32>
    %183 = arith.addf %182, %181 : vector<8x64xf32>
    %184 = arith.divf %182, %183 : vector<8x64xf32>
    %185 = vector.extract_strided_slice %172 {offsets = [0, 128], sizes = [8, 64], strides = [1, 1]} : vector<8x256xf32> to vector<8x64xf32>
    %186 = math.tanh %185 : vector<8x64xf32>
    %187 = vector.extract_strided_slice %172 {offsets = [0, 192], sizes = [8, 64], strides = [1, 1]} : vector<8x256xf32> to vector<8x64xf32>
    %188 = arith.negf %187 : vector<8x64xf32>
    %189 = math.exp %188 : vector<8x64xf32>
    %cst_53 = arith.constant 1.000000e+00 : f32
    %190 = vector.broadcast %cst_53 : f32 to vector<8x64xf32>
    %191 = arith.addf %190, %189 : vector<8x64xf32>
    %192 = arith.divf %190, %191 : vector<8x64xf32>
    %193 = arith.mulf %184, %151 : vector<8x64xf32>
    %194 = arith.mulf %178, %186 : vector<8x64xf32>
    %195 = arith.addf %193, %194 : vector<8x64xf32>
    %196 = math.tanh %195 : vector<8x64xf32>
    %197 = arith.mulf %192, %196 : vector<8x64xf32>
    %198 = vector.extract_strided_slice %197 {offsets = [0, 0], sizes = [8, 32], strides = [1, 1]} : vector<8x64xf32> to vector<8x32xf32>
    %199 = arith.index_cast %162 : i32 to index
    %c0_54 = arith.constant 0 : index
    %200 = vector.load %arg12[%199, %c0_54] : memref<64x64xf32, #tpu.memory_space<vmem>>, vector<8x32xf32>
    tpu.vector_store %arg12[%199, %c0_54], %198 {strides = array<i32>} : memref<64x64xf32, #tpu.memory_space<vmem>>, vector<8x32xf32>,
    %201 = vector.extract_strided_slice %197 {offsets = [0, 32], sizes = [8, 32], strides = [1, 1]} : vector<8x64xf32> to vector<8x32xf32>
    %202 = arith.index_cast %164 : i32 to index
    %c32_55 = arith.constant 32 : index
    %203 = vector.load %arg12[%202, %c32_55] : memref<64x64xf32, #tpu.memory_space<vmem>>, vector<8x32xf32>
    tpu.vector_store %arg12[%202, %c32_55], %201 {strides = array<i32>} : memref<64x64xf32, #tpu.memory_space<vmem>>, vector<8x32xf32>,
    %c4_i32 = arith.constant 4 : i32
    %c7_i32_56 = arith.constant 7 : i32
    %204 = arith.subi %c7_i32_56, %c4_i32 : i32
    %c8_i32_57 = arith.constant 8 : i32
    %205 = arith.muli %c4_i32, %c8_i32_57 : i32
    %206 = tpu.assume_multiple %205, 8 : i32
    %c8_i32_58 = arith.constant 8 : i32
    %207 = arith.muli %204, %c8_i32_58 : i32
    %208 = tpu.assume_multiple %207, 8 : i32
    %209 = arith.truncf %197 : vector<8x64xf32> to vector<8x64xbf16>
    %cst_59 = arith.constant dense<0.000000e+00> : vector<8x256xf32>
    %210 = tpu.matmul %209, %26, %cst_59 {dimension_numbers = #tpu.dot_dimension_numbers<[1], [0], [0], [1], [0, 0, 1, 1], [], []>} : vector<8x64xbf16>, vector<64x256xbf16>, vector<8x256xf32> -> vector<8x256xf32>
    %211 = arith.index_cast %206 : i32 to index
    %c0_60 = arith.constant 0 : index
    %212 = vector.load %arg11[%211, %c0_60] : memref<64x256xf32, #tpu.memory_space<vmem>>, vector<8x256xf32>
    %213 = arith.index_cast %208 : i32 to index
    %c0_61 = arith.constant 0 : index
    %214 = vector.load %arg11[%213, %c0_61] : memref<64x256xf32, #tpu.memory_space<vmem>>, vector<8x256xf32>
    %215 = arith.select %18, %212, %214 : vector<8x256xi1>, vector<8x256xf32>
    %216 = arith.addf %210, %215 : vector<8x256xf32>
    %217 = vector.extract_strided_slice %216 {offsets = [0, 0], sizes = [8, 64], strides = [1, 1]} : vector<8x256xf32> to vector<8x64xf32>
    %218 = arith.negf %217 : vector<8x64xf32>
    %219 = math.exp %218 : vector<8x64xf32>
    %cst_62 = arith.constant 1.000000e+00 : f32
    %220 = vector.broadcast %cst_62 : f32 to vector<8x64xf32>
    %221 = arith.addf %220, %219 : vector<8x64xf32>
    %222 = arith.divf %220, %221 : vector<8x64xf32>
    %223 = vector.extract_strided_slice %216 {offsets = [0, 64], sizes = [8, 64], strides = [1, 1]} : vector<8x256xf32> to vector<8x64xf32>
    %224 = arith.negf %223 : vector<8x64xf32>
    %225 = math.exp %224 : vector<8x64xf32>
    %cst_63 = arith.constant 1.000000e+00 : f32
    %226 = vector.broadcast %cst_63 : f32 to vector<8x64xf32>
    %227 = arith.addf %226, %225 : vector<8x64xf32>
    %228 = arith.divf %226, %227 : vector<8x64xf32>
    %229 = vector.extract_strided_slice %216 {offsets = [0, 128], sizes = [8, 64], strides = [1, 1]} : vector<8x256xf32> to vector<8x64xf32>
    %230 = math.tanh %229 : vector<8x64xf32>
    %231 = vector.extract_strided_slice %216 {offsets = [0, 192], sizes = [8, 64], strides = [1, 1]} : vector<8x256xf32> to vector<8x64xf32>
    %232 = arith.negf %231 : vector<8x64xf32>
    %233 = math.exp %232 : vector<8x64xf32>
    %cst_64 = arith.constant 1.000000e+00 : f32
    %234 = vector.broadcast %cst_64 : f32 to vector<8x64xf32>
    %235 = arith.addf %234, %233 : vector<8x64xf32>
    %236 = arith.divf %234, %235 : vector<8x64xf32>
    %237 = arith.mulf %228, %195 : vector<8x64xf32>
    %238 = arith.mulf %222, %230 : vector<8x64xf32>
    %239 = arith.addf %237, %238 : vector<8x64xf32>
    %240 = math.tanh %239 : vector<8x64xf32>
    %241 = arith.mulf %236, %240 : vector<8x64xf32>
    %242 = vector.extract_strided_slice %241 {offsets = [0, 0], sizes = [8, 32], strides = [1, 1]} : vector<8x64xf32> to vector<8x32xf32>
    %243 = arith.index_cast %206 : i32 to index
    %c0_65 = arith.constant 0 : index
    %244 = vector.load %arg12[%243, %c0_65] : memref<64x64xf32, #tpu.memory_space<vmem>>, vector<8x32xf32>
    tpu.vector_store %arg12[%243, %c0_65], %242 {strides = array<i32>} : memref<64x64xf32, #tpu.memory_space<vmem>>, vector<8x32xf32>,
    %245 = vector.extract_strided_slice %241 {offsets = [0, 32], sizes = [8, 32], strides = [1, 1]} : vector<8x64xf32> to vector<8x32xf32>
    %246 = arith.index_cast %208 : i32 to index
    %c32_66 = arith.constant 32 : index
    %247 = vector.load %arg12[%246, %c32_66] : memref<64x64xf32, #tpu.memory_space<vmem>>, vector<8x32xf32>
    tpu.vector_store %arg12[%246, %c32_66], %245 {strides = array<i32>} : memref<64x64xf32, #tpu.memory_space<vmem>>, vector<8x32xf32>,
    %c5_i32 = arith.constant 5 : i32
    %c7_i32_67 = arith.constant 7 : i32
    %248 = arith.subi %c7_i32_67, %c5_i32 : i32
    %c8_i32_68 = arith.constant 8 : i32
    %249 = arith.muli %c5_i32, %c8_i32_68 : i32
    %250 = tpu.assume_multiple %249, 8 : i32
    %c8_i32_69 = arith.constant 8 : i32
    %251 = arith.muli %248, %c8_i32_69 : i32
    %252 = tpu.assume_multiple %251, 8 : i32
    %253 = arith.truncf %241 : vector<8x64xf32> to vector<8x64xbf16>
    %cst_70 = arith.constant dense<0.000000e+00> : vector<8x256xf32>
    %254 = tpu.matmul %253, %26, %cst_70 {dimension_numbers = #tpu.dot_dimension_numbers<[1], [0], [0], [1], [0, 0, 1, 1], [], []>} : vector<8x64xbf16>, vector<64x256xbf16>, vector<8x256xf32> -> vector<8x256xf32>
    %255 = arith.index_cast %250 : i32 to index
    %c0_71 = arith.constant 0 : index
    %256 = vector.load %arg11[%255, %c0_71] : memref<64x256xf32, #tpu.memory_space<vmem>>, vector<8x256xf32>
    %257 = arith.index_cast %252 : i32 to index
    %c0_72 = arith.constant 0 : index
    %258 = vector.load %arg11[%257, %c0_72] : memref<64x256xf32, #tpu.memory_space<vmem>>, vector<8x256xf32>
    %259 = arith.select %18, %256, %258 : vector<8x256xi1>, vector<8x256xf32>
    %260 = arith.addf %254, %259 : vector<8x256xf32>
    %261 = vector.extract_strided_slice %260 {offsets = [0, 0], sizes = [8, 64], strides = [1, 1]} : vector<8x256xf32> to vector<8x64xf32>
    %262 = arith.negf %261 : vector<8x64xf32>
    %263 = math.exp %262 : vector<8x64xf32>
    %cst_73 = arith.constant 1.000000e+00 : f32
    %264 = vector.broadcast %cst_73 : f32 to vector<8x64xf32>
    %265 = arith.addf %264, %263 : vector<8x64xf32>
    %266 = arith.divf %264, %265 : vector<8x64xf32>
    %267 = vector.extract_strided_slice %260 {offsets = [0, 64], sizes = [8, 64], strides = [1, 1]} : vector<8x256xf32> to vector<8x64xf32>
    %268 = arith.negf %267 : vector<8x64xf32>
    %269 = math.exp %268 : vector<8x64xf32>
    %cst_74 = arith.constant 1.000000e+00 : f32
    %270 = vector.broadcast %cst_74 : f32 to vector<8x64xf32>
    %271 = arith.addf %270, %269 : vector<8x64xf32>
    %272 = arith.divf %270, %271 : vector<8x64xf32>
    %273 = vector.extract_strided_slice %260 {offsets = [0, 128], sizes = [8, 64], strides = [1, 1]} : vector<8x256xf32> to vector<8x64xf32>
    %274 = math.tanh %273 : vector<8x64xf32>
    %275 = vector.extract_strided_slice %260 {offsets = [0, 192], sizes = [8, 64], strides = [1, 1]} : vector<8x256xf32> to vector<8x64xf32>
    %276 = arith.negf %275 : vector<8x64xf32>
    %277 = math.exp %276 : vector<8x64xf32>
    %cst_75 = arith.constant 1.000000e+00 : f32
    %278 = vector.broadcast %cst_75 : f32 to vector<8x64xf32>
    %279 = arith.addf %278, %277 : vector<8x64xf32>
    %280 = arith.divf %278, %279 : vector<8x64xf32>
    %281 = arith.mulf %272, %239 : vector<8x64xf32>
    %282 = arith.mulf %266, %274 : vector<8x64xf32>
    %283 = arith.addf %281, %282 : vector<8x64xf32>
    %284 = math.tanh %283 : vector<8x64xf32>
    %285 = arith.mulf %280, %284 : vector<8x64xf32>
    %286 = vector.extract_strided_slice %285 {offsets = [0, 0], sizes = [8, 32], strides = [1, 1]} : vector<8x64xf32> to vector<8x32xf32>
    %287 = arith.index_cast %250 : i32 to index
    %c0_76 = arith.constant 0 : index
    %288 = vector.load %arg12[%287, %c0_76] : memref<64x64xf32, #tpu.memory_space<vmem>>, vector<8x32xf32>
    tpu.vector_store %arg12[%287, %c0_76], %286 {strides = array<i32>} : memref<64x64xf32, #tpu.memory_space<vmem>>, vector<8x32xf32>,
    %289 = vector.extract_strided_slice %285 {offsets = [0, 32], sizes = [8, 32], strides = [1, 1]} : vector<8x64xf32> to vector<8x32xf32>
    %290 = arith.index_cast %252 : i32 to index
    %c32_77 = arith.constant 32 : index
    %291 = vector.load %arg12[%290, %c32_77] : memref<64x64xf32, #tpu.memory_space<vmem>>, vector<8x32xf32>
    tpu.vector_store %arg12[%290, %c32_77], %289 {strides = array<i32>} : memref<64x64xf32, #tpu.memory_space<vmem>>, vector<8x32xf32>,
    %c6_i32 = arith.constant 6 : i32
    %c7_i32_78 = arith.constant 7 : i32
    %292 = arith.subi %c7_i32_78, %c6_i32 : i32
    %c8_i32_79 = arith.constant 8 : i32
    %293 = arith.muli %c6_i32, %c8_i32_79 : i32
    %294 = tpu.assume_multiple %293, 8 : i32
    %c8_i32_80 = arith.constant 8 : i32
    %295 = arith.muli %292, %c8_i32_80 : i32
    %296 = tpu.assume_multiple %295, 8 : i32
    %297 = arith.truncf %285 : vector<8x64xf32> to vector<8x64xbf16>
    %cst_81 = arith.constant dense<0.000000e+00> : vector<8x256xf32>
    %298 = tpu.matmul %297, %26, %cst_81 {dimension_numbers = #tpu.dot_dimension_numbers<[1], [0], [0], [1], [0, 0, 1, 1], [], []>} : vector<8x64xbf16>, vector<64x256xbf16>, vector<8x256xf32> -> vector<8x256xf32>
    %299 = arith.index_cast %294 : i32 to index
    %c0_82 = arith.constant 0 : index
    %300 = vector.load %arg11[%299, %c0_82] : memref<64x256xf32, #tpu.memory_space<vmem>>, vector<8x256xf32>
    %301 = arith.index_cast %296 : i32 to index
    %c0_83 = arith.constant 0 : index
    %302 = vector.load %arg11[%301, %c0_83] : memref<64x256xf32, #tpu.memory_space<vmem>>, vector<8x256xf32>
    %303 = arith.select %18, %300, %302 : vector<8x256xi1>, vector<8x256xf32>
    %304 = arith.addf %298, %303 : vector<8x256xf32>
    %305 = vector.extract_strided_slice %304 {offsets = [0, 0], sizes = [8, 64], strides = [1, 1]} : vector<8x256xf32> to vector<8x64xf32>
    %306 = arith.negf %305 : vector<8x64xf32>
    %307 = math.exp %306 : vector<8x64xf32>
    %cst_84 = arith.constant 1.000000e+00 : f32
    %308 = vector.broadcast %cst_84 : f32 to vector<8x64xf32>
    %309 = arith.addf %308, %307 : vector<8x64xf32>
    %310 = arith.divf %308, %309 : vector<8x64xf32>
    %311 = vector.extract_strided_slice %304 {offsets = [0, 64], sizes = [8, 64], strides = [1, 1]} : vector<8x256xf32> to vector<8x64xf32>
    %312 = arith.negf %311 : vector<8x64xf32>
    %313 = math.exp %312 : vector<8x64xf32>
    %cst_85 = arith.constant 1.000000e+00 : f32
    %314 = vector.broadcast %cst_85 : f32 to vector<8x64xf32>
    %315 = arith.addf %314, %313 : vector<8x64xf32>
    %316 = arith.divf %314, %315 : vector<8x64xf32>
    %317 = vector.extract_strided_slice %304 {offsets = [0, 128], sizes = [8, 64], strides = [1, 1]} : vector<8x256xf32> to vector<8x64xf32>
    %318 = math.tanh %317 : vector<8x64xf32>
    %319 = vector.extract_strided_slice %304 {offsets = [0, 192], sizes = [8, 64], strides = [1, 1]} : vector<8x256xf32> to vector<8x64xf32>
    %320 = arith.negf %319 : vector<8x64xf32>
    %321 = math.exp %320 : vector<8x64xf32>
    %cst_86 = arith.constant 1.000000e+00 : f32
    %322 = vector.broadcast %cst_86 : f32 to vector<8x64xf32>
    %323 = arith.addf %322, %321 : vector<8x64xf32>
    %324 = arith.divf %322, %323 : vector<8x64xf32>
    %325 = arith.mulf %316, %283 : vector<8x64xf32>
    %326 = arith.mulf %310, %318 : vector<8x64xf32>
    %327 = arith.addf %325, %326 : vector<8x64xf32>
    %328 = math.tanh %327 : vector<8x64xf32>
    %329 = arith.mulf %324, %328 : vector<8x64xf32>
    %330 = vector.extract_strided_slice %329 {offsets = [0, 0], sizes = [8, 32], strides = [1, 1]} : vector<8x64xf32> to vector<8x32xf32>
    %331 = arith.index_cast %294 : i32 to index
    %c0_87 = arith.constant 0 : index
    %332 = vector.load %arg12[%331, %c0_87] : memref<64x64xf32, #tpu.memory_space<vmem>>, vector<8x32xf32>
    tpu.vector_store %arg12[%331, %c0_87], %330 {strides = array<i32>} : memref<64x64xf32, #tpu.memory_space<vmem>>, vector<8x32xf32>,
    %333 = vector.extract_strided_slice %329 {offsets = [0, 32], sizes = [8, 32], strides = [1, 1]} : vector<8x64xf32> to vector<8x32xf32>
    %334 = arith.index_cast %296 : i32 to index
    %c32_88 = arith.constant 32 : index
    %335 = vector.load %arg12[%334, %c32_88] : memref<64x64xf32, #tpu.memory_space<vmem>>, vector<8x32xf32>
    tpu.vector_store %arg12[%334, %c32_88], %333 {strides = array<i32>} : memref<64x64xf32, #tpu.memory_space<vmem>>, vector<8x32xf32>,
    %c7_i32_89 = arith.constant 7 : i32
    %c7_i32_90 = arith.constant 7 : i32
    %336 = arith.subi %c7_i32_90, %c7_i32_89 : i32
    %c8_i32_91 = arith.constant 8 : i32
    %337 = arith.muli %c7_i32_89, %c8_i32_91 : i32
    %338 = tpu.assume_multiple %337, 8 : i32
    %c8_i32_92 = arith.constant 8 : i32
    %339 = arith.muli %336, %c8_i32_92 : i32
    %340 = tpu.assume_multiple %339, 8 : i32
    %341 = arith.truncf %329 : vector<8x64xf32> to vector<8x64xbf16>
    %cst_93 = arith.constant dense<0.000000e+00> : vector<8x256xf32>
    %342 = tpu.matmul %341, %26, %cst_93 {dimension_numbers = #tpu.dot_dimension_numbers<[1], [0], [0], [1], [0, 0, 1, 1], [], []>} : vector<8x64xbf16>, vector<64x256xbf16>, vector<8x256xf32> -> vector<8x256xf32>
    %343 = arith.index_cast %338 : i32 to index
    %c0_94 = arith.constant 0 : index
    %344 = vector.load %arg11[%343, %c0_94] : memref<64x256xf32, #tpu.memory_space<vmem>>, vector<8x256xf32>
    %345 = arith.index_cast %340 : i32 to index
    %c0_95 = arith.constant 0 : index
    %346 = vector.load %arg11[%345, %c0_95] : memref<64x256xf32, #tpu.memory_space<vmem>>, vector<8x256xf32>
    %347 = arith.select %18, %344, %346 : vector<8x256xi1>, vector<8x256xf32>
    %348 = arith.addf %342, %347 : vector<8x256xf32>
    %349 = vector.extract_strided_slice %348 {offsets = [0, 0], sizes = [8, 64], strides = [1, 1]} : vector<8x256xf32> to vector<8x64xf32>
    %350 = arith.negf %349 : vector<8x64xf32>
    %351 = math.exp %350 : vector<8x64xf32>
    %cst_96 = arith.constant 1.000000e+00 : f32
    %352 = vector.broadcast %cst_96 : f32 to vector<8x64xf32>
    %353 = arith.addf %352, %351 : vector<8x64xf32>
    %354 = arith.divf %352, %353 : vector<8x64xf32>
    %355 = vector.extract_strided_slice %348 {offsets = [0, 64], sizes = [8, 64], strides = [1, 1]} : vector<8x256xf32> to vector<8x64xf32>
    %356 = arith.negf %355 : vector<8x64xf32>
    %357 = math.exp %356 : vector<8x64xf32>
    %cst_97 = arith.constant 1.000000e+00 : f32
    %358 = vector.broadcast %cst_97 : f32 to vector<8x64xf32>
    %359 = arith.addf %358, %357 : vector<8x64xf32>
    %360 = arith.divf %358, %359 : vector<8x64xf32>
    %361 = vector.extract_strided_slice %348 {offsets = [0, 128], sizes = [8, 64], strides = [1, 1]} : vector<8x256xf32> to vector<8x64xf32>
    %362 = math.tanh %361 : vector<8x64xf32>
    %363 = vector.extract_strided_slice %348 {offsets = [0, 192], sizes = [8, 64], strides = [1, 1]} : vector<8x256xf32> to vector<8x64xf32>
    %364 = arith.negf %363 : vector<8x64xf32>
    %365 = math.exp %364 : vector<8x64xf32>
    %cst_98 = arith.constant 1.000000e+00 : f32
    %366 = vector.broadcast %cst_98 : f32 to vector<8x64xf32>
    %367 = arith.addf %366, %365 : vector<8x64xf32>
    %368 = arith.divf %366, %367 : vector<8x64xf32>
    %369 = arith.mulf %360, %327 : vector<8x64xf32>
    %370 = arith.mulf %354, %362 : vector<8x64xf32>
    %371 = arith.addf %369, %370 : vector<8x64xf32>
    %372 = math.tanh %371 : vector<8x64xf32>
    %373 = arith.mulf %368, %372 : vector<8x64xf32>
    %374 = vector.extract_strided_slice %373 {offsets = [0, 0], sizes = [8, 32], strides = [1, 1]} : vector<8x64xf32> to vector<8x32xf32>
    %375 = arith.index_cast %338 : i32 to index
    %c0_99 = arith.constant 0 : index
    %376 = vector.load %arg12[%375, %c0_99] : memref<64x64xf32, #tpu.memory_space<vmem>>, vector<8x32xf32>
    tpu.vector_store %arg12[%375, %c0_99], %374 {strides = array<i32>} : memref<64x64xf32, #tpu.memory_space<vmem>>, vector<8x32xf32>,
    %377 = vector.extract_strided_slice %373 {offsets = [0, 32], sizes = [8, 32], strides = [1, 1]} : vector<8x64xf32> to vector<8x32xf32>
    %378 = arith.index_cast %340 : i32 to index
    %c32_100 = arith.constant 32 : index
    %379 = vector.load %arg12[%378, %c32_100] : memref<64x64xf32, #tpu.memory_space<vmem>>, vector<8x32xf32>
    tpu.vector_store %arg12[%378, %c32_100], %377 {strides = array<i32>} : memref<64x64xf32, #tpu.memory_space<vmem>>, vector<8x32xf32>,
    %c8_i32_101 = arith.constant 8 : i32
    %c0_102 = arith.constant 0 : index
    %c0_103 = arith.constant 0 : index
    %380 = vector.load %arg12[%c0_102, %c0_103] : memref<64x64xf32, #tpu.memory_space<vmem>>, vector<64x64xf32>
    %381 = arith.truncf %380 : vector<64x64xf32> to vector<64x64xbf16>
    %c0_104 = arith.constant 0 : index
    %c0_105 = arith.constant 0 : index
    %382 = vector.load %arg5[%c0_104, %c0_105] : memref<64x256xbf16, #tpu.memory_space<vmem>>, vector<64x256xbf16>
    %cst_106 = arith.constant dense<0.000000e+00> : vector<64x256xf32>
    %383 = tpu.matmul %381, %382, %cst_106 {dimension_numbers = #tpu.dot_dimension_numbers<[1], [0], [0], [1], [0, 0, 1, 1], [], []>} : vector<64x64xbf16>, vector<64x256xbf16>, vector<64x256xf32> -> vector<64x256xf32>
    %c0_107 = arith.constant 0 : index
    %c0_108 = arith.constant 0 : index
    %384 = vector.load %arg7[%c0_107, %c0_108] : memref<1x256xf32, #tpu.memory_space<vmem>>, vector<1x256xf32>
    %385 = vector.broadcast %384 : vector<1x256xf32> to vector<64x256xf32>
    %386 = arith.addf %383, %385 : vector<64x256xf32>
    %c0_109 = arith.constant 0 : index
    %c0_110 = arith.constant 0 : index
    %387 = vector.load %arg11[%c0_109, %c0_110] : memref<64x256xf32, #tpu.memory_space<vmem>>, vector<64x256xf32>
    tpu.vector_store %arg11[%c0_109, %c0_110], %386 {strides = array<i32>} : memref<64x256xf32, #tpu.memory_space<vmem>>, vector<64x256xf32>,
    %c0_111 = arith.constant 0 : index
    %c0_112 = arith.constant 0 : index
    %388 = vector.load %arg6[%c0_111, %c0_112] : memref<64x256xbf16, #tpu.memory_space<vmem>>, vector<64x256xbf16>
    %cst_113 = arith.constant 0.000000e+00 : f32
    %389 = vector.broadcast %cst_113 : f32 to vector<8x64xf32>
    %c0_i32_114 = arith.constant 0 : i32
    %c7_i32_115 = arith.constant 7 : i32
    %390 = arith.subi %c7_i32_115, %c0_i32_114 : i32
    %c8_i32_116 = arith.constant 8 : i32
    %391 = arith.muli %c0_i32_114, %c8_i32_116 : i32
    %392 = tpu.assume_multiple %391, 8 : i32
    %c8_i32_117 = arith.constant 8 : i32
    %393 = arith.muli %390, %c8_i32_117 : i32
    %394 = tpu.assume_multiple %393, 8 : i32
    %395 = arith.truncf %389 : vector<8x64xf32> to vector<8x64xbf16>
    %cst_118 = arith.constant dense<0.000000e+00> : vector<8x256xf32>
    %396 = tpu.matmul %395, %388, %cst_118 {dimension_numbers = #tpu.dot_dimension_numbers<[1], [0], [0], [1], [0, 0, 1, 1], [], []>} : vector<8x64xbf16>, vector<64x256xbf16>, vector<8x256xf32> -> vector<8x256xf32>
    %397 = arith.index_cast %392 : i32 to index
    %c0_119 = arith.constant 0 : index
    %398 = vector.load %arg11[%397, %c0_119] : memref<64x256xf32, #tpu.memory_space<vmem>>, vector<8x256xf32>
    %399 = arith.index_cast %394 : i32 to index
    %c0_120 = arith.constant 0 : index
    %400 = vector.load %arg11[%399, %c0_120] : memref<64x256xf32, #tpu.memory_space<vmem>>, vector<8x256xf32>
    %401 = arith.select %18, %398, %400 : vector<8x256xi1>, vector<8x256xf32>
    %402 = arith.addf %396, %401 : vector<8x256xf32>
    %403 = vector.extract_strided_slice %402 {offsets = [0, 0], sizes = [8, 64], strides = [1, 1]} : vector<8x256xf32> to vector<8x64xf32>
    %404 = arith.negf %403 : vector<8x64xf32>
    %405 = math.exp %404 : vector<8x64xf32>
    %cst_121 = arith.constant 1.000000e+00 : f32
    %406 = vector.broadcast %cst_121 : f32 to vector<8x64xf32>
    %407 = arith.addf %406, %405 : vector<8x64xf32>
    %408 = arith.divf %406, %407 : vector<8x64xf32>
    %409 = vector.extract_strided_slice %402 {offsets = [0, 64], sizes = [8, 64], strides = [1, 1]} : vector<8x256xf32> to vector<8x64xf32>
    %410 = arith.negf %409 : vector<8x64xf32>
    %411 = math.exp %410 : vector<8x64xf32>
    %cst_122 = arith.constant 1.000000e+00 : f32
    %412 = vector.broadcast %cst_122 : f32 to vector<8x64xf32>
    %413 = arith.addf %412, %411 : vector<8x64xf32>
    %414 = arith.divf %412, %413 : vector<8x64xf32>
    %415 = vector.extract_strided_slice %402 {offsets = [0, 128], sizes = [8, 64], strides = [1, 1]} : vector<8x256xf32> to vector<8x64xf32>
    %416 = math.tanh %415 : vector<8x64xf32>
    %417 = vector.extract_strided_slice %402 {offsets = [0, 192], sizes = [8, 64], strides = [1, 1]} : vector<8x256xf32> to vector<8x64xf32>
    %418 = arith.negf %417 : vector<8x64xf32>
    %419 = math.exp %418 : vector<8x64xf32>
    %cst_123 = arith.constant 1.000000e+00 : f32
    %420 = vector.broadcast %cst_123 : f32 to vector<8x64xf32>
    %421 = arith.addf %420, %419 : vector<8x64xf32>
    %422 = arith.divf %420, %421 : vector<8x64xf32>
    %423 = arith.mulf %414, %389 : vector<8x64xf32>
    %424 = arith.mulf %408, %416 : vector<8x64xf32>
    %425 = arith.addf %423, %424 : vector<8x64xf32>
    %426 = math.tanh %425 : vector<8x64xf32>
    %427 = arith.mulf %422, %426 : vector<8x64xf32>
    %428 = vector.extract_strided_slice %427 {offsets = [0, 0], sizes = [8, 32], strides = [1, 1]} : vector<8x64xf32> to vector<8x32xf32>
    %429 = arith.index_cast %392 : i32 to index
    %c0_124 = arith.constant 0 : index
    %430 = vector.load %arg12[%429, %c0_124] : memref<64x64xf32, #tpu.memory_space<vmem>>, vector<8x32xf32>
    tpu.vector_store %arg12[%429, %c0_124], %428 {strides = array<i32>} : memref<64x64xf32, #tpu.memory_space<vmem>>, vector<8x32xf32>,
    %431 = vector.extract_strided_slice %427 {offsets = [0, 32], sizes = [8, 32], strides = [1, 1]} : vector<8x64xf32> to vector<8x32xf32>
    %432 = arith.index_cast %394 : i32 to index
    %c32_125 = arith.constant 32 : index
    %433 = vector.load %arg12[%432, %c32_125] : memref<64x64xf32, #tpu.memory_space<vmem>>, vector<8x32xf32>
    tpu.vector_store %arg12[%432, %c32_125], %431 {strides = array<i32>} : memref<64x64xf32, #tpu.memory_space<vmem>>, vector<8x32xf32>,
    %c1_i32_126 = arith.constant 1 : i32
    %c7_i32_127 = arith.constant 7 : i32
    %434 = arith.subi %c7_i32_127, %c1_i32_126 : i32
    %c8_i32_128 = arith.constant 8 : i32
    %435 = arith.muli %c1_i32_126, %c8_i32_128 : i32
    %436 = tpu.assume_multiple %435, 8 : i32
    %c8_i32_129 = arith.constant 8 : i32
    %437 = arith.muli %434, %c8_i32_129 : i32
    %438 = tpu.assume_multiple %437, 8 : i32
    %439 = arith.truncf %427 : vector<8x64xf32> to vector<8x64xbf16>
    %cst_130 = arith.constant dense<0.000000e+00> : vector<8x256xf32>
    %440 = tpu.matmul %439, %388, %cst_130 {dimension_numbers = #tpu.dot_dimension_numbers<[1], [0], [0], [1], [0, 0, 1, 1], [], []>} : vector<8x64xbf16>, vector<64x256xbf16>, vector<8x256xf32> -> vector<8x256xf32>
    %441 = arith.index_cast %436 : i32 to index
    %c0_131 = arith.constant 0 : index
    %442 = vector.load %arg11[%441, %c0_131] : memref<64x256xf32, #tpu.memory_space<vmem>>, vector<8x256xf32>
    %443 = arith.index_cast %438 : i32 to index
    %c0_132 = arith.constant 0 : index
    %444 = vector.load %arg11[%443, %c0_132] : memref<64x256xf32, #tpu.memory_space<vmem>>, vector<8x256xf32>
    %445 = arith.select %18, %442, %444 : vector<8x256xi1>, vector<8x256xf32>
    %446 = arith.addf %440, %445 : vector<8x256xf32>
    %447 = vector.extract_strided_slice %446 {offsets = [0, 0], sizes = [8, 64], strides = [1, 1]} : vector<8x256xf32> to vector<8x64xf32>
    %448 = arith.negf %447 : vector<8x64xf32>
    %449 = math.exp %448 : vector<8x64xf32>
    %cst_133 = arith.constant 1.000000e+00 : f32
    %450 = vector.broadcast %cst_133 : f32 to vector<8x64xf32>
    %451 = arith.addf %450, %449 : vector<8x64xf32>
    %452 = arith.divf %450, %451 : vector<8x64xf32>
    %453 = vector.extract_strided_slice %446 {offsets = [0, 64], sizes = [8, 64], strides = [1, 1]} : vector<8x256xf32> to vector<8x64xf32>
    %454 = arith.negf %453 : vector<8x64xf32>
    %455 = math.exp %454 : vector<8x64xf32>
    %cst_134 = arith.constant 1.000000e+00 : f32
    %456 = vector.broadcast %cst_134 : f32 to vector<8x64xf32>
    %457 = arith.addf %456, %455 : vector<8x64xf32>
    %458 = arith.divf %456, %457 : vector<8x64xf32>
    %459 = vector.extract_strided_slice %446 {offsets = [0, 128], sizes = [8, 64], strides = [1, 1]} : vector<8x256xf32> to vector<8x64xf32>
    %460 = math.tanh %459 : vector<8x64xf32>
    %461 = vector.extract_strided_slice %446 {offsets = [0, 192], sizes = [8, 64], strides = [1, 1]} : vector<8x256xf32> to vector<8x64xf32>
    %462 = arith.negf %461 : vector<8x64xf32>
    %463 = math.exp %462 : vector<8x64xf32>
    %cst_135 = arith.constant 1.000000e+00 : f32
    %464 = vector.broadcast %cst_135 : f32 to vector<8x64xf32>
    %465 = arith.addf %464, %463 : vector<8x64xf32>
    %466 = arith.divf %464, %465 : vector<8x64xf32>
    %467 = arith.mulf %458, %425 : vector<8x64xf32>
    %468 = arith.mulf %452, %460 : vector<8x64xf32>
    %469 = arith.addf %467, %468 : vector<8x64xf32>
    %470 = math.tanh %469 : vector<8x64xf32>
    %471 = arith.mulf %466, %470 : vector<8x64xf32>
    %472 = vector.extract_strided_slice %471 {offsets = [0, 0], sizes = [8, 32], strides = [1, 1]} : vector<8x64xf32> to vector<8x32xf32>
    %473 = arith.index_cast %436 : i32 to index
    %c0_136 = arith.constant 0 : index
    %474 = vector.load %arg12[%473, %c0_136] : memref<64x64xf32, #tpu.memory_space<vmem>>, vector<8x32xf32>
    tpu.vector_store %arg12[%473, %c0_136], %472 {strides = array<i32>} : memref<64x64xf32, #tpu.memory_space<vmem>>, vector<8x32xf32>,
    %475 = vector.extract_strided_slice %471 {offsets = [0, 32], sizes = [8, 32], strides = [1, 1]} : vector<8x64xf32> to vector<8x32xf32>
    %476 = arith.index_cast %438 : i32 to index
    %c32_137 = arith.constant 32 : index
    %477 = vector.load %arg12[%476, %c32_137] : memref<64x64xf32, #tpu.memory_space<vmem>>, vector<8x32xf32>
    tpu.vector_store %arg12[%476, %c32_137], %475 {strides = array<i32>} : memref<64x64xf32, #tpu.memory_space<vmem>>, vector<8x32xf32>,
    %c2_i32_138 = arith.constant 2 : i32
    %c7_i32_139 = arith.constant 7 : i32
    %478 = arith.subi %c7_i32_139, %c2_i32_138 : i32
    %c8_i32_140 = arith.constant 8 : i32
    %479 = arith.muli %c2_i32_138, %c8_i32_140 : i32
    %480 = tpu.assume_multiple %479, 8 : i32
    %c8_i32_141 = arith.constant 8 : i32
    %481 = arith.muli %478, %c8_i32_141 : i32
    %482 = tpu.assume_multiple %481, 8 : i32
    %483 = arith.truncf %471 : vector<8x64xf32> to vector<8x64xbf16>
    %cst_142 = arith.constant dense<0.000000e+00> : vector<8x256xf32>
    %484 = tpu.matmul %483, %388, %cst_142 {dimension_numbers = #tpu.dot_dimension_numbers<[1], [0], [0], [1], [0, 0, 1, 1], [], []>} : vector<8x64xbf16>, vector<64x256xbf16>, vector<8x256xf32> -> vector<8x256xf32>
    %485 = arith.index_cast %480 : i32 to index
    %c0_143 = arith.constant 0 : index
    %486 = vector.load %arg11[%485, %c0_143] : memref<64x256xf32, #tpu.memory_space<vmem>>, vector<8x256xf32>
    %487 = arith.index_cast %482 : i32 to index
    %c0_144 = arith.constant 0 : index
    %488 = vector.load %arg11[%487, %c0_144] : memref<64x256xf32, #tpu.memory_space<vmem>>, vector<8x256xf32>
    %489 = arith.select %18, %486, %488 : vector<8x256xi1>, vector<8x256xf32>
    %490 = arith.addf %484, %489 : vector<8x256xf32>
    %491 = vector.extract_strided_slice %490 {offsets = [0, 0], sizes = [8, 64], strides = [1, 1]} : vector<8x256xf32> to vector<8x64xf32>
    %492 = arith.negf %491 : vector<8x64xf32>
    %493 = math.exp %492 : vector<8x64xf32>
    %cst_145 = arith.constant 1.000000e+00 : f32
    %494 = vector.broadcast %cst_145 : f32 to vector<8x64xf32>
    %495 = arith.addf %494, %493 : vector<8x64xf32>
    %496 = arith.divf %494, %495 : vector<8x64xf32>
    %497 = vector.extract_strided_slice %490 {offsets = [0, 64], sizes = [8, 64], strides = [1, 1]} : vector<8x256xf32> to vector<8x64xf32>
    %498 = arith.negf %497 : vector<8x64xf32>
    %499 = math.exp %498 : vector<8x64xf32>
    %cst_146 = arith.constant 1.000000e+00 : f32
    %500 = vector.broadcast %cst_146 : f32 to vector<8x64xf32>
    %501 = arith.addf %500, %499 : vector<8x64xf32>
    %502 = arith.divf %500, %501 : vector<8x64xf32>
    %503 = vector.extract_strided_slice %490 {offsets = [0, 128], sizes = [8, 64], strides = [1, 1]} : vector<8x256xf32> to vector<8x64xf32>
    %504 = math.tanh %503 : vector<8x64xf32>
    %505 = vector.extract_strided_slice %490 {offsets = [0, 192], sizes = [8, 64], strides = [1, 1]} : vector<8x256xf32> to vector<8x64xf32>
    %506 = arith.negf %505 : vector<8x64xf32>
    %507 = math.exp %506 : vector<8x64xf32>
    %cst_147 = arith.constant 1.000000e+00 : f32
    %508 = vector.broadcast %cst_147 : f32 to vector<8x64xf32>
    %509 = arith.addf %508, %507 : vector<8x64xf32>
    %510 = arith.divf %508, %509 : vector<8x64xf32>
    %511 = arith.mulf %502, %469 : vector<8x64xf32>
    %512 = arith.mulf %496, %504 : vector<8x64xf32>
    %513 = arith.addf %511, %512 : vector<8x64xf32>
    %514 = math.tanh %513 : vector<8x64xf32>
    %515 = arith.mulf %510, %514 : vector<8x64xf32>
    %516 = vector.extract_strided_slice %515 {offsets = [0, 0], sizes = [8, 32], strides = [1, 1]} : vector<8x64xf32> to vector<8x32xf32>
    %517 = arith.index_cast %480 : i32 to index
    %c0_148 = arith.constant 0 : index
    %518 = vector.load %arg12[%517, %c0_148] : memref<64x64xf32, #tpu.memory_space<vmem>>, vector<8x32xf32>
    tpu.vector_store %arg12[%517, %c0_148], %516 {strides = array<i32>} : memref<64x64xf32, #tpu.memory_space<vmem>>, vector<8x32xf32>,
    %519 = vector.extract_strided_slice %515 {offsets = [0, 32], sizes = [8, 32], strides = [1, 1]} : vector<8x64xf32> to vector<8x32xf32>
    %520 = arith.index_cast %482 : i32 to index
    %c32_149 = arith.constant 32 : index
    %521 = vector.load %arg12[%520, %c32_149] : memref<64x64xf32, #tpu.memory_space<vmem>>, vector<8x32xf32>
    tpu.vector_store %arg12[%520, %c32_149], %519 {strides = array<i32>} : memref<64x64xf32, #tpu.memory_space<vmem>>, vector<8x32xf32>,
    %c3_i32_150 = arith.constant 3 : i32
    %c7_i32_151 = arith.constant 7 : i32
    %522 = arith.subi %c7_i32_151, %c3_i32_150 : i32
    %c8_i32_152 = arith.constant 8 : i32
    %523 = arith.muli %c3_i32_150, %c8_i32_152 : i32
    %524 = tpu.assume_multiple %523, 8 : i32
    %c8_i32_153 = arith.constant 8 : i32
    %525 = arith.muli %522, %c8_i32_153 : i32
    %526 = tpu.assume_multiple %525, 8 : i32
    %527 = arith.truncf %515 : vector<8x64xf32> to vector<8x64xbf16>
    %cst_154 = arith.constant dense<0.000000e+00> : vector<8x256xf32>
    %528 = tpu.matmul %527, %388, %cst_154 {dimension_numbers = #tpu.dot_dimension_numbers<[1], [0], [0], [1], [0, 0, 1, 1], [], []>} : vector<8x64xbf16>, vector<64x256xbf16>, vector<8x256xf32> -> vector<8x256xf32>
    %529 = arith.index_cast %524 : i32 to index
    %c0_155 = arith.constant 0 : index
    %530 = vector.load %arg11[%529, %c0_155] : memref<64x256xf32, #tpu.memory_space<vmem>>, vector<8x256xf32>
    %531 = arith.index_cast %526 : i32 to index
    %c0_156 = arith.constant 0 : index
    %532 = vector.load %arg11[%531, %c0_156] : memref<64x256xf32, #tpu.memory_space<vmem>>, vector<8x256xf32>
    %533 = arith.select %18, %530, %532 : vector<8x256xi1>, vector<8x256xf32>
    %534 = arith.addf %528, %533 : vector<8x256xf32>
    %535 = vector.extract_strided_slice %534 {offsets = [0, 0], sizes = [8, 64], strides = [1, 1]} : vector<8x256xf32> to vector<8x64xf32>
    %536 = arith.negf %535 : vector<8x64xf32>
    %537 = math.exp %536 : vector<8x64xf32>
    %cst_157 = arith.constant 1.000000e+00 : f32
    %538 = vector.broadcast %cst_157 : f32 to vector<8x64xf32>
    %539 = arith.addf %538, %537 : vector<8x64xf32>
    %540 = arith.divf %538, %539 : vector<8x64xf32>
    %541 = vector.extract_strided_slice %534 {offsets = [0, 64], sizes = [8, 64], strides = [1, 1]} : vector<8x256xf32> to vector<8x64xf32>
    %542 = arith.negf %541 : vector<8x64xf32>
    %543 = math.exp %542 : vector<8x64xf32>
    %cst_158 = arith.constant 1.000000e+00 : f32
    %544 = vector.broadcast %cst_158 : f32 to vector<8x64xf32>
    %545 = arith.addf %544, %543 : vector<8x64xf32>
    %546 = arith.divf %544, %545 : vector<8x64xf32>
    %547 = vector.extract_strided_slice %534 {offsets = [0, 128], sizes = [8, 64], strides = [1, 1]} : vector<8x256xf32> to vector<8x64xf32>
    %548 = math.tanh %547 : vector<8x64xf32>
    %549 = vector.extract_strided_slice %534 {offsets = [0, 192], sizes = [8, 64], strides = [1, 1]} : vector<8x256xf32> to vector<8x64xf32>
    %550 = arith.negf %549 : vector<8x64xf32>
    %551 = math.exp %550 : vector<8x64xf32>
    %cst_159 = arith.constant 1.000000e+00 : f32
    %552 = vector.broadcast %cst_159 : f32 to vector<8x64xf32>
    %553 = arith.addf %552, %551 : vector<8x64xf32>
    %554 = arith.divf %552, %553 : vector<8x64xf32>
    %555 = arith.mulf %546, %513 : vector<8x64xf32>
    %556 = arith.mulf %540, %548 : vector<8x64xf32>
    %557 = arith.addf %555, %556 : vector<8x64xf32>
    %558 = math.tanh %557 : vector<8x64xf32>
    %559 = arith.mulf %554, %558 : vector<8x64xf32>
    %560 = vector.extract_strided_slice %559 {offsets = [0, 0], sizes = [8, 32], strides = [1, 1]} : vector<8x64xf32> to vector<8x32xf32>
    %561 = arith.index_cast %524 : i32 to index
    %c0_160 = arith.constant 0 : index
    %562 = vector.load %arg12[%561, %c0_160] : memref<64x64xf32, #tpu.memory_space<vmem>>, vector<8x32xf32>
    tpu.vector_store %arg12[%561, %c0_160], %560 {strides = array<i32>} : memref<64x64xf32, #tpu.memory_space<vmem>>, vector<8x32xf32>,
    %563 = vector.extract_strided_slice %559 {offsets = [0, 32], sizes = [8, 32], strides = [1, 1]} : vector<8x64xf32> to vector<8x32xf32>
    %564 = arith.index_cast %526 : i32 to index
    %c32_161 = arith.constant 32 : index
    %565 = vector.load %arg12[%564, %c32_161] : memref<64x64xf32, #tpu.memory_space<vmem>>, vector<8x32xf32>
    tpu.vector_store %arg12[%564, %c32_161], %563 {strides = array<i32>} : memref<64x64xf32, #tpu.memory_space<vmem>>, vector<8x32xf32>,
    %c4_i32_162 = arith.constant 4 : i32
    %c7_i32_163 = arith.constant 7 : i32
    %566 = arith.subi %c7_i32_163, %c4_i32_162 : i32
    %c8_i32_164 = arith.constant 8 : i32
    %567 = arith.muli %c4_i32_162, %c8_i32_164 : i32
    %568 = tpu.assume_multiple %567, 8 : i32
    %c8_i32_165 = arith.constant 8 : i32
    %569 = arith.muli %566, %c8_i32_165 : i32
    %570 = tpu.assume_multiple %569, 8 : i32
    %571 = arith.truncf %559 : vector<8x64xf32> to vector<8x64xbf16>
    %cst_166 = arith.constant dense<0.000000e+00> : vector<8x256xf32>
    %572 = tpu.matmul %571, %388, %cst_166 {dimension_numbers = #tpu.dot_dimension_numbers<[1], [0], [0], [1], [0, 0, 1, 1], [], []>} : vector<8x64xbf16>, vector<64x256xbf16>, vector<8x256xf32> -> vector<8x256xf32>
    %573 = arith.index_cast %568 : i32 to index
    %c0_167 = arith.constant 0 : index
    %574 = vector.load %arg11[%573, %c0_167] : memref<64x256xf32, #tpu.memory_space<vmem>>, vector<8x256xf32>
    %575 = arith.index_cast %570 : i32 to index
    %c0_168 = arith.constant 0 : index
    %576 = vector.load %arg11[%575, %c0_168] : memref<64x256xf32, #tpu.memory_space<vmem>>, vector<8x256xf32>
    %577 = arith.select %18, %574, %576 : vector<8x256xi1>, vector<8x256xf32>
    %578 = arith.addf %572, %577 : vector<8x256xf32>
    %579 = vector.extract_strided_slice %578 {offsets = [0, 0], sizes = [8, 64], strides = [1, 1]} : vector<8x256xf32> to vector<8x64xf32>
    %580 = arith.negf %579 : vector<8x64xf32>
    %581 = math.exp %580 : vector<8x64xf32>
    %cst_169 = arith.constant 1.000000e+00 : f32
    %582 = vector.broadcast %cst_169 : f32 to vector<8x64xf32>
    %583 = arith.addf %582, %581 : vector<8x64xf32>
    %584 = arith.divf %582, %583 : vector<8x64xf32>
    %585 = vector.extract_strided_slice %578 {offsets = [0, 64], sizes = [8, 64], strides = [1, 1]} : vector<8x256xf32> to vector<8x64xf32>
    %586 = arith.negf %585 : vector<8x64xf32>
    %587 = math.exp %586 : vector<8x64xf32>
    %cst_170 = arith.constant 1.000000e+00 : f32
    %588 = vector.broadcast %cst_170 : f32 to vector<8x64xf32>
    %589 = arith.addf %588, %587 : vector<8x64xf32>
    %590 = arith.divf %588, %589 : vector<8x64xf32>
    %591 = vector.extract_strided_slice %578 {offsets = [0, 128], sizes = [8, 64], strides = [1, 1]} : vector<8x256xf32> to vector<8x64xf32>
    %592 = math.tanh %591 : vector<8x64xf32>
    %593 = vector.extract_strided_slice %578 {offsets = [0, 192], sizes = [8, 64], strides = [1, 1]} : vector<8x256xf32> to vector<8x64xf32>
    %594 = arith.negf %593 : vector<8x64xf32>
    %595 = math.exp %594 : vector<8x64xf32>
    %cst_171 = arith.constant 1.000000e+00 : f32
    %596 = vector.broadcast %cst_171 : f32 to vector<8x64xf32>
    %597 = arith.addf %596, %595 : vector<8x64xf32>
    %598 = arith.divf %596, %597 : vector<8x64xf32>
    %599 = arith.mulf %590, %557 : vector<8x64xf32>
    %600 = arith.mulf %584, %592 : vector<8x64xf32>
    %601 = arith.addf %599, %600 : vector<8x64xf32>
    %602 = math.tanh %601 : vector<8x64xf32>
    %603 = arith.mulf %598, %602 : vector<8x64xf32>
    %604 = vector.extract_strided_slice %603 {offsets = [0, 0], sizes = [8, 32], strides = [1, 1]} : vector<8x64xf32> to vector<8x32xf32>
    %605 = arith.index_cast %568 : i32 to index
    %c0_172 = arith.constant 0 : index
    %606 = vector.load %arg12[%605, %c0_172] : memref<64x64xf32, #tpu.memory_space<vmem>>, vector<8x32xf32>
    tpu.vector_store %arg12[%605, %c0_172], %604 {strides = array<i32>} : memref<64x64xf32, #tpu.memory_space<vmem>>, vector<8x32xf32>,
    %607 = vector.extract_strided_slice %603 {offsets = [0, 32], sizes = [8, 32], strides = [1, 1]} : vector<8x64xf32> to vector<8x32xf32>
    %608 = arith.index_cast %570 : i32 to index
    %c32_173 = arith.constant 32 : index
    %609 = vector.load %arg12[%608, %c32_173] : memref<64x64xf32, #tpu.memory_space<vmem>>, vector<8x32xf32>
    tpu.vector_store %arg12[%608, %c32_173], %607 {strides = array<i32>} : memref<64x64xf32, #tpu.memory_space<vmem>>, vector<8x32xf32>,
    %c5_i32_174 = arith.constant 5 : i32
    %c7_i32_175 = arith.constant 7 : i32
    %610 = arith.subi %c7_i32_175, %c5_i32_174 : i32
    %c8_i32_176 = arith.constant 8 : i32
    %611 = arith.muli %c5_i32_174, %c8_i32_176 : i32
    %612 = tpu.assume_multiple %611, 8 : i32
    %c8_i32_177 = arith.constant 8 : i32
    %613 = arith.muli %610, %c8_i32_177 : i32
    %614 = tpu.assume_multiple %613, 8 : i32
    %615 = arith.truncf %603 : vector<8x64xf32> to vector<8x64xbf16>
    %cst_178 = arith.constant dense<0.000000e+00> : vector<8x256xf32>
    %616 = tpu.matmul %615, %388, %cst_178 {dimension_numbers = #tpu.dot_dimension_numbers<[1], [0], [0], [1], [0, 0, 1, 1], [], []>} : vector<8x64xbf16>, vector<64x256xbf16>, vector<8x256xf32> -> vector<8x256xf32>
    %617 = arith.index_cast %612 : i32 to index
    %c0_179 = arith.constant 0 : index
    %618 = vector.load %arg11[%617, %c0_179] : memref<64x256xf32, #tpu.memory_space<vmem>>, vector<8x256xf32>
    %619 = arith.index_cast %614 : i32 to index
    %c0_180 = arith.constant 0 : index
    %620 = vector.load %arg11[%619, %c0_180] : memref<64x256xf32, #tpu.memory_space<vmem>>, vector<8x256xf32>
    %621 = arith.select %18, %618, %620 : vector<8x256xi1>, vector<8x256xf32>
    %622 = arith.addf %616, %621 : vector<8x256xf32>
    %623 = vector.extract_strided_slice %622 {offsets = [0, 0], sizes = [8, 64], strides = [1, 1]} : vector<8x256xf32> to vector<8x64xf32>
    %624 = arith.negf %623 : vector<8x64xf32>
    %625 = math.exp %624 : vector<8x64xf32>
    %cst_181 = arith.constant 1.000000e+00 : f32
    %626 = vector.broadcast %cst_181 : f32 to vector<8x64xf32>
    %627 = arith.addf %626, %625 : vector<8x64xf32>
    %628 = arith.divf %626, %627 : vector<8x64xf32>
    %629 = vector.extract_strided_slice %622 {offsets = [0, 64], sizes = [8, 64], strides = [1, 1]} : vector<8x256xf32> to vector<8x64xf32>
    %630 = arith.negf %629 : vector<8x64xf32>
    %631 = math.exp %630 : vector<8x64xf32>
    %cst_182 = arith.constant 1.000000e+00 : f32
    %632 = vector.broadcast %cst_182 : f32 to vector<8x64xf32>
    %633 = arith.addf %632, %631 : vector<8x64xf32>
    %634 = arith.divf %632, %633 : vector<8x64xf32>
    %635 = vector.extract_strided_slice %622 {offsets = [0, 128], sizes = [8, 64], strides = [1, 1]} : vector<8x256xf32> to vector<8x64xf32>
    %636 = math.tanh %635 : vector<8x64xf32>
    %637 = vector.extract_strided_slice %622 {offsets = [0, 192], sizes = [8, 64], strides = [1, 1]} : vector<8x256xf32> to vector<8x64xf32>
    %638 = arith.negf %637 : vector<8x64xf32>
    %639 = math.exp %638 : vector<8x64xf32>
    %cst_183 = arith.constant 1.000000e+00 : f32
    %640 = vector.broadcast %cst_183 : f32 to vector<8x64xf32>
    %641 = arith.addf %640, %639 : vector<8x64xf32>
    %642 = arith.divf %640, %641 : vector<8x64xf32>
    %643 = arith.mulf %634, %601 : vector<8x64xf32>
    %644 = arith.mulf %628, %636 : vector<8x64xf32>
    %645 = arith.addf %643, %644 : vector<8x64xf32>
    %646 = math.tanh %645 : vector<8x64xf32>
    %647 = arith.mulf %642, %646 : vector<8x64xf32>
    %648 = vector.extract_strided_slice %647 {offsets = [0, 0], sizes = [8, 32], strides = [1, 1]} : vector<8x64xf32> to vector<8x32xf32>
    %649 = arith.index_cast %612 : i32 to index
    %c0_184 = arith.constant 0 : index
    %650 = vector.load %arg12[%649, %c0_184] : memref<64x64xf32, #tpu.memory_space<vmem>>, vector<8x32xf32>
    tpu.vector_store %arg12[%649, %c0_184], %648 {strides = array<i32>} : memref<64x64xf32, #tpu.memory_space<vmem>>, vector<8x32xf32>,
    %651 = vector.extract_strided_slice %647 {offsets = [0, 32], sizes = [8, 32], strides = [1, 1]} : vector<8x64xf32> to vector<8x32xf32>
    %652 = arith.index_cast %614 : i32 to index
    %c32_185 = arith.constant 32 : index
    %653 = vector.load %arg12[%652, %c32_185] : memref<64x64xf32, #tpu.memory_space<vmem>>, vector<8x32xf32>
    tpu.vector_store %arg12[%652, %c32_185], %651 {strides = array<i32>} : memref<64x64xf32, #tpu.memory_space<vmem>>, vector<8x32xf32>,
    %c6_i32_186 = arith.constant 6 : i32
    %c7_i32_187 = arith.constant 7 : i32
    %654 = arith.subi %c7_i32_187, %c6_i32_186 : i32
    %c8_i32_188 = arith.constant 8 : i32
    %655 = arith.muli %c6_i32_186, %c8_i32_188 : i32
    %656 = tpu.assume_multiple %655, 8 : i32
    %c8_i32_189 = arith.constant 8 : i32
    %657 = arith.muli %654, %c8_i32_189 : i32
    %658 = tpu.assume_multiple %657, 8 : i32
    %659 = arith.truncf %647 : vector<8x64xf32> to vector<8x64xbf16>
    %cst_190 = arith.constant dense<0.000000e+00> : vector<8x256xf32>
    %660 = tpu.matmul %659, %388, %cst_190 {dimension_numbers = #tpu.dot_dimension_numbers<[1], [0], [0], [1], [0, 0, 1, 1], [], []>} : vector<8x64xbf16>, vector<64x256xbf16>, vector<8x256xf32> -> vector<8x256xf32>
    %661 = arith.index_cast %656 : i32 to index
    %c0_191 = arith.constant 0 : index
    %662 = vector.load %arg11[%661, %c0_191] : memref<64x256xf32, #tpu.memory_space<vmem>>, vector<8x256xf32>
    %663 = arith.index_cast %658 : i32 to index
    %c0_192 = arith.constant 0 : index
    %664 = vector.load %arg11[%663, %c0_192] : memref<64x256xf32, #tpu.memory_space<vmem>>, vector<8x256xf32>
    %665 = arith.select %18, %662, %664 : vector<8x256xi1>, vector<8x256xf32>
    %666 = arith.addf %660, %665 : vector<8x256xf32>
    %667 = vector.extract_strided_slice %666 {offsets = [0, 0], sizes = [8, 64], strides = [1, 1]} : vector<8x256xf32> to vector<8x64xf32>
    %668 = arith.negf %667 : vector<8x64xf32>
    %669 = math.exp %668 : vector<8x64xf32>
    %cst_193 = arith.constant 1.000000e+00 : f32
    %670 = vector.broadcast %cst_193 : f32 to vector<8x64xf32>
    %671 = arith.addf %670, %669 : vector<8x64xf32>
    %672 = arith.divf %670, %671 : vector<8x64xf32>
    %673 = vector.extract_strided_slice %666 {offsets = [0, 64], sizes = [8, 64], strides = [1, 1]} : vector<8x256xf32> to vector<8x64xf32>
    %674 = arith.negf %673 : vector<8x64xf32>
    %675 = math.exp %674 : vector<8x64xf32>
    %cst_194 = arith.constant 1.000000e+00 : f32
    %676 = vector.broadcast %cst_194 : f32 to vector<8x64xf32>
    %677 = arith.addf %676, %675 : vector<8x64xf32>
    %678 = arith.divf %676, %677 : vector<8x64xf32>
    %679 = vector.extract_strided_slice %666 {offsets = [0, 128], sizes = [8, 64], strides = [1, 1]} : vector<8x256xf32> to vector<8x64xf32>
    %680 = math.tanh %679 : vector<8x64xf32>
    %681 = vector.extract_strided_slice %666 {offsets = [0, 192], sizes = [8, 64], strides = [1, 1]} : vector<8x256xf32> to vector<8x64xf32>
    %682 = arith.negf %681 : vector<8x64xf32>
    %683 = math.exp %682 : vector<8x64xf32>
    %cst_195 = arith.constant 1.000000e+00 : f32
    %684 = vector.broadcast %cst_195 : f32 to vector<8x64xf32>
    %685 = arith.addf %684, %683 : vector<8x64xf32>
    %686 = arith.divf %684, %685 : vector<8x64xf32>
    %687 = arith.mulf %678, %645 : vector<8x64xf32>
    %688 = arith.mulf %672, %680 : vector<8x64xf32>
    %689 = arith.addf %687, %688 : vector<8x64xf32>
    %690 = math.tanh %689 : vector<8x64xf32>
    %691 = arith.mulf %686, %690 : vector<8x64xf32>
    %692 = vector.extract_strided_slice %691 {offsets = [0, 0], sizes = [8, 32], strides = [1, 1]} : vector<8x64xf32> to vector<8x32xf32>
    %693 = arith.index_cast %656 : i32 to index
    %c0_196 = arith.constant 0 : index
    %694 = vector.load %arg12[%693, %c0_196] : memref<64x64xf32, #tpu.memory_space<vmem>>, vector<8x32xf32>
    tpu.vector_store %arg12[%693, %c0_196], %692 {strides = array<i32>} : memref<64x64xf32, #tpu.memory_space<vmem>>, vector<8x32xf32>,
    %695 = vector.extract_strided_slice %691 {offsets = [0, 32], sizes = [8, 32], strides = [1, 1]} : vector<8x64xf32> to vector<8x32xf32>
    %696 = arith.index_cast %658 : i32 to index
    %c32_197 = arith.constant 32 : index
    %697 = vector.load %arg12[%696, %c32_197] : memref<64x64xf32, #tpu.memory_space<vmem>>, vector<8x32xf32>
    tpu.vector_store %arg12[%696, %c32_197], %695 {strides = array<i32>} : memref<64x64xf32, #tpu.memory_space<vmem>>, vector<8x32xf32>,
    %c7_i32_198 = arith.constant 7 : i32
    %c7_i32_199 = arith.constant 7 : i32
    %698 = arith.subi %c7_i32_199, %c7_i32_198 : i32
    %c8_i32_200 = arith.constant 8 : i32
    %699 = arith.muli %c7_i32_198, %c8_i32_200 : i32
    %700 = tpu.assume_multiple %699, 8 : i32
    %c8_i32_201 = arith.constant 8 : i32
    %701 = arith.muli %698, %c8_i32_201 : i32
    %702 = tpu.assume_multiple %701, 8 : i32
    %703 = arith.truncf %691 : vector<8x64xf32> to vector<8x64xbf16>
    %cst_202 = arith.constant dense<0.000000e+00> : vector<8x256xf32>
    %704 = tpu.matmul %703, %388, %cst_202 {dimension_numbers = #tpu.dot_dimension_numbers<[1], [0], [0], [1], [0, 0, 1, 1], [], []>} : vector<8x64xbf16>, vector<64x256xbf16>, vector<8x256xf32> -> vector<8x256xf32>
    %705 = arith.index_cast %700 : i32 to index
    %c0_203 = arith.constant 0 : index
    %706 = vector.load %arg11[%705, %c0_203] : memref<64x256xf32, #tpu.memory_space<vmem>>, vector<8x256xf32>
    %707 = arith.index_cast %702 : i32 to index
    %c0_204 = arith.constant 0 : index
    %708 = vector.load %arg11[%707, %c0_204] : memref<64x256xf32, #tpu.memory_space<vmem>>, vector<8x256xf32>
    %709 = arith.select %18, %706, %708 : vector<8x256xi1>, vector<8x256xf32>
    %710 = arith.addf %704, %709 : vector<8x256xf32>
    %711 = vector.extract_strided_slice %710 {offsets = [0, 0], sizes = [8, 64], strides = [1, 1]} : vector<8x256xf32> to vector<8x64xf32>
    %712 = arith.negf %711 : vector<8x64xf32>
    %713 = math.exp %712 : vector<8x64xf32>
    %cst_205 = arith.constant 1.000000e+00 : f32
    %714 = vector.broadcast %cst_205 : f32 to vector<8x64xf32>
    %715 = arith.addf %714, %713 : vector<8x64xf32>
    %716 = arith.divf %714, %715 : vector<8x64xf32>
    %717 = vector.extract_strided_slice %710 {offsets = [0, 64], sizes = [8, 64], strides = [1, 1]} : vector<8x256xf32> to vector<8x64xf32>
    %718 = arith.negf %717 : vector<8x64xf32>
    %719 = math.exp %718 : vector<8x64xf32>
    %cst_206 = arith.constant 1.000000e+00 : f32
    %720 = vector.broadcast %cst_206 : f32 to vector<8x64xf32>
    %721 = arith.addf %720, %719 : vector<8x64xf32>
    %722 = arith.divf %720, %721 : vector<8x64xf32>
    %723 = vector.extract_strided_slice %710 {offsets = [0, 128], sizes = [8, 64], strides = [1, 1]} : vector<8x256xf32> to vector<8x64xf32>
    %724 = math.tanh %723 : vector<8x64xf32>
    %725 = vector.extract_strided_slice %710 {offsets = [0, 192], sizes = [8, 64], strides = [1, 1]} : vector<8x256xf32> to vector<8x64xf32>
    %726 = arith.negf %725 : vector<8x64xf32>
    %727 = math.exp %726 : vector<8x64xf32>
    %cst_207 = arith.constant 1.000000e+00 : f32
    %728 = vector.broadcast %cst_207 : f32 to vector<8x64xf32>
    %729 = arith.addf %728, %727 : vector<8x64xf32>
    %730 = arith.divf %728, %729 : vector<8x64xf32>
    %731 = arith.mulf %722, %689 : vector<8x64xf32>
    %732 = arith.mulf %716, %724 : vector<8x64xf32>
    %733 = arith.addf %731, %732 : vector<8x64xf32>
    %734 = math.tanh %733 : vector<8x64xf32>
    %735 = arith.mulf %730, %734 : vector<8x64xf32>
    %736 = vector.extract_strided_slice %735 {offsets = [0, 0], sizes = [8, 32], strides = [1, 1]} : vector<8x64xf32> to vector<8x32xf32>
    %737 = arith.index_cast %700 : i32 to index
    %c0_208 = arith.constant 0 : index
    %738 = vector.load %arg12[%737, %c0_208] : memref<64x64xf32, #tpu.memory_space<vmem>>, vector<8x32xf32>
    tpu.vector_store %arg12[%737, %c0_208], %736 {strides = array<i32>} : memref<64x64xf32, #tpu.memory_space<vmem>>, vector<8x32xf32>,
    %739 = vector.extract_strided_slice %735 {offsets = [0, 32], sizes = [8, 32], strides = [1, 1]} : vector<8x64xf32> to vector<8x32xf32>
    %740 = arith.index_cast %702 : i32 to index
    %c32_209 = arith.constant 32 : index
    %741 = vector.load %arg12[%740, %c32_209] : memref<64x64xf32, #tpu.memory_space<vmem>>, vector<8x32xf32>
    tpu.vector_store %arg12[%740, %c32_209], %739 {strides = array<i32>} : memref<64x64xf32, #tpu.memory_space<vmem>>, vector<8x32xf32>,
    %c8_i32_210 = arith.constant 8 : i32
    %c0_211 = arith.constant 0 : index
    %c0_212 = arith.constant 0 : index
    %742 = vector.load %arg12[%c0_211, %c0_212] : memref<64x64xf32, #tpu.memory_space<vmem>>, vector<64x64xf32>
    %743 = arith.truncf %742 : vector<64x64xf32> to vector<64x64xbf16>
    %c0_213 = arith.constant 0 : index
    %c0_214 = arith.constant 0 : index
    %744 = vector.load %arg8[%c0_213, %c0_214] : memref<64x5xbf16, #tpu.memory_space<vmem>>, vector<64x5xbf16>
    %cst_215 = arith.constant dense<0.000000e+00> : vector<64x5xf32>
    %745 = tpu.matmul %743, %744, %cst_215 {dimension_numbers = #tpu.dot_dimension_numbers<[1], [0], [0], [1], [0, 0, 1, 1], [], []>} : vector<64x64xbf16>, vector<64x5xbf16>, vector<64x5xf32> -> vector<64x5xf32>
    %c0_216 = arith.constant 0 : index
    %c0_217 = arith.constant 0 : index
    %746 = vector.load %arg9[%c0_216, %c0_217] : memref<1x5xf32, #tpu.memory_space<vmem>>, vector<1x5xf32>
    %747 = vector.broadcast %746 : vector<1x5xf32> to vector<64x5xf32>
    %748 = arith.addf %745, %747 : vector<64x5xf32>
    %c0_218 = arith.constant 0 : index
    %c0_219 = arith.constant 0 : index
    %749 = vector.load %arg10[%c0_218, %c0_219] : memref<64x5xf32, #tpu.memory_space<vmem>>, vector<64x5xf32>
    tpu.vector_store %arg10[%c0_218, %c0_219], %748 {strides = array<i32>} : memref<64x5xf32, #tpu.memory_space<vmem>>, vector<64x5xf32>,
    return
  }
  func.func @transform_0(%arg0: i32) -> (i32, i32) {
    %c0_i32 = arith.constant 0 : i32
    %c0_i32_0 = arith.constant 0 : i32
    %c0_i32_1 = arith.constant 0 : i32
    return %c0_i32, %c0_i32_0 : i32, i32
  }
  func.func @transform_1(%arg0: i32) -> (i32, i32) {
    %c0_i32 = arith.constant 0 : i32
    %c0_i32_0 = arith.constant 0 : i32
    %c0_i32_1 = arith.constant 0 : i32
    return %c0_i32, %c0_i32_0 : i32, i32
  }
  func.func @transform_2(%arg0: i32) -> (i32, i32) {
    %c0_i32 = arith.constant 0 : i32
    %c0_i32_0 = arith.constant 0 : i32
    %c0_i32_1 = arith.constant 0 : i32
    return %c0_i32, %c0_i32_0 : i32, i32
  }
  func.func @transform_3(%arg0: i32) -> (i32, i32) {
    %c0_i32 = arith.constant 0 : i32
    %c0_i32_0 = arith.constant 0 : i32
    %c0_i32_1 = arith.constant 0 : i32
    return %c0_i32, %c0_i32_0 : i32, i32
  }
  func.func @transform_4(%arg0: i32) -> (i32, i32) {
    %c0_i32 = arith.constant 0 : i32
    %c0_i32_0 = arith.constant 0 : i32
    %c0_i32_1 = arith.constant 0 : i32
    return %c0_i32, %c0_i32_0 : i32, i32
  }
  func.func @transform_5(%arg0: i32) -> (i32, i32) {
    %c0_i32 = arith.constant 0 : i32
    %c0_i32_0 = arith.constant 0 : i32
    %c0_i32_1 = arith.constant 0 : i32
    return %c0_i32, %c0_i32_0 : i32, i32
  }
  func.func @transform_6(%arg0: i32) -> (i32, i32) {
    %c0_i32 = arith.constant 0 : i32
    %c0_i32_0 = arith.constant 0 : i32
    %c0_i32_1 = arith.constant 0 : i32
    return %c0_i32, %c0_i32_0 : i32, i32
  }
  func.func @transform_7(%arg0: i32) -> (i32, i32) {
    %c0_i32 = arith.constant 0 : i32
    %c0_i32_0 = arith.constant 0 : i32
    %c0_i32_1 = arith.constant 0 : i32
    return %c0_i32, %c0_i32_0 : i32, i32
  }
  func.func @transform_8(%arg0: i32) -> (i32, i32) {
    %c0_i32 = arith.constant 0 : i32
    %c0_i32_0 = arith.constant 0 : i32
    %c0_i32_1 = arith.constant 0 : i32
    return %c0_i32, %c0_i32_0 : i32, i32
  }
  func.func @transform_9(%arg0: i32) -> (i32, i32) {
    %c0_i32 = arith.constant 0 : i32
    %c0_i32_0 = arith.constant 0 : i32
    %c0_i32_1 = arith.constant 0 : i32
    return %c0_i32, %c0_i32_0 : i32, i32
  }
}

</mosaic_0001>

<llo_original>
// kernel: bilstm_forward.1
$region0: #{bilstm_forward.1}
  #allocation0 [shape = 'u32[]', space=smem, size = 0x4, offset = 0x4, fixed_abs, tag = 'smem constant byte address 0x4 - core index']
  #allocation1 [shape = 'u32[72,128]{1,0:T(1,128)}', space=vmem, size = 0x9000, scoped, tag = 'internal scratch']
  #allocation2 [shape = 'f32[64,256]{1,0:T(8,128)}', space=vmem, size = 0x10000, scoped, tag = 'scratch operand']
  #allocation3 [shape = 'f32[64,64]{1,0:T(8,128)}', space=vmem, size = 0x8000, scoped, tag = 'scratch operand']
  %s0 = inlined_call_operand.vmem [shape: bf16[64,32], index: 0, kind: input, shape index: {}]
  %s1 = inlined_call_operand.vmem [shape: bf16[32,256], index: 1, kind: input, shape index: {}]
  %s2 = inlined_call_operand.vmem [shape: bf16[64,256], index: 2, kind: input, shape index: {}]
  %s3 = inlined_call_operand.vmem [shape: f32[1,256], index: 3, kind: input, shape index: {}]
  %s4 = inlined_call_operand.vmem [shape: bf16[64,256], index: 4, kind: input, shape index: {}]
  %s5 = inlined_call_operand.vmem [shape: bf16[64,256], index: 5, kind: input, shape index: {}]
  %s6 = inlined_call_operand.vmem [shape: f32[1,256], index: 6, kind: input, shape index: {}]
  %s7 = inlined_call_operand.vmem [shape: bf16[64,5], index: 7, kind: input, shape index: {}]
  %s8 = inlined_call_operand.vmem [shape: f32[1,5], index: 8, kind: input, shape index: {}]
  %s9 = inlined_call_operand.vmem [shape: f32[64,5], index: 9, kind: output, shape index: {}]
  %s10 = sld [smem:[#allocation0]]
  $region46: #{bilstm_forward.1} parent=0
    _
  %s12 = ssub.s32 1, %s10
  %s13 = scalar_select 0, %s12, %s10
  // Predicated region
  $region2: #{bilstm_forward.1} parent=0 // pred_check
    _
  $region3: #{bilstm_forward.1} parent=0 // pred_check_branch
    %15 = sbr.rel (0) target = $region5
  $region4: #{bilstm_forward.1} parent=0 // pred_region
    _
  $region5: #{bilstm_forward.1} parent=0 // pred_fallthru
    _
  // Predicated region
  $region6: #{bilstm_forward.1} parent=0 // pred_check
    _
  $region7: #{bilstm_forward.1} parent=0 // pred_check_branch
    %17 = sbr.rel (0) target = $region9
  $region8: #{bilstm_forward.1} parent=0 // pred_region
    _
  $region9: #{bilstm_forward.1} parent=0 // pred_fallthru
    _
  // Predicated region
  $region10: #{bilstm_forward.1} parent=0 // pred_check
    _
  $region11: #{bilstm_forward.1} parent=0 // pred_check_branch
    %19 = sbr.rel (0) target = $region13
  $region12: #{bilstm_forward.1} parent=0 // pred_region
    _
  $region13: #{bilstm_forward.1} parent=0 // pred_fallthru
    _
  // Predicated region
  $region14: #{bilstm_forward.1} parent=0 // pred_check
    _
  $region15: #{bilstm_forward.1} parent=0 // pred_check_branch
    %21 = sbr.rel (0) target = $region17
  $region16: #{bilstm_forward.1} parent=0 // pred_region
    _
  $region17: #{bilstm_forward.1} parent=0 // pred_fallthru
    _
  // Predicated region
  $region18: #{bilstm_forward.1} parent=0 // pred_check
    _
  $region19: #{bilstm_forward.1} parent=0 // pred_check_branch
    %23 = sbr.rel (0) target = $region21
  $region20: #{bilstm_forward.1} parent=0 // pred_region
    _
  $region21: #{bilstm_forward.1} parent=0 // pred_fallthru
    _
  // Predicated region
  $region22: #{bilstm_forward.1} parent=0 // pred_check
    _
  $region23: #{bilstm_forward.1} parent=0 // pred_check_branch
    %25 = sbr.rel (0) target = $region25
  $region24: #{bilstm_forward.1} parent=0 // pred_region
    _
  $region25: #{bilstm_forward.1} parent=0 // pred_fallthru
    _
  // Predicated region
  $region26: #{bilstm_forward.1} parent=0 // pred_check
    _
  $region27: #{bilstm_forward.1} parent=0 // pred_check_branch
    %27 = sbr.rel (0) target = $region29
  $region28: #{bilstm_forward.1} parent=0 // pred_region
    _
  $region29: #{bilstm_forward.1} parent=0 // pred_fallthru
    _
  // Predicated region
  $region30: #{bilstm_forward.1} parent=0 // pred_check
    _
  $region31: #{bilstm_forward.1} parent=0 // pred_check_branch
    %29 = sbr.rel (0) target = $region33
  $region32: #{bilstm_forward.1} parent=0 // pred_region
    _
  $region33: #{bilstm_forward.1} parent=0 // pred_fallthru
    _
  // Predicated region
  $region34: #{bilstm_forward.1} parent=0 // pred_check
    _
  $region35: #{bilstm_forward.1} parent=0 // pred_check_branch
    %31 = sbr.rel (0) target = $region37
  $region36: #{bilstm_forward.1} parent=0 // pred_region
    _
  $region37: #{bilstm_forward.1} parent=0 // pred_fallthru
    _
  %v33 = vlaneseq
  %v34 = vand.u32 %v33, 127
  %v35 = vadd.s32 %v34, 128
  %vm36 = vcmp.lt.s32.totalorder %v34, 0
  %v37 = vsub.s32 0, %v34
  %v38 = vsel %vm36, %v37, %v34
  %v39 = vshrl.u32 %v38, 6
  %v40 = vand.u32 %v38, 63
  %v41 = vsub.s32 0, %v40
  %v42 = vsel %vm36, %v41, %v40
  %vm43 = vcmp.lt.s32.totalorder %v35, 0
  %v44 = vsub.s32 0, %v35
  %v45 = vsel %vm43, %v44, %v35
  %v46 = vshrl.u32 %v45, 6
  %v47 = vand.u32 %v45, 63
  %v48 = vsub.s32 0, %v47
  %v49 = vsel %vm43, %v48, %v47
  %vm50 = vcmp.ne.s32.totalorder %v42, 0
  %vm51 = vcmp.ne.s32.totalorder %v49, 0
  %vm52 = vcmp.lt.s32.totalorder %v42, 0
  %vm53 = vcmp.lt.s32.totalorder %v49, 0
  %vm54 = vmand %vm52, %vm50
  %vm55 = vmand %vm53, %vm51
  %v56 = vadd.s32 %v42, 64
  %v57 = vadd.s32 %v49, 64
  %v58 = vsel %vm54, %v56, %v42
  %v59 = vsel %vm55, %v57, %v49
  %vm60 = vcmp.lt.s32.totalorder %v58, 32
  %vm61 = vcmp.lt.s32.totalorder %v59, 32
  %v62 = vld [vmem:[%s0] sm:$0xf]
  %v63 = vld [vmem:[%s0 + $0x4] sm:$0xf]
  %v64 = vld [vmem:[%s0 + $0x8] sm:$0xf]
  %v65 = vld [vmem:[%s0 + $0xc] sm:$0xf]
  %v66 = vld [vmem:[%s0 + $0x10] sm:$0xf]
  %v67 = vld [vmem:[%s0 + $0x14] sm:$0xf]
  %v68 = vld [vmem:[%s0 + $0x18] sm:$0xf]
  %v69 = vld [vmem:[%s0 + $0x1c] sm:$0xf]
  %v70 = vld [vmem:[%s1] sm:$0xff]
  %v71 = vld [vmem:[%s1 + $0x8] sm:$0xff]
  %v72 = vld [vmem:[%s1 + $0x10] sm:$0xff]
  %v73 = vld [vmem:[%s1 + $0x18] sm:$0xff]
  %v74 = vld [vmem:[%s3] sm:$0x3]
  %v76 = vperm.slane %v74, 0
  %v77 = vperm.slane %v74, 1
  %v88 = vunpack.c.l.b16 %v62
  %v89 = vunpack.c.l.b16 %v63
  %v90 = vunpack.c.l.b16 %v64
  %v91 = vunpack.c.l.b16 %v65
  %v92 = vunpack.c.l.b16 %v66
  %v93 = vunpack.c.l.b16 %v67
  %v94 = vunpack.c.l.b16 %v68
  %v95 = vunpack.c.l.b16 %v69
  %v96 = vpack.c.b16 %v89, %v88
  %v97 = vpack.c.b16 %v91, %v90
  %v98 = vpack.c.b16 %v93, %v92
  %v99 = vpack.c.b16 %v95, %v94
  %v104 = vunpack.c.l.b16 %v70
  %v105 = vunpack.c.h.b16 %v70
  %v106 = vunpack.c.l.b16 %v71
  %v107 = vunpack.c.h.b16 %v71
  %v108 = vunpack.c.l.b16 %v72
  %v109 = vunpack.c.h.b16 %v72
  %v110 = vunpack.c.l.b16 %v73
  %v111 = vunpack.c.h.b16 %v73
  %v112 = vpack.c.b16 %v106, %v104
  %v113 = vpack.c.b16 %v107, %v105
  %v114 = vpack.c.b16 %v110, %v108
  %v115 = vpack.c.b16 %v111, %v109
  %vm120 = vcmask 261120
  %v122 = vsel %vm120, %v96, 0
  %v125 = vsel %vm120, %v97, 0
  %v128 = vsel %vm120, %v98, 0
  %v131 = vsel %vm120, %v99, 0
  %133 = vmatpush.bf16.msra.mxu0 0
  %134 = vmatpush.bf16.msra.mxu0 0
  %135 = vmatpush.bf16.msra.mxu0 0
  %136 = vmatpush.bf16.msra.mxu0 0
  %137 = vmatpush.bf16.msra.mxu0 0
  %138 = vmatpush.bf16.msra.mxu0 0
  %139 = vmatpush.bf16.msra.mxu0 %v114
  %140 = vmatpush.bf16.msra.mxu0 %v112
  %141 = vmatmul.bf16.gmra.mxu0 %v122
  %v142 = vpop.f32.mrf.mxu0
  %v143 = vadd.f32 %v76, %v142
  %v144 = vpop.f32.mrf.mxu0
  %v145 = vadd.f32 %v76, %v144
  %146 = vmatmul.bf16.gmra.mxu0 %v125
  %v147 = vpop.f32.mrf.mxu0
  %v148 = vadd.f32 %v76, %v147
  %v149 = vpop.f32.mrf.mxu0
  %v150 = vadd.f32 %v76, %v149
  %151 = vmatmul.bf16.gmra.mxu0 %v128
  %v152 = vpop.f32.mrf.mxu0
  %v153 = vadd.f32 %v76, %v152
  %v154 = vpop.f32.mrf.mxu0
  %v155 = vadd.f32 %v76, %v154
  %156 = vmatmul.bf16.gmra.mxu0 %v131
  %v157 = vpop.f32.mrf.mxu0
  %v158 = vadd.f32 %v76, %v157
  %v159 = vpop.f32.mrf.mxu0
  %v160 = vadd.f32 %v76, %v159
  %161 = vdwg.mxu0
  %162 = vmatpush.bf16.msra.mxu0 0
  %163 = vmatpush.bf16.msra.mxu0 0
  %164 = vmatpush.bf16.msra.mxu0 0
  %165 = vmatpush.bf16.msra.mxu0 0
  %166 = vmatpush.bf16.msra.mxu0 0
  %167 = vmatpush.bf16.msra.mxu0 0
  %168 = vmatpush.bf16.msra.mxu0 %v115
  %169 = vmatpush.bf16.msra.mxu0 %v113
  %170 = vmatmul.bf16.gmra.mxu0 %v122
  %v171 = vpop.f32.mrf.mxu0
  %v172 = vadd.f32 %v77, %v171
  %v173 = vpop.f32.mrf.mxu0
  %v174 = vadd.f32 %v77, %v173
  %175 = vmatmul.bf16.gmra.mxu0 %v125
  %v176 = vpop.f32.mrf.mxu0
  %v177 = vadd.f32 %v77, %v176
  %v178 = vpop.f32.mrf.mxu0
  %v179 = vadd.f32 %v77, %v178
  %180 = vmatmul.bf16.gmra.mxu0 %v128
  %v181 = vpop.f32.mrf.mxu0
  %v182 = vadd.f32 %v77, %v181
  %v183 = vpop.f32.mrf.mxu0
  %v184 = vadd.f32 %v77, %v183
  %185 = vmatmul.bf16.gmra.mxu0 %v131
  %v186 = vpop.f32.mrf.mxu0
  %v187 = vadd.f32 %v77, %v186
  %v188 = vpop.f32.mrf.mxu0
  %v189 = vadd.f32 %v77, %v188
  %190 = vdwg.mxu0
  %191 = vst [vmem:[#allocation2] sm:$0xff] %v143
  %192 = vst [vmem:[#allocation2 + $0x8] sm:$0xff] %v172
  %193 = vst [vmem:[#allocation2 + $0x10] sm:$0xff] %v145
  %194 = vst [vmem:[#allocation2 + $0x18] sm:$0xff] %v174
  %195 = vst [vmem:[#allocation2 + $0x20] sm:$0xff] %v148
  %196 = vst [vmem:[#allocation2 + $0x28] sm:$0xff] %v177
  %197 = vst [vmem:[#allocation2 + $0x30] sm:$0xff] %v150
  %198 = vst [vmem:[#allocation2 + $0x38] sm:$0xff] %v179
  %199 = vst [vmem:[#allocation2 + $0x40] sm:$0xff] %v153
  %200 = vst [vmem:[#allocation2 + $0x48] sm:$0xff] %v182
  %201 = vst [vmem:[#allocation2 + $0x50] sm:$0xff] %v155
  %202 = vst [vmem:[#allocation2 + $0x58] sm:$0xff] %v184
  %203 = vst [vmem:[#allocation2 + $0x60] sm:$0xff] %v158
  %204 = vst [vmem:[#allocation2 + $0x68] sm:$0xff] %v187
  %205 = vst [vmem:[#allocation2 + $0x70] sm:$0xff] %v160
  %206 = vst [vmem:[#allocation2 + $0x78] sm:$0xff] %v189
  %v207 = vld [vmem:[%s2] sm:$0xff]
  %v208 = vld [vmem:[%s2 + $0x8] sm:$0xff]
  %v209 = vld [vmem:[%s2 + $0x10] sm:$0xff]
  %v210 = vld [vmem:[%s2 + $0x18] sm:$0xff]
  %v211 = vld [vmem:[%s2 + $0x20] sm:$0xff]
  %v212 = vld [vmem:[%s2 + $0x28] sm:$0xff]
  %v213 = vld [vmem:[%s2 + $0x30] sm:$0xff]
  %v214 = vld [vmem:[%s2 + $0x38] sm:$0xff]
  %s215 = smul.u32 0, 2
  %s216 = smul.addr %s215, 8
  %s217 = scalar_lea.vmem [#allocation2], %s216
  %v218 = vld [vmem:[%s217] sm:$0xff]
  %v219 = vld [vmem:[%s217 + $0x8] sm:$0xff]
  %s220 = smul.u32 7, 2
  %s221 = smul.addr %s220, 8
  %s222 = scalar_lea.vmem [#allocation2], %s221
  %v223 = vld [vmem:[%s222] sm:$0xff]
  %v224 = vld [vmem:[%s222 + $0x8] sm:$0xff]
  %v225 = vsel %vm60, %v218, %v223
  %v226 = vsel %vm61, %v219, %v224
  %v235 = vunpack.c.l.b16 %v207
  %v236 = vunpack.c.h.b16 %v207
  %v237 = vunpack.c.l.b16 %v208
  %v238 = vunpack.c.h.b16 %v208
  %v239 = vunpack.c.l.b16 %v209
  %v240 = vunpack.c.h.b16 %v209
  %v241 = vunpack.c.l.b16 %v210
  %v242 = vunpack.c.h.b16 %v210
  %v243 = vunpack.c.l.b16 %v211
  %v244 = vunpack.c.h.b16 %v211
  %v245 = vunpack.c.l.b16 %v212
  %v246 = vunpack.c.h.b16 %v212
  %v247 = vunpack.c.l.b16 %v213
  %v248 = vunpack.c.h.b16 %v213
  %v249 = vunpack.c.l.b16 %v214
  %v250 = vunpack.c.h.b16 %v214
  %v251 = vpack.c.b16 %v237, %v235
  %v252 = vpack.c.b16 %v238, %v236
  %v253 = vpack.c.b16 %v241, %v239
  %v254 = vpack.c.b16 %v242, %v240
  %v255 = vpack.c.b16 %v245, %v243
  %v256 = vpack.c.b16 %v246, %v244
  %v257 = vpack.c.b16 %v249, %v247
  %v258 = vpack.c.b16 %v250, %v248
  %vm267 = vcmask 523264
  %v269 = vsel %vm267, 0, 0
  %271 = vmatpush.bf16.msra.mxu0 0
  %272 = vmatpush.bf16.msra.mxu0 0
  %273 = vmatpush.bf16.msra.mxu0 0
  %274 = vmatpush.bf16.msra.mxu0 0
  %275 = vmatpush.bf16.msra.mxu0 %v257
  %276 = vmatpush.bf16.msra.mxu0 %v255
  %277 = vmatpush.bf16.msra.mxu0 %v253
  %278 = vmatpush.bf16.msra.mxu0 %v251
  %279 = vmatmul.bf16.gmra.mxu0 %v269
  %v280 = vpop.f32.mrf.mxu0
  %v281 = vadd.f32 %v225, %v280
  %v282 = vpop.f32.mrf.mxu0
  %283 = vdwg.mxu0
  %284 = vmatpush.bf16.msra.mxu0 0
  %285 = vmatpush.bf16.msra.mxu0 0
  %286 = vmatpush.bf16.msra.mxu0 0
  %287 = vmatpush.bf16.msra.mxu0 0
  %288 = vmatpush.bf16.msra.mxu0 %v258
  %289 = vmatpush.bf16.msra.mxu0 %v256
  %290 = vmatpush.bf16.msra.mxu0 %v254
  %291 = vmatpush.bf16.msra.mxu0 %v252
  %292 = vmatmul.bf16.gmra.mxu0 %v269
  %v293 = vpop.f32.mrf.mxu0
  %v294 = vadd.f32 %v226, %v293
  %v295 = vpop.f32.mrf.mxu0
  %296 = vdwg.mxu0
  %v297 = vxor.u32 %v281, 2147483648
  %v298 = vmul.f32 %v297, 1.442695
  %v299 = vpow.pop %v298
  %v300 = vadd.f32 %v299, 1.0
  %v301 = vrcp.pop %v300
  %v302 = vmul.f32 %v300, %v301
  %v303 = vsub.f32 1.0, %v302
  %v304 = vmul.f32 %v301, %v303
  %v305 = vadd.f32 %v301, %v304
  %vm306 = vweird.f32 %v300
  %vm307 = vweird.f32 %v301
  %vm308 = vmor %vm306, %vm307
  %v309 = vsel %vm308, %v301, %v305
  %v310 = vand.u32 2147483647, %v300
  %vm311 = vcmp.eq.f32.partialorder %v310, 8.507059e+37
  %v312 = vand.u32 %v300, 2147483648
  %v313 = vor.u32 1.1754944e-38, %v312
  %v314 = vsel %vm311, %v313, %v309
  %v315 = vmul.f32 1.0, %v314
  %v316 = vtanh.pop %v294
  %v317 = vxor.u32 %v294, 2147483648
  %v318 = vmul.f32 %v317, 1.442695
  %v319 = vpow.pop %v318
  %v320 = vadd.f32 %v319, 1.0
  %v321 = vrcp.pop %v320
  %v322 = vmul.f32 %v320, %v321
  %v323 = vsub.f32 1.0, %v322
  %v324 = vmul.f32 %v321, %v323
  %v325 = vadd.f32 %v321, %v324
  %vm326 = vweird.f32 %v320
  %vm327 = vweird.f32 %v321
  %vm328 = vmor %vm326, %vm327
  %v329 = vsel %vm328, %v321, %v325
  %v330 = vand.u32 2147483647, %v320
  %vm331 = vcmp.eq.f32.partialorder %v330, 8.507059e+37
  %v332 = vand.u32 %v320, 2147483648
  %v333 = vor.u32 1.1754944e-38, %v332
  %v334 = vsel %vm331, %v333, %v329
  %v335 = vmul.f32 1.0, %v334
  %v336 = vmul.f32 %v315, 0.0
  %v337 = vmul.f32 %v315, %v316
  %339 = vrot.lane.b32.xlu0 %v337, 64
  %v340 = vpop.permute.xlu0 %339
  %v342 = vadd.f32 %v336, %v340
  %v343 = vtanh.pop %v342
  %v344 = vmul.f32 %v335, %v343
  %346 = vrot.lane.b32.xlu0 %v344, 64
  %v347 = vpop.permute.xlu0 %346
  %349 = vst.msk [vmem:[#allocation3] sm:$0xff] %vm120, %v347
  %s350 = scalar_lea.vmem [#allocation3], 56
  %vm351 = vcmask 523520
  %352 = vst.msk [vmem:[%s350] sm:$0xff] %vm351, %v347
  %v353 = vpack.c.bf16 %v344, %v344
  %s354 = smul.u32 1, 2
  %s355 = smul.addr %s354, 8
  %s356 = scalar_lea.vmem [#allocation2], %s355
  %v357 = vld [vmem:[%s356] sm:$0xff]
  %v358 = vld [vmem:[%s356 + $0x8] sm:$0xff]
  %s359 = smul.u32 6, 2
  %s360 = smul.addr %s359, 8
  %s361 = scalar_lea.vmem [#allocation2], %s360
  %v362 = vld [vmem:[%s361] sm:$0xff]
  %v363 = vld [vmem:[%s361 + $0x8] sm:$0xff]
  %v364 = vsel %vm60, %v357, %v362
  %v365 = vsel %vm61, %v358, %v363
  %367 = vrot.lane.b32.xlu0 %v353, 64
  %v368 = vpop.permute.xlu0 %367
  %v370 = vsel %vm267, %v368, 0
  %372 = vmatpush.bf16.msra.mxu0 0
  %373 = vmatpush.bf16.msra.mxu0 0
  %374 = vmatpush.bf16.msra.mxu0 0
  %375 = vmatpush.bf16.msra.mxu0 0
  %376 = vmatpush.bf16.msra.mxu0 %v257
  %377 = vmatpush.bf16.msra.mxu0 %v255
  %378 = vmatpush.bf16.msra.mxu0 %v253
  %379 = vmatpush.bf16.msra.mxu0 %v251
  %380 = vmatmul.bf16.gmra.mxu0 %v370
  %v381 = vpop.f32.mrf.mxu0
  %v382 = vadd.f32 %v364, %v381
  %v383 = vpop.f32.mrf.mxu0
  %384 = vdwg.mxu0
  %385 = vmatpush.bf16.msra.mxu0 0
  %386 = vmatpush.bf16.msra.mxu0 0
  %387 = vmatpush.bf16.msra.mxu0 0
  %388 = vmatpush.bf16.msra.mxu0 0
  %389 = vmatpush.bf16.msra.mxu0 %v258
  %390 = vmatpush.bf16.msra.mxu0 %v256
  %391 = vmatpush.bf16.msra.mxu0 %v254
  %392 = vmatpush.bf16.msra.mxu0 %v252
  %393 = vmatmul.bf16.gmra.mxu0 %v370
  %v394 = vpop.f32.mrf.mxu0
  %v395 = vadd.f32 %v365, %v394
  %v396 = vpop.f32.mrf.mxu0
  %397 = vdwg.mxu0
  %v398 = vxor.u32 %v382, 2147483648
  %v399 = vmul.f32 %v398, 1.442695
  %v400 = vpow.pop %v399
  %v401 = vadd.f32 %v400, 1.0
  %v402 = vrcp.pop %v401
  %v403 = vmul.f32 %v401, %v402
  %v404 = vsub.f32 1.0, %v403
  %v405 = vmul.f32 %v402, %v404
  %v406 = vadd.f32 %v402, %v405
  %vm407 = vweird.f32 %v401
  %vm408 = vweird.f32 %v402
  %vm409 = vmor %vm407, %vm408
  %v410 = vsel %vm409, %v402, %v406
  %v411 = vand.u32 2147483647, %v401
  %vm412 = vcmp.eq.f32.partialorder %v411, 8.507059e+37
  %v413 = vand.u32 %v401, 2147483648
  %v414 = vor.u32 1.1754944e-38, %v413
  %v415 = vsel %vm412, %v414, %v410
  %v416 = vmul.f32 1.0, %v415
  %v417 = vtanh.pop %v395
  %v418 = vxor.u32 %v395, 2147483648
  %v419 = vmul.f32 %v418, 1.442695
  %v420 = vpow.pop %v419
  %v421 = vadd.f32 %v420, 1.0
  %v422 = vrcp.pop %v421
  %v423 = vmul.f32 %v421, %v422
  %v424 = vsub.f32 1.0, %v423
  %v425 = vmul.f32 %v422, %v424
  %v426 = vadd.f32 %v422, %v425
  %vm427 = vweird.f32 %v421
  %vm428 = vweird.f32 %v422
  %vm429 = vmor %vm427, %vm428
  %v430 = vsel %vm429, %v422, %v426
  %v431 = vand.u32 2147483647, %v421
  %vm432 = vcmp.eq.f32.partialorder %v431, 8.507059e+37
  %v433 = vand.u32 %v421, 2147483648
  %v434 = vor.u32 1.1754944e-38, %v433
  %v435 = vsel %vm432, %v434, %v430
  %v436 = vmul.f32 1.0, %v435
  %v437 = vmul.f32 %v416, %v342
  %v438 = vmul.f32 %v416, %v417
  %440 = vrot.lane.b32.xlu0 %v438, 64
  %v441 = vpop.permute.xlu0 %440
  %v443 = vadd.f32 %v437, %v441
  %v444 = vtanh.pop %v443
  %v445 = vmul.f32 %v436, %v444
  %447 = vrot.lane.b32.xlu0 %v445, 64
  %v448 = vpop.permute.xlu0 %447
  %s450 = scalar_lea.vmem [#allocation3], 8
  %451 = vst.msk [vmem:[%s450] sm:$0xff] %vm120, %v448
  %s452 = scalar_lea.vmem [#allocation3], 48
  %453 = vst.msk [vmem:[%s452] sm:$0xff] %vm351, %v448
  %v454 = vpack.c.bf16 %v445, %v445
  %s455 = smul.u32 2, 2
  %s456 = smul.addr %s455, 8
  %s457 = scalar_lea.vmem [#allocation2], %s456
  %v458 = vld [vmem:[%s457] sm:$0xff]
  %v459 = vld [vmem:[%s457 + $0x8] sm:$0xff]
  %s460 = smul.u32 5, 2
  %s461 = smul.addr %s460, 8
  %s462 = scalar_lea.vmem [#allocation2], %s461
  %v463 = vld [vmem:[%s462] sm:$0xff]
  %v464 = vld [vmem:[%s462 + $0x8] sm:$0xff]
  %v465 = vsel %vm60, %v458, %v463
  %v466 = vsel %vm61, %v459, %v464
  %468 = vrot.lane.b32.xlu0 %v454, 64
  %v469 = vpop.permute.xlu0 %468
  %v471 = vsel %vm267, %v469, 0
  %473 = vmatpush.bf16.msra.mxu0 0
  %474 = vmatpush.bf16.msra.mxu0 0
  %475 = vmatpush.bf16.msra.mxu0 0
  %476 = vmatpush.bf16.msra.mxu0 0
  %477 = vmatpush.bf16.msra.mxu0 %v257
  %478 = vmatpush.bf16.msra.mxu0 %v255
  %479 = vmatpush.bf16.msra.mxu0 %v253
  %480 = vmatpush.bf16.msra.mxu0 %v251
  %481 = vmatmul.bf16.gmra.mxu0 %v471
  %v482 = vpop.f32.mrf.mxu0
  %v483 = vadd.f32 %v465, %v482
  %v484 = vpop.f32.mrf.mxu0
  %485 = vdwg.mxu0
  %486 = vmatpush.bf16.msra.mxu0 0
  %487 = vmatpush.bf16.msra.mxu0 0
  %488 = vmatpush.bf16.msra.mxu0 0
  %489 = vmatpush.bf16.msra.mxu0 0
  %490 = vmatpush.bf16.msra.mxu0 %v258
  %491 = vmatpush.bf16.msra.mxu0 %v256
  %492 = vmatpush.bf16.msra.mxu0 %v254
  %493 = vmatpush.bf16.msra.mxu0 %v252
  %494 = vmatmul.bf16.gmra.mxu0 %v471
  %v495 = vpop.f32.mrf.mxu0
  %v496 = vadd.f32 %v466, %v495
  %v497 = vpop.f32.mrf.mxu0
  %498 = vdwg.mxu0
  %v499 = vxor.u32 %v483, 2147483648
  %v500 = vmul.f32 %v499, 1.442695
  %v501 = vpow.pop %v500
  %v502 = vadd.f32 %v501, 1.0
  %v503 = vrcp.pop %v502
  %v504 = vmul.f32 %v502, %v503
  %v505 = vsub.f32 1.0, %v504
  %v506 = vmul.f32 %v503, %v505
  %v507 = vadd.f32 %v503, %v506
  %vm508 = vweird.f32 %v502
  %vm509 = vweird.f32 %v503
  %vm510 = vmor %vm508, %vm509
  %v511 = vsel %vm510, %v503, %v507
  %v512 = vand.u32 2147483647, %v502
  %vm513 = vcmp.eq.f32.partialorder %v512, 8.507059e+37
  %v514 = vand.u32 %v502, 2147483648
  %v515 = vor.u32 1.1754944e-38, %v514
  %v516 = vsel %vm513, %v515, %v511
  %v517 = vmul.f32 1.0, %v516
  %v518 = vtanh.pop %v496
  %v519 = vxor.u32 %v496, 2147483648
  %v520 = vmul.f32 %v519, 1.442695
  %v521 = vpow.pop %v520
  %v522 = vadd.f32 %v521, 1.0
  %v523 = vrcp.pop %v522
  %v524 = vmul.f32 %v522, %v523
  %v525 = vsub.f32 1.0, %v524
  %v526 = vmul.f32 %v523, %v525
  %v527 = vadd.f32 %v523, %v526
  %vm528 = vweird.f32 %v522
  %vm529 = vweird.f32 %v523
  %vm530 = vmor %vm528, %vm529
  %v531 = vsel %vm530, %v523, %v527
  %v532 = vand.u32 2147483647, %v522
  %vm533 = vcmp.eq.f32.partialorder %v532, 8.507059e+37
  %v534 = vand.u32 %v522, 2147483648
  %v535 = vor.u32 1.1754944e-38, %v534
  %v536 = vsel %vm533, %v535, %v531
  %v537 = vmul.f32 1.0, %v536
  %v538 = vmul.f32 %v517, %v443
  %v539 = vmul.f32 %v517, %v518
  %541 = vrot.lane.b32.xlu0 %v539, 64
  %v542 = vpop.permute.xlu0 %541
  %v544 = vadd.f32 %v538, %v542
  %v545 = vtanh.pop %v544
  %v546 = vmul.f32 %v537, %v545
  %548 = vrot.lane.b32.xlu0 %v546, 64
  %v549 = vpop.permute.xlu0 %548
  %s551 = scalar_lea.vmem [#allocation3], 16
  %552 = vst.msk [vmem:[%s551] sm:$0xff] %vm120, %v549
  %s553 = scalar_lea.vmem [#allocation3], 40
  %554 = vst.msk [vmem:[%s553] sm:$0xff] %vm351, %v549
  %v555 = vpack.c.bf16 %v546, %v546
  %s556 = smul.u32 3, 2
  %s557 = smul.addr %s556, 8
  %s558 = scalar_lea.vmem [#allocation2], %s557
  %v559 = vld [vmem:[%s558] sm:$0xff]
  %v560 = vld [vmem:[%s558 + $0x8] sm:$0xff]
  %s561 = smul.u32 4, 2
  %s562 = smul.addr %s561, 8
  %s563 = scalar_lea.vmem [#allocation2], %s562
  %v564 = vld [vmem:[%s563] sm:$0xff]
  %v565 = vld [vmem:[%s563 + $0x8] sm:$0xff]
  %v566 = vsel %vm60, %v559, %v564
  %v567 = vsel %vm61, %v560, %v565
  %569 = vrot.lane.b32.xlu0 %v555, 64
  %v570 = vpop.permute.xlu0 %569
  %v572 = vsel %vm267, %v570, 0
  %574 = vmatpush.bf16.msra.mxu0 0
  %575 = vmatpush.bf16.msra.mxu0 0
  %576 = vmatpush.bf16.msra.mxu0 0
  %577 = vmatpush.bf16.msra.mxu0 0
  %578 = vmatpush.bf16.msra.mxu0 %v257
  %579 = vmatpush.bf16.msra.mxu0 %v255
  %580 = vmatpush.bf16.msra.mxu0 %v253
  %581 = vmatpush.bf16.msra.mxu0 %v251
  %582 = vmatmul.bf16.gmra.mxu0 %v572
  %v583 = vpop.f32.mrf.mxu0
  %v584 = vadd.f32 %v566, %v583
  %v585 = vpop.f32.mrf.mxu0
  %586 = vdwg.mxu0
  %587 = vmatpush.bf16.msra.mxu0 0
  %588 = vmatpush.bf16.msra.mxu0 0
  %589 = vmatpush.bf16.msra.mxu0 0
  %590 = vmatpush.bf16.msra.mxu0 0
  %591 = vmatpush.bf16.msra.mxu0 %v258
  %592 = vmatpush.bf16.msra.mxu0 %v256
  %593 = vmatpush.bf16.msra.mxu0 %v254
  %594 = vmatpush.bf16.msra.mxu0 %v252
  %595 = vmatmul.bf16.gmra.mxu0 %v572
  %v596 = vpop.f32.mrf.mxu0
  %v597 = vadd.f32 %v567, %v596
  %v598 = vpop.f32.mrf.mxu0
  %599 = vdwg.mxu0
  %v600 = vxor.u32 %v584, 2147483648
  %v601 = vmul.f32 %v600, 1.442695
  %v602 = vpow.pop %v601
  %v603 = vadd.f32 %v602, 1.0
  %v604 = vrcp.pop %v603
  %v605 = vmul.f32 %v603, %v604
  %v606 = vsub.f32 1.0, %v605
  %v607 = vmul.f32 %v604, %v606
  %v608 = vadd.f32 %v604, %v607
  %vm609 = vweird.f32 %v603
  %vm610 = vweird.f32 %v604
  %vm611 = vmor %vm609, %vm610
  %v612 = vsel %vm611, %v604, %v608
  %v613 = vand.u32 2147483647, %v603
  %vm614 = vcmp.eq.f32.partialorder %v613, 8.507059e+37
  %v615 = vand.u32 %v603, 2147483648
  %v616 = vor.u32 1.1754944e-38, %v615
  %v617 = vsel %vm614, %v616, %v612
  %v618 = vmul.f32 1.0, %v617
  %v619 = vtanh.pop %v597
  %v620 = vxor.u32 %v597, 2147483648
  %v621 = vmul.f32 %v620, 1.442695
  %v622 = vpow.pop %v621
  %v623 = vadd.f32 %v622, 1.0
  %v624 = vrcp.pop %v623
  %v625 = vmul.f32 %v623, %v624
  %v626 = vsub.f32 1.0, %v625
  %v627 = vmul.f32 %v624, %v626
  %v628 = vadd.f32 %v624, %v627
  %vm629 = vweird.f32 %v623
  %vm630 = vweird.f32 %v624
  %vm631 = vmor %vm629, %vm630
  %v632 = vsel %vm631, %v624, %v628
  %v633 = vand.u32 2147483647, %v623
  %vm634 = vcmp.eq.f32.partialorder %v633, 8.507059e+37
  %v635 = vand.u32 %v623, 2147483648
  %v636 = vor.u32 1.1754944e-38, %v635
  %v637 = vsel %vm634, %v636, %v632
  %v638 = vmul.f32 1.0, %v637
  %v639 = vmul.f32 %v618, %v544
  %v640 = vmul.f32 %v618, %v619
  %642 = vrot.lane.b32.xlu0 %v640, 64
  %v643 = vpop.permute.xlu0 %642
  %v645 = vadd.f32 %v639, %v643
  %v646 = vtanh.pop %v645
  %v647 = vmul.f32 %v638, %v646
  %649 = vrot.lane.b32.xlu0 %v647, 64
  %v650 = vpop.permute.xlu0 %649
  %s652 = scalar_lea.vmem [#allocation3], 24
  %653 = vst.msk [vmem:[%s652] sm:$0xff] %vm120, %v650
  %s654 = scalar_lea.vmem [#allocation3], 32
  %655 = vst.msk [vmem:[%s654] sm:$0xff] %vm351, %v650
  %v656 = vpack.c.bf16 %v647, %v647
  %v657 = vld [vmem:[%s563] sm:$0xff]
  %v658 = vld [vmem:[%s563 + $0x8] sm:$0xff]
  %v659 = vld [vmem:[%s558] sm:$0xff]
  %v660 = vld [vmem:[%s558 + $0x8] sm:$0xff]
  %v661 = vsel %vm60, %v657, %v659
  %v662 = vsel %vm61, %v658, %v660
  %664 = vrot.lane.b32.xlu0 %v656, 64
  %v665 = vpop.permute.xlu0 %664
  %v667 = vsel %vm267, %v665, 0
  %669 = vmatpush.bf16.msra.mxu0 0
  %670 = vmatpush.bf16.msra.mxu0 0
  %671 = vmatpush.bf16.msra.mxu0 0
  %672 = vmatpush.bf16.msra.mxu0 0
  %673 = vmatpush.bf16.msra.mxu0 %v257
  %674 = vmatpush.bf16.msra.mxu0 %v255
  %675 = vmatpush.bf16.msra.mxu0 %v253
  %676 = vmatpush.bf16.msra.mxu0 %v251
  %677 = vmatmul.bf16.gmra.mxu0 %v667
  %v678 = vpop.f32.mrf.mxu0
  %v679 = vadd.f32 %v661, %v678
  %v680 = vpop.f32.mrf.mxu0
  %681 = vdwg.mxu0
  %682 = vmatpush.bf16.msra.mxu0 0
  %683 = vmatpush.bf16.msra.mxu0 0
  %684 = vmatpush.bf16.msra.mxu0 0
  %685 = vmatpush.bf16.msra.mxu0 0
  %686 = vmatpush.bf16.msra.mxu0 %v258
  %687 = vmatpush.bf16.msra.mxu0 %v256
  %688 = vmatpush.bf16.msra.mxu0 %v254
  %689 = vmatpush.bf16.msra.mxu0 %v252
  %690 = vmatmul.bf16.gmra.mxu0 %v667
  %v691 = vpop.f32.mrf.mxu0
  %v692 = vadd.f32 %v662, %v691
  %v693 = vpop.f32.mrf.mxu0
  %694 = vdwg.mxu0
  %v695 = vxor.u32 %v679, 2147483648
  %v696 = vmul.f32 %v695, 1.442695
  %v697 = vpow.pop %v696
  %v698 = vadd.f32 %v697, 1.0
  %v699 = vrcp.pop %v698
  %v700 = vmul.f32 %v698, %v699
  %v701 = vsub.f32 1.0, %v700
  %v702 = vmul.f32 %v699, %v701
  %v703 = vadd.f32 %v699, %v702
  %vm704 = vweird.f32 %v698
  %vm705 = vweird.f32 %v699
  %vm706 = vmor %vm704, %vm705
  %v707 = vsel %vm706, %v699, %v703
  %v708 = vand.u32 2147483647, %v698
  %vm709 = vcmp.eq.f32.partialorder %v708, 8.507059e+37
  %v710 = vand.u32 %v698, 2147483648
  %v711 = vor.u32 1.1754944e-38, %v710
  %v712 = vsel %vm709, %v711, %v707
  %v713 = vmul.f32 1.0, %v712
  %v714 = vtanh.pop %v692
  %v715 = vxor.u32 %v692, 2147483648
  %v716 = vmul.f32 %v715, 1.442695
  %v717 = vpow.pop %v716
  %v718 = vadd.f32 %v717, 1.0
  %v719 = vrcp.pop %v718
  %v720 = vmul.f32 %v718, %v719
  %v721 = vsub.f32 1.0, %v720
  %v722 = vmul.f32 %v719, %v721
  %v723 = vadd.f32 %v719, %v722
  %vm724 = vweird.f32 %v718
  %vm725 = vweird.f32 %v719
  %vm726 = vmor %vm724, %vm725
  %v727 = vsel %vm726, %v719, %v723
  %v728 = vand.u32 2147483647, %v718
  %vm729 = vcmp.eq.f32.partialorder %v728, 8.507059e+37
  %v730 = vand.u32 %v718, 2147483648
  %v731 = vor.u32 1.1754944e-38, %v730
  %v732 = vsel %vm729, %v731, %v727
  %v733 = vmul.f32 1.0, %v732
  %v734 = vmul.f32 %v713, %v645
  %v735 = vmul.f32 %v713, %v714
  %737 = vrot.lane.b32.xlu0 %v735, 64
  %v738 = vpop.permute.xlu0 %737
  %v740 = vadd.f32 %v734, %v738
  %v741 = vtanh.pop %v740
  %v742 = vmul.f32 %v733, %v741
  %744 = vrot.lane.b32.xlu0 %v742, 64
  %v745 = vpop.permute.xlu0 %744
  %747 = vst.msk [vmem:[%s654] sm:$0xff] %vm120, %v745
  %748 = vst.msk [vmem:[%s652] sm:$0xff] %vm351, %v745
  %v749 = vpack.c.bf16 %v742, %v742
  %v750 = vld [vmem:[%s462] sm:$0xff]
  %v751 = vld [vmem:[%s462 + $0x8] sm:$0xff]
  %v752 = vld [vmem:[%s457] sm:$0xff]
  %v753 = vld [vmem:[%s457 + $0x8] sm:$0xff]
  %v754 = vsel %vm60, %v750, %v752
  %v755 = vsel %vm61, %v751, %v753
  %757 = vrot.lane.b32.xlu0 %v749, 64
  %v758 = vpop.permute.xlu0 %757
  %v760 = vsel %vm267, %v758, 0
  %762 = vmatpush.bf16.msra.mxu0 0
  %763 = vmatpush.bf16.msra.mxu0 0
  %764 = vmatpush.bf16.msra.mxu0 0
  %765 = vmatpush.bf16.msra.mxu0 0
  %766 = vmatpush.bf16.msra.mxu0 %v257
  %767 = vmatpush.bf16.msra.mxu0 %v255
  %768 = vmatpush.bf16.msra.mxu0 %v253
  %769 = vmatpush.bf16.msra.mxu0 %v251
  %770 = vmatmul.bf16.gmra.mxu0 %v760
  %v771 = vpop.f32.mrf.mxu0
  %v772 = vadd.f32 %v754, %v771
  %v773 = vpop.f32.mrf.mxu0
  %774 = vdwg.mxu0
  %775 = vmatpush.bf16.msra.mxu0 0
  %776 = vmatpush.bf16.msra.mxu0 0
  %777 = vmatpush.bf16.msra.mxu0 0
  %778 = vmatpush.bf16.msra.mxu0 0
  %779 = vmatpush.bf16.msra.mxu0 %v258
  %780 = vmatpush.bf16.msra.mxu0 %v256
  %781 = vmatpush.bf16.msra.mxu0 %v254
  %782 = vmatpush.bf16.msra.mxu0 %v252
  %783 = vmatmul.bf16.gmra.mxu0 %v760
  %v784 = vpop.f32.mrf.mxu0
  %v785 = vadd.f32 %v755, %v784
  %v786 = vpop.f32.mrf.mxu0
  %787 = vdwg.mxu0
  %v788 = vxor.u32 %v772, 2147483648
  %v789 = vmul.f32 %v788, 1.442695
  %v790 = vpow.pop %v789
  %v791 = vadd.f32 %v790, 1.0
  %v792 = vrcp.pop %v791
  %v793 = vmul.f32 %v791, %v792
  %v794 = vsub.f32 1.0, %v793
  %v795 = vmul.f32 %v792, %v794
  %v796 = vadd.f32 %v792, %v795
  %vm797 = vweird.f32 %v791
  %vm798 = vweird.f32 %v792
  %vm799 = vmor %vm797, %vm798
  %v800 = vsel %vm799, %v792, %v796
  %v801 = vand.u32 2147483647, %v791
  %vm802 = vcmp.eq.f32.partialorder %v801, 8.507059e+37
  %v803 = vand.u32 %v791, 2147483648
  %v804 = vor.u32 1.1754944e-38, %v803
  %v805 = vsel %vm802, %v804, %v800
  %v806 = vmul.f32 1.0, %v805
  %v807 = vtanh.pop %v785
  %v808 = vxor.u32 %v785, 2147483648
  %v809 = vmul.f32 %v808, 1.442695
  %v810 = vpow.pop %v809
  %v811 = vadd.f32 %v810, 1.0
  %v812 = vrcp.pop %v811
  %v813 = vmul.f32 %v811, %v812
  %v814 = vsub.f32 1.0, %v813
  %v815 = vmul.f32 %v812, %v814
  %v816 = vadd.f32 %v812, %v815
  %vm817 = vweird.f32 %v811
  %vm818 = vweird.f32 %v812
  %vm819 = vmor %vm817, %vm818
  %v820 = vsel %vm819, %v812, %v816
  %v821 = vand.u32 2147483647, %v811
  %vm822 = vcmp.eq.f32.partialorder %v821, 8.507059e+37
  %v823 = vand.u32 %v811, 2147483648
  %v824 = vor.u32 1.1754944e-38, %v823
  %v825 = vsel %vm822, %v824, %v820
  %v826 = vmul.f32 1.0, %v825
  %v827 = vmul.f32 %v806, %v740
  %v828 = vmul.f32 %v806, %v807
  %830 = vrot.lane.b32.xlu0 %v828, 64
  %v831 = vpop.permute.xlu0 %830
  %v833 = vadd.f32 %v827, %v831
  %v834 = vtanh.pop %v833
  %v835 = vmul.f32 %v826, %v834
  %837 = vrot.lane.b32.xlu0 %v835, 64
  %v838 = vpop.permute.xlu0 %837
  %840 = vst.msk [vmem:[%s553] sm:$0xff] %vm120, %v838
  %841 = vst.msk [vmem:[%s551] sm:$0xff] %vm351, %v838
  %v842 = vpack.c.bf16 %v835, %v835
  %v843 = vld [vmem:[%s361] sm:$0xff]
  %v844 = vld [vmem:[%s361 + $0x8] sm:$0xff]
  %v845 = vld [vmem:[%s356] sm:$0xff]
  %v846 = vld [vmem:[%s356 + $0x8] sm:$0xff]
  %v847 = vsel %vm60, %v843, %v845
  %v848 = vsel %vm61, %v844, %v846
  %850 = vrot.lane.b32.xlu0 %v842, 64
  %v851 = vpop.permute.xlu0 %850
  %v853 = vsel %vm267, %v851, 0
  %855 = vmatpush.bf16.msra.mxu0 0
  %856 = vmatpush.bf16.msra.mxu0 0
  %857 = vmatpush.bf16.msra.mxu0 0
  %858 = vmatpush.bf16.msra.mxu0 0
  %859 = vmatpush.bf16.msra.mxu0 %v257
  %860 = vmatpush.bf16.msra.mxu0 %v255
  %861 = vmatpush.bf16.msra.mxu0 %v253
  %862 = vmatpush.bf16.msra.mxu0 %v251
  %863 = vmatmul.bf16.gmra.mxu0 %v853
  %v864 = vpop.f32.mrf.mxu0
  %v865 = vadd.f32 %v847, %v864
  %v866 = vpop.f32.mrf.mxu0
  %867 = vdwg.mxu0
  %868 = vmatpush.bf16.msra.mxu0 0
  %869 = vmatpush.bf16.msra.mxu0 0
  %870 = vmatpush.bf16.msra.mxu0 0
  %871 = vmatpush.bf16.msra.mxu0 0
  %872 = vmatpush.bf16.msra.mxu0 %v258
  %873 = vmatpush.bf16.msra.mxu0 %v256
  %874 = vmatpush.bf16.msra.mxu0 %v254
  %875 = vmatpush.bf16.msra.mxu0 %v252
  %876 = vmatmul.bf16.gmra.mxu0 %v853
  %v877 = vpop.f32.mrf.mxu0
  %v878 = vadd.f32 %v848, %v877
  %v879 = vpop.f32.mrf.mxu0
  %880 = vdwg.mxu0
  %v881 = vxor.u32 %v865, 2147483648
  %v882 = vmul.f32 %v881, 1.442695
  %v883 = vpow.pop %v882
  %v884 = vadd.f32 %v883, 1.0
  %v885 = vrcp.pop %v884
  %v886 = vmul.f32 %v884, %v885
  %v887 = vsub.f32 1.0, %v886
  %v888 = vmul.f32 %v885, %v887
  %v889 = vadd.f32 %v885, %v888
  %vm890 = vweird.f32 %v884
  %vm891 = vweird.f32 %v885
  %vm892 = vmor %vm890, %vm891
  %v893 = vsel %vm892, %v885, %v889
  %v894 = vand.u32 2147483647, %v884
  %vm895 = vcmp.eq.f32.partialorder %v894, 8.507059e+37
  %v896 = vand.u32 %v884, 2147483648
  %v897 = vor.u32 1.1754944e-38, %v896
  %v898 = vsel %vm895, %v897, %v893
  %v899 = vmul.f32 1.0, %v898
  %v900 = vtanh.pop %v878
  %v901 = vxor.u32 %v878, 2147483648
  %v902 = vmul.f32 %v901, 1.442695
  %v903 = vpow.pop %v902
  %v904 = vadd.f32 %v903, 1.0
  %v905 = vrcp.pop %v904
  %v906 = vmul.f32 %v904, %v905
  %v907 = vsub.f32 1.0, %v906
  %v908 = vmul.f32 %v905, %v907
  %v909 = vadd.f32 %v905, %v908
  %vm910 = vweird.f32 %v904
  %vm911 = vweird.f32 %v905
  %vm912 = vmor %vm910, %vm911
  %v913 = vsel %vm912, %v905, %v909
  %v914 = vand.u32 2147483647, %v904
  %vm915 = vcmp.eq.f32.partialorder %v914, 8.507059e+37
  %v916 = vand.u32 %v904, 2147483648
  %v917 = vor.u32 1.1754944e-38, %v916
  %v918 = vsel %vm915, %v917, %v913
  %v919 = vmul.f32 1.0, %v918
  %v920 = vmul.f32 %v899, %v833
  %v921 = vmul.f32 %v899, %v900
  %923 = vrot.lane.b32.xlu0 %v921, 64
  %v924 = vpop.permute.xlu0 %923
  %v926 = vadd.f32 %v920, %v924
  %v927 = vtanh.pop %v926
  %v928 = vmul.f32 %v919, %v927
  %930 = vrot.lane.b32.xlu0 %v928, 64
  %v931 = vpop.permute.xlu0 %930
  %933 = vst.msk [vmem:[%s452] sm:$0xff] %vm120, %v931
  %934 = vst.msk [vmem:[%s450] sm:$0xff] %vm351, %v931
  %v935 = vpack.c.bf16 %v928, %v928
  %v936 = vld [vmem:[%s222] sm:$0xff]
  %v937 = vld [vmem:[%s222 + $0x8] sm:$0xff]
  %v938 = vld [vmem:[%s217] sm:$0xff]
  %v939 = vld [vmem:[%s217 + $0x8] sm:$0xff]
  %v940 = vsel %vm60, %v936, %v938
  %v941 = vsel %vm61, %v937, %v939
  %943 = vrot.lane.b32.xlu0 %v935, 64
  %v944 = vpop.permute.xlu0 %943
  %v946 = vsel %vm267, %v944, 0
  %948 = vmatpush.bf16.msra.mxu0 0
  %949 = vmatpush.bf16.msra.mxu0 0
  %950 = vmatpush.bf16.msra.mxu0 0
  %951 = vmatpush.bf16.msra.mxu0 0
  %952 = vmatpush.bf16.msra.mxu0 %v257
  %953 = vmatpush.bf16.msra.mxu0 %v255
  %954 = vmatpush.bf16.msra.mxu0 %v253
  %955 = vmatpush.bf16.msra.mxu0 %v251
  %956 = vmatmul.bf16.gmra.mxu0 %v946
  %v957 = vpop.f32.mrf.mxu0
  %v958 = vadd.f32 %v940, %v957
  %v959 = vpop.f32.mrf.mxu0
  %960 = vdwg.mxu0
  %961 = vmatpush.bf16.msra.mxu0 0
  %962 = vmatpush.bf16.msra.mxu0 0
  %963 = vmatpush.bf16.msra.mxu0 0
  %964 = vmatpush.bf16.msra.mxu0 0
  %965 = vmatpush.bf16.msra.mxu0 %v258
  %966 = vmatpush.bf16.msra.mxu0 %v256
  %967 = vmatpush.bf16.msra.mxu0 %v254
  %968 = vmatpush.bf16.msra.mxu0 %v252
  %969 = vmatmul.bf16.gmra.mxu0 %v946
  %v970 = vpop.f32.mrf.mxu0
  %v971 = vadd.f32 %v941, %v970
  %v972 = vpop.f32.mrf.mxu0
  %973 = vdwg.mxu0
  %v974 = vxor.u32 %v958, 2147483648
  %v975 = vmul.f32 %v974, 1.442695
  %v976 = vpow.pop %v975
  %v977 = vadd.f32 %v976, 1.0
  %v978 = vrcp.pop %v977
  %v979 = vmul.f32 %v977, %v978
  %v980 = vsub.f32 1.0, %v979
  %v981 = vmul.f32 %v978, %v980
  %v982 = vadd.f32 %v978, %v981
  %vm983 = vweird.f32 %v977
  %vm984 = vweird.f32 %v978
  %vm985 = vmor %vm983, %vm984
  %v986 = vsel %vm985, %v978, %v982
  %v987 = vand.u32 2147483647, %v977
  %vm988 = vcmp.eq.f32.partialorder %v987, 8.507059e+37
  %v989 = vand.u32 %v977, 2147483648
  %v990 = vor.u32 1.1754944e-38, %v989
  %v991 = vsel %vm988, %v990, %v986
  %v992 = vmul.f32 1.0, %v991
  %v993 = vtanh.pop %v971
  %v994 = vxor.u32 %v971, 2147483648
  %v995 = vmul.f32 %v994, 1.442695
  %v996 = vpow.pop %v995
  %v997 = vadd.f32 %v996, 1.0
  %v998 = vrcp.pop %v997
  %v999 = vmul.f32 %v997, %v998
  %v1000 = vsub.f32 1.0, %v999
  %v1001 = vmul.f32 %v998, %v1000
  %v1002 = vadd.f32 %v998, %v1001
  %vm1003 = vweird.f32 %v997
  %vm1004 = vweird.f32 %v998
  %vm1005 = vmor %vm1003, %vm1004
  %v1006 = vsel %vm1005, %v998, %v1002
  %v1007 = vand.u32 2147483647, %v997
  %vm1008 = vcmp.eq.f32.partialorder %v1007, 8.507059e+37
  %v1009 = vand.u32 %v997, 2147483648
  %v1010 = vor.u32 1.1754944e-38, %v1009
  %v1011 = vsel %vm1008, %v1010, %v1006
  %v1012 = vmul.f32 1.0, %v1011
  %v1013 = vmul.f32 %v992, %v926
  %v1014 = vmul.f32 %v992, %v993
  %1016 = vrot.lane.b32.xlu0 %v1014, 64
  %v1017 = vpop.permute.xlu0 %1016
  %v1019 = vadd.f32 %v1013, %v1017
  %v1020 = vtanh.pop %v1019
  %v1021 = vmul.f32 %v1012, %v1020
  %1023 = vrot.lane.b32.xlu0 %v1021, 64
  %v1024 = vpop.permute.xlu0 %1023
  %1026 = vst.msk [vmem:[%s350] sm:$0xff] %vm120, %v1024
  %1027 = vst.msk [vmem:[#allocation3] sm:$0xff] %vm351, %v1024
  %v1028 = vld [vmem:[#allocation3] sm:$0xff]
  %v1029 = vld [vmem:[#allocation3 + $0x8] sm:$0xff]
  %v1030 = vld [vmem:[#allocation3 + $0x10] sm:$0xff]
  %v1031 = vld [vmem:[#allocation3 + $0x18] sm:$0xff]
  %v1032 = vld [vmem:[#allocation3 + $0x20] sm:$0xff]
  %v1033 = vld [vmem:[#allocation3 + $0x28] sm:$0xff]
  %v1034 = vld [vmem:[#allocation3 + $0x30] sm:$0xff]
  %v1035 = vld [vmem:[#allocation3 + $0x38] sm:$0xff]
  %v1036 = vpack.c.bf16 %v1029, %v1028
  %v1037 = vpack.c.bf16 %v1031, %v1030
  %v1038 = vpack.c.bf16 %v1033, %v1032
  %v1039 = vpack.c.bf16 %v1035, %v1034
  %v1040 = vld [vmem:[%s4] sm:$0xff]
  %v1041 = vld [vmem:[%s4 + $0x8] sm:$0xff]
  %v1042 = vld [vmem:[%s4 + $0x10] sm:$0xff]
  %v1043 = vld [vmem:[%s4 + $0x18] sm:$0xff]
  %v1044 = vld [vmem:[%s4 + $0x20] sm:$0xff]
  %v1045 = vld [vmem:[%s4 + $0x28] sm:$0xff]
  %v1046 = vld [vmem:[%s4 + $0x30] sm:$0xff]
  %v1047 = vld [vmem:[%s4 + $0x38] sm:$0xff]
  %v1048 = vld [vmem:[%s6] sm:$0x3]
  %v1050 = vperm.slane %v1048, 0
  %v1051 = vperm.slane %v1048, 1
  %v1062 = vunpack.c.l.b16 %v1040
  %v1063 = vunpack.c.h.b16 %v1040
  %v1064 = vunpack.c.l.b16 %v1041
  %v1065 = vunpack.c.h.b16 %v1041
  %v1066 = vunpack.c.l.b16 %v1042
  %v1067 = vunpack.c.h.b16 %v1042
  %v1068 = vunpack.c.l.b16 %v1043
  %v1069 = vunpack.c.h.b16 %v1043
  %v1070 = vunpack.c.l.b16 %v1044
  %v1071 = vunpack.c.h.b16 %v1044
  %v1072 = vunpack.c.l.b16 %v1045
  %v1073 = vunpack.c.h.b16 %v1045
  %v1074 = vunpack.c.l.b16 %v1046
  %v1075 = vunpack.c.h.b16 %v1046
  %v1076 = vunpack.c.l.b16 %v1047
  %v1077 = vunpack.c.h.b16 %v1047
  %v1078 = vpack.c.b16 %v1064, %v1062
  %v1079 = vpack.c.b16 %v1065, %v1063
  %v1080 = vpack.c.b16 %v1068, %v1066
  %v1081 = vpack.c.b16 %v1069, %v1067
  %v1082 = vpack.c.b16 %v1072, %v1070
  %v1083 = vpack.c.b16 %v1073, %v1071
  %v1084 = vpack.c.b16 %v1076, %v1074
  %v1085 = vpack.c.b16 %v1077, %v1075
  %v1095 = vsel %vm267, %v1036, 0
  %v1098 = vsel %vm267, %v1037, 0
  %v1101 = vsel %vm267, %v1038, 0
  %v1104 = vsel %vm267, %v1039, 0
  %1106 = vmatpush.bf16.msra.mxu0 0
  %1107 = vmatpush.bf16.msra.mxu0 0
  %1108 = vmatpush.bf16.msra.mxu0 0
  %1109 = vmatpush.bf16.msra.mxu0 0
  %1110 = vmatpush.bf16.msra.mxu0 %v1084
  %1111 = vmatpush.bf16.msra.mxu0 %v1082
  %1112 = vmatpush.bf16.msra.mxu0 %v1080
  %1113 = vmatpush.bf16.msra.mxu0 %v1078
  %1114 = vmatmul.bf16.gmra.mxu0 %v1095
  %v1115 = vpop.f32.mrf.mxu0
  %v1116 = vadd.f32 %v1050, %v1115
  %v1117 = vpop.f32.mrf.mxu0
  %v1118 = vadd.f32 %v1050, %v1117
  %1119 = vmatmul.bf16.gmra.mxu0 %v1098
  %v1120 = vpop.f32.mrf.mxu0
  %v1121 = vadd.f32 %v1050, %v1120
  %v1122 = vpop.f32.mrf.mxu0
  %v1123 = vadd.f32 %v1050, %v1122
  %1124 = vmatmul.bf16.gmra.mxu0 %v1101
  %v1125 = vpop.f32.mrf.mxu0
  %v1126 = vadd.f32 %v1050, %v1125
  %v1127 = vpop.f32.mrf.mxu0
  %v1128 = vadd.f32 %v1050, %v1127
  %1129 = vmatmul.bf16.gmra.mxu0 %v1104
  %v1130 = vpop.f32.mrf.mxu0
  %v1131 = vadd.f32 %v1050, %v1130
  %v1132 = vpop.f32.mrf.mxu0
  %v1133 = vadd.f32 %v1050, %v1132
  %1134 = vdwg.mxu0
  %1135 = vmatpush.bf16.msra.mxu0 0
  %1136 = vmatpush.bf16.msra.mxu0 0
  %1137 = vmatpush.bf16.msra.mxu0 0
  %1138 = vmatpush.bf16.msra.mxu0 0
  %1139 = vmatpush.bf16.msra.mxu0 %v1085
  %1140 = vmatpush.bf16.msra.mxu0 %v1083
  %1141 = vmatpush.bf16.msra.mxu0 %v1081
  %1142 = vmatpush.bf16.msra.mxu0 %v1079
  %1143 = vmatmul.bf16.gmra.mxu0 %v1095
  %v1144 = vpop.f32.mrf.mxu0
  %v1145 = vadd.f32 %v1051, %v1144
  %v1146 = vpop.f32.mrf.mxu0
  %v1147 = vadd.f32 %v1051, %v1146
  %1148 = vmatmul.bf16.gmra.mxu0 %v1098
  %v1149 = vpop.f32.mrf.mxu0
  %v1150 = vadd.f32 %v1051, %v1149
  %v1151 = vpop.f32.mrf.mxu0
  %v1152 = vadd.f32 %v1051, %v1151
  %1153 = vmatmul.bf16.gmra.mxu0 %v1101
  %v1154 = vpop.f32.mrf.mxu0
  %v1155 = vadd.f32 %v1051, %v1154
  %v1156 = vpop.f32.mrf.mxu0
  %v1157 = vadd.f32 %v1051, %v1156
  %1158 = vmatmul.bf16.gmra.mxu0 %v1104
  %v1159 = vpop.f32.mrf.mxu0
  %v1160 = vadd.f32 %v1051, %v1159
  %v1161 = vpop.f32.mrf.mxu0
  %v1162 = vadd.f32 %v1051, %v1161
  %1163 = vdwg.mxu0
  %1164 = vst [vmem:[#allocation2] sm:$0xff] %v1116
  %1165 = vst [vmem:[#allocation2 + $0x8] sm:$0xff] %v1145
  %1166 = vst [vmem:[#allocation2 + $0x10] sm:$0xff] %v1118
  %1167 = vst [vmem:[#allocation2 + $0x18] sm:$0xff] %v1147
  %1168 = vst [vmem:[#allocation2 + $0x20] sm:$0xff] %v1121
  %1169 = vst [vmem:[#allocation2 + $0x28] sm:$0xff] %v1150
  %1170 = vst [vmem:[#allocation2 + $0x30] sm:$0xff] %v1123
  %1171 = vst [vmem:[#allocation2 + $0x38] sm:$0xff] %v1152
  %1172 = vst [vmem:[#allocation2 + $0x40] sm:$0xff] %v1126
  %1173 = vst [vmem:[#allocation2 + $0x48] sm:$0xff] %v1155
  %1174 = vst [vmem:[#allocation2 + $0x50] sm:$0xff] %v1128
  %1175 = vst [vmem:[#allocation2 + $0x58] sm:$0xff] %v1157
  %1176 = vst [vmem:[#allocation2 + $0x60] sm:$0xff] %v1131
  %1177 = vst [vmem:[#allocation2 + $0x68] sm:$0xff] %v1160
  %1178 = vst [vmem:[#allocation2 + $0x70] sm:$0xff] %v1133
  %1179 = vst [vmem:[#allocation2 + $0x78] sm:$0xff] %v1162
  %v1180 = vld [vmem:[%s5] sm:$0xff]
  %v1181 = vld [vmem:[%s5 + $0x8] sm:$0xff]
  %v1182 = vld [vmem:[%s5 + $0x10] sm:$0xff]
  %v1183 = vld [vmem:[%s5 + $0x18] sm:$0xff]
  %v1184 = vld [vmem:[%s5 + $0x20] sm:$0xff]
  %v1185 = vld [vmem:[%s5 + $0x28] sm:$0xff]
  %v1186 = vld [vmem:[%s5 + $0x30] sm:$0xff]
  %v1187 = vld [vmem:[%s5 + $0x38] sm:$0xff]
  %v1188 = vld [vmem:[%s217] sm:$0xff]
  %v1189 = vld [vmem:[%s217 + $0x8] sm:$0xff]
  %v1190 = vld [vmem:[%s222] sm:$0xff]
  %v1191 = vld [vmem:[%s222 + $0x8] sm:$0xff]
  %v1192 = vsel %vm60, %v1188, %v1190
  %v1193 = vsel %vm61, %v1189, %v1191
  %v1202 = vunpack.c.l.b16 %v1180
  %v1203 = vunpack.c.h.b16 %v1180
  %v1204 = vunpack.c.l.b16 %v1181
  %v1205 = vunpack.c.h.b16 %v1181
  %v1206 = vunpack.c.l.b16 %v1182
  %v1207 = vunpack.c.h.b16 %v1182
  %v1208 = vunpack.c.l.b16 %v1183
  %v1209 = vunpack.c.h.b16 %v1183
  %v1210 = vunpack.c.l.b16 %v1184
  %v1211 = vunpack.c.h.b16 %v1184
  %v1212 = vunpack.c.l.b16 %v1185
  %v1213 = vunpack.c.h.b16 %v1185
  %v1214 = vunpack.c.l.b16 %v1186
  %v1215 = vunpack.c.h.b16 %v1186
  %v1216 = vunpack.c.l.b16 %v1187
  %v1217 = vunpack.c.h.b16 %v1187
  %v1218 = vpack.c.b16 %v1204, %v1202
  %v1219 = vpack.c.b16 %v1205, %v1203
  %v1220 = vpack.c.b16 %v1208, %v1206
  %v1221 = vpack.c.b16 %v1209, %v1207
  %v1222 = vpack.c.b16 %v1212, %v1210
  %v1223 = vpack.c.b16 %v1213, %v1211
  %v1224 = vpack.c.b16 %v1216, %v1214
  %v1225 = vpack.c.b16 %v1217, %v1215
  %1234 = vmatpush.bf16.msra.mxu0 0
  %1235 = vmatpush.bf16.msra.mxu0 0
  %1236 = vmatpush.bf16.msra.mxu0 0
  %1237 = vmatpush.bf16.msra.mxu0 0
  %1238 = vmatpush.bf16.msra.mxu0 %v1224
  %1239 = vmatpush.bf16.msra.mxu0 %v1222
  %1240 = vmatpush.bf16.msra.mxu0 %v1220
  %1241 = vmatpush.bf16.msra.mxu0 %v1218
  %1242 = vmatmul.bf16.gmra.mxu0 %v269
  %v1243 = vpop.f32.mrf.mxu0
  %v1244 = vadd.f32 %v1192, %v1243
  %v1245 = vpop.f32.mrf.mxu0
  %1246 = vdwg.mxu0
  %1247 = vmatpush.bf16.msra.mxu0 0
  %1248 = vmatpush.bf16.msra.mxu0 0
  %1249 = vmatpush.bf16.msra.mxu0 0
  %1250 = vmatpush.bf16.msra.mxu0 0
  %1251 = vmatpush.bf16.msra.mxu0 %v1225
  %1252 = vmatpush.bf16.msra.mxu0 %v1223
  %1253 = vmatpush.bf16.msra.mxu0 %v1221
  %1254 = vmatpush.bf16.msra.mxu0 %v1219
  %1255 = vmatmul.bf16.gmra.mxu0 %v269
  %v1256 = vpop.f32.mrf.mxu0
  %v1257 = vadd.f32 %v1193, %v1256
  %v1258 = vpop.f32.mrf.mxu0
  %1259 = vdwg.mxu0
  %v1260 = vxor.u32 %v1244, 2147483648
  %v1261 = vmul.f32 %v1260, 1.442695
  %v1262 = vpow.pop %v1261
  %v1263 = vadd.f32 %v1262, 1.0
  %v1264 = vrcp.pop %v1263
  %v1265 = vmul.f32 %v1263, %v1264
  %v1266 = vsub.f32 1.0, %v1265
  %v1267 = vmul.f32 %v1264, %v1266
  %v1268 = vadd.f32 %v1264, %v1267
  %vm1269 = vweird.f32 %v1263
  %vm1270 = vweird.f32 %v1264
  %vm1271 = vmor %vm1269, %vm1270
  %v1272 = vsel %vm1271, %v1264, %v1268
  %v1273 = vand.u32 2147483647, %v1263
  %vm1274 = vcmp.eq.f32.partialorder %v1273, 8.507059e+37
  %v1275 = vand.u32 %v1263, 2147483648
  %v1276 = vor.u32 1.1754944e-38, %v1275
  %v1277 = vsel %vm1274, %v1276, %v1272
  %v1278 = vmul.f32 1.0, %v1277
  %v1279 = vtanh.pop %v1257
  %v1280 = vxor.u32 %v1257, 2147483648
  %v1281 = vmul.f32 %v1280, 1.442695
  %v1282 = vpow.pop %v1281
  %v1283 = vadd.f32 %v1282, 1.0
  %v1284 = vrcp.pop %v1283
  %v1285 = vmul.f32 %v1283, %v1284
  %v1286 = vsub.f32 1.0, %v1285
  %v1287 = vmul.f32 %v1284, %v1286
  %v1288 = vadd.f32 %v1284, %v1287
  %vm1289 = vweird.f32 %v1283
  %vm1290 = vweird.f32 %v1284
  %vm1291 = vmor %vm1289, %vm1290
  %v1292 = vsel %vm1291, %v1284, %v1288
  %v1293 = vand.u32 2147483647, %v1283
  %vm1294 = vcmp.eq.f32.partialorder %v1293, 8.507059e+37
  %v1295 = vand.u32 %v1283, 2147483648
  %v1296 = vor.u32 1.1754944e-38, %v1295
  %v1297 = vsel %vm1294, %v1296, %v1292
  %v1298 = vmul.f32 1.0, %v1297
  %v1299 = vmul.f32 %v1278, 0.0
  %v1300 = vmul.f32 %v1278, %v1279
  %1302 = vrot.lane.b32.xlu0 %v1300, 64
  %v1303 = vpop.permute.xlu0 %1302
  %v1305 = vadd.f32 %v1299, %v1303
  %v1306 = vtanh.pop %v1305
  %v1307 = vmul.f32 %v1298, %v1306
  %1309 = vrot.lane.b32.xlu0 %v1307, 64
  %v1310 = vpop.permute.xlu0 %1309
  %1312 = vst.msk [vmem:[#allocation3] sm:$0xff] %vm120, %v1310
  %1313 = vst.msk [vmem:[%s350] sm:$0xff] %vm351, %v1310
  %v1314 = vpack.c.bf16 %v1307, %v1307
  %v1315 = vld [vmem:[%s356] sm:$0xff]
  %v1316 = vld [vmem:[%s356 + $0x8] sm:$0xff]
  %v1317 = vld [vmem:[%s361] sm:$0xff]
  %v1318 = vld [vmem:[%s361 + $0x8] sm:$0xff]
  %v1319 = vsel %vm60, %v1315, %v1317
  %v1320 = vsel %vm61, %v1316, %v1318
  %1322 = vrot.lane.b32.xlu0 %v1314, 64
  %v1323 = vpop.permute.xlu0 %1322
  %v1325 = vsel %vm267, %v1323, 0
  %1327 = vmatpush.bf16.msra.mxu0 0
  %1328 = vmatpush.bf16.msra.mxu0 0
  %1329 = vmatpush.bf16.msra.mxu0 0
  %1330 = vmatpush.bf16.msra.mxu0 0
  %1331 = vmatpush.bf16.msra.mxu0 %v1224
  %1332 = vmatpush.bf16.msra.mxu0 %v1222
  %1333 = vmatpush.bf16.msra.mxu0 %v1220
  %1334 = vmatpush.bf16.msra.mxu0 %v1218
  %1335 = vmatmul.bf16.gmra.mxu0 %v1325
  %v1336 = vpop.f32.mrf.mxu0
  %v1337 = vadd.f32 %v1319, %v1336
  %v1338 = vpop.f32.mrf.mxu0
  %1339 = vdwg.mxu0
  %1340 = vmatpush.bf16.msra.mxu0 0
  %1341 = vmatpush.bf16.msra.mxu0 0
  %1342 = vmatpush.bf16.msra.mxu0 0
  %1343 = vmatpush.bf16.msra.mxu0 0
  %1344 = vmatpush.bf16.msra.mxu0 %v1225
  %1345 = vmatpush.bf16.msra.mxu0 %v1223
  %1346 = vmatpush.bf16.msra.mxu0 %v1221
  %1347 = vmatpush.bf16.msra.mxu0 %v1219
  %1348 = vmatmul.bf16.gmra.mxu0 %v1325
  %v1349 = vpop.f32.mrf.mxu0
  %v1350 = vadd.f32 %v1320, %v1349
  %v1351 = vpop.f32.mrf.mxu0
  %1352 = vdwg.mxu0
  %v1353 = vxor.u32 %v1337, 2147483648
  %v1354 = vmul.f32 %v1353, 1.442695
  %v1355 = vpow.pop %v1354
  %v1356 = vadd.f32 %v1355, 1.0
  %v1357 = vrcp.pop %v1356
  %v1358 = vmul.f32 %v1356, %v1357
  %v1359 = vsub.f32 1.0, %v1358
  %v1360 = vmul.f32 %v1357, %v1359
  %v1361 = vadd.f32 %v1357, %v1360
  %vm1362 = vweird.f32 %v1356
  %vm1363 = vweird.f32 %v1357
  %vm1364 = vmor %vm1362, %vm1363
  %v1365 = vsel %vm1364, %v1357, %v1361
  %v1366 = vand.u32 2147483647, %v1356
  %vm1367 = vcmp.eq.f32.partialorder %v1366, 8.507059e+37
  %v1368 = vand.u32 %v1356, 2147483648
  %v1369 = vor.u32 1.1754944e-38, %v1368
  %v1370 = vsel %vm1367, %v1369, %v1365
  %v1371 = vmul.f32 1.0, %v1370
  %v1372 = vtanh.pop %v1350
  %v1373 = vxor.u32 %v1350, 2147483648
  %v1374 = vmul.f32 %v1373, 1.442695
  %v1375 = vpow.pop %v1374
  %v1376 = vadd.f32 %v1375, 1.0
  %v1377 = vrcp.pop %v1376
  %v1378 = vmul.f32 %v1376, %v1377
  %v1379 = vsub.f32 1.0, %v1378
  %v1380 = vmul.f32 %v1377, %v1379
  %v1381 = vadd.f32 %v1377, %v1380
  %vm1382 = vweird.f32 %v1376
  %vm1383 = vweird.f32 %v1377
  %vm1384 = vmor %vm1382, %vm1383
  %v1385 = vsel %vm1384, %v1377, %v1381
  %v1386 = vand.u32 2147483647, %v1376
  %vm1387 = vcmp.eq.f32.partialorder %v1386, 8.507059e+37
  %v1388 = vand.u32 %v1376, 2147483648
  %v1389 = vor.u32 1.1754944e-38, %v1388
  %v1390 = vsel %vm1387, %v1389, %v1385
  %v1391 = vmul.f32 1.0, %v1390
  %v1392 = vmul.f32 %v1371, %v1305
  %v1393 = vmul.f32 %v1371, %v1372
  %1395 = vrot.lane.b32.xlu0 %v1393, 64
  %v1396 = vpop.permute.xlu0 %1395
  %v1398 = vadd.f32 %v1392, %v1396
  %v1399 = vtanh.pop %v1398
  %v1400 = vmul.f32 %v1391, %v1399
  %1402 = vrot.lane.b32.xlu0 %v1400, 64
  %v1403 = vpop.permute.xlu0 %1402
  %1405 = vst.msk [vmem:[%s450] sm:$0xff] %vm120, %v1403
  %1406 = vst.msk [vmem:[%s452] sm:$0xff] %vm351, %v1403
  %v1407 = vpack.c.bf16 %v1400, %v1400
  %v1408 = vld [vmem:[%s457] sm:$0xff]
  %v1409 = vld [vmem:[%s457 + $0x8] sm:$0xff]
  %v1410 = vld [vmem:[%s462] sm:$0xff]
  %v1411 = vld [vmem:[%s462 + $0x8] sm:$0xff]
  %v1412 = vsel %vm60, %v1408, %v1410
  %v1413 = vsel %vm61, %v1409, %v1411
  %1415 = vrot.lane.b32.xlu0 %v1407, 64
  %v1416 = vpop.permute.xlu0 %1415
  %v1418 = vsel %vm267, %v1416, 0
  %1420 = vmatpush.bf16.msra.mxu0 0
  %1421 = vmatpush.bf16.msra.mxu0 0
  %1422 = vmatpush.bf16.msra.mxu0 0
  %1423 = vmatpush.bf16.msra.mxu0 0
  %1424 = vmatpush.bf16.msra.mxu0 %v1224
  %1425 = vmatpush.bf16.msra.mxu0 %v1222
  %1426 = vmatpush.bf16.msra.mxu0 %v1220
  %1427 = vmatpush.bf16.msra.mxu0 %v1218
  %1428 = vmatmul.bf16.gmra.mxu0 %v1418
  %v1429 = vpop.f32.mrf.mxu0
  %v1430 = vadd.f32 %v1412, %v1429
  %v1431 = vpop.f32.mrf.mxu0
  %1432 = vdwg.mxu0
  %1433 = vmatpush.bf16.msra.mxu0 0
  %1434 = vmatpush.bf16.msra.mxu0 0
  %1435 = vmatpush.bf16.msra.mxu0 0
  %1436 = vmatpush.bf16.msra.mxu0 0
  %1437 = vmatpush.bf16.msra.mxu0 %v1225
  %1438 = vmatpush.bf16.msra.mxu0 %v1223
  %1439 = vmatpush.bf16.msra.mxu0 %v1221
  %1440 = vmatpush.bf16.msra.mxu0 %v1219
  %1441 = vmatmul.bf16.gmra.mxu0 %v1418
  %v1442 = vpop.f32.mrf.mxu0
  %v1443 = vadd.f32 %v1413, %v1442
  %v1444 = vpop.f32.mrf.mxu0
  %1445 = vdwg.mxu0
  %v1446 = vxor.u32 %v1430, 2147483648
  %v1447 = vmul.f32 %v1446, 1.442695
  %v1448 = vpow.pop %v1447
  %v1449 = vadd.f32 %v1448, 1.0
  %v1450 = vrcp.pop %v1449
  %v1451 = vmul.f32 %v1449, %v1450
  %v1452 = vsub.f32 1.0, %v1451
  %v1453 = vmul.f32 %v1450, %v1452
  %v1454 = vadd.f32 %v1450, %v1453
  %vm1455 = vweird.f32 %v1449
  %vm1456 = vweird.f32 %v1450
  %vm1457 = vmor %vm1455, %vm1456
  %v1458 = vsel %vm1457, %v1450, %v1454
  %v1459 = vand.u32 2147483647, %v1449
  %vm1460 = vcmp.eq.f32.partialorder %v1459, 8.507059e+37
  %v1461 = vand.u32 %v1449, 2147483648
  %v1462 = vor.u32 1.1754944e-38, %v1461
  %v1463 = vsel %vm1460, %v1462, %v1458
  %v1464 = vmul.f32 1.0, %v1463
  %v1465 = vtanh.pop %v1443
  %v1466 = vxor.u32 %v1443, 2147483648
  %v1467 = vmul.f32 %v1466, 1.442695
  %v1468 = vpow.pop %v1467
  %v1469 = vadd.f32 %v1468, 1.0
  %v1470 = vrcp.pop %v1469
  %v1471 = vmul.f32 %v1469, %v1470
  %v1472 = vsub.f32 1.0, %v1471
  %v1473 = vmul.f32 %v1470, %v1472
  %v1474 = vadd.f32 %v1470, %v1473
  %vm1475 = vweird.f32 %v1469
  %vm1476 = vweird.f32 %v1470
  %vm1477 = vmor %vm1475, %vm1476
  %v1478 = vsel %vm1477, %v1470, %v1474
  %v1479 = vand.u32 2147483647, %v1469
  %vm1480 = vcmp.eq.f32.partialorder %v1479, 8.507059e+37
  %v1481 = vand.u32 %v1469, 2147483648
  %v1482 = vor.u32 1.1754944e-38, %v1481
  %v1483 = vsel %vm1480, %v1482, %v1478
  %v1484 = vmul.f32 1.0, %v1483
  %v1485 = vmul.f32 %v1464, %v1398
  %v1486 = vmul.f32 %v1464, %v1465
  %1488 = vrot.lane.b32.xlu0 %v1486, 64
  %v1489 = vpop.permute.xlu0 %1488
  %v1491 = vadd.f32 %v1485, %v1489
  %v1492 = vtanh.pop %v1491
  %v1493 = vmul.f32 %v1484, %v1492
  %1495 = vrot.lane.b32.xlu0 %v1493, 64
  %v1496 = vpop.permute.xlu0 %1495
  %1498 = vst.msk [vmem:[%s551] sm:$0xff] %vm120, %v1496
  %1499 = vst.msk [vmem:[%s553] sm:$0xff] %vm351, %v1496
  %v1500 = vpack.c.bf16 %v1493, %v1493
  %v1501 = vld [vmem:[%s558] sm:$0xff]
  %v1502 = vld [vmem:[%s558 + $0x8] sm:$0xff]
  %v1503 = vld [vmem:[%s563] sm:$0xff]
  %v1504 = vld [vmem:[%s563 + $0x8] sm:$0xff]
  %v1505 = vsel %vm60, %v1501, %v1503
  %v1506 = vsel %vm61, %v1502, %v1504
  %1508 = vrot.lane.b32.xlu0 %v1500, 64
  %v1509 = vpop.permute.xlu0 %1508
  %v1511 = vsel %vm267, %v1509, 0
  %1513 = vmatpush.bf16.msra.mxu0 0
  %1514 = vmatpush.bf16.msra.mxu0 0
  %1515 = vmatpush.bf16.msra.mxu0 0
  %1516 = vmatpush.bf16.msra.mxu0 0
  %1517 = vmatpush.bf16.msra.mxu0 %v1224
  %1518 = vmatpush.bf16.msra.mxu0 %v1222
  %1519 = vmatpush.bf16.msra.mxu0 %v1220
  %1520 = vmatpush.bf16.msra.mxu0 %v1218
  %1521 = vmatmul.bf16.gmra.mxu0 %v1511
  %v1522 = vpop.f32.mrf.mxu0
  %v1523 = vadd.f32 %v1505, %v1522
  %v1524 = vpop.f32.mrf.mxu0
  %1525 = vdwg.mxu0
  %1526 = vmatpush.bf16.msra.mxu0 0
  %1527 = vmatpush.bf16.msra.mxu0 0
  %1528 = vmatpush.bf16.msra.mxu0 0
  %1529 = vmatpush.bf16.msra.mxu0 0
  %1530 = vmatpush.bf16.msra.mxu0 %v1225
  %1531 = vmatpush.bf16.msra.mxu0 %v1223
  %1532 = vmatpush.bf16.msra.mxu0 %v1221
  %1533 = vmatpush.bf16.msra.mxu0 %v1219
  %1534 = vmatmul.bf16.gmra.mxu0 %v1511
  %v1535 = vpop.f32.mrf.mxu0
  %v1536 = vadd.f32 %v1506, %v1535
  %v1537 = vpop.f32.mrf.mxu0
  %1538 = vdwg.mxu0
  %v1539 = vxor.u32 %v1523, 2147483648
  %v1540 = vmul.f32 %v1539, 1.442695
  %v1541 = vpow.pop %v1540
  %v1542 = vadd.f32 %v1541, 1.0
  %v1543 = vrcp.pop %v1542
  %v1544 = vmul.f32 %v1542, %v1543
  %v1545 = vsub.f32 1.0, %v1544
  %v1546 = vmul.f32 %v1543, %v1545
  %v1547 = vadd.f32 %v1543, %v1546
  %vm1548 = vweird.f32 %v1542
  %vm1549 = vweird.f32 %v1543
  %vm1550 = vmor %vm1548, %vm1549
  %v1551 = vsel %vm1550, %v1543, %v1547
  %v1552 = vand.u32 2147483647, %v1542
  %vm1553 = vcmp.eq.f32.partialorder %v1552, 8.507059e+37
  %v1554 = vand.u32 %v1542, 2147483648
  %v1555 = vor.u32 1.1754944e-38, %v1554
  %v1556 = vsel %vm1553, %v1555, %v1551
  %v1557 = vmul.f32 1.0, %v1556
  %v1558 = vtanh.pop %v1536
  %v1559 = vxor.u32 %v1536, 2147483648
  %v1560 = vmul.f32 %v1559, 1.442695
  %v1561 = vpow.pop %v1560
  %v1562 = vadd.f32 %v1561, 1.0
  %v1563 = vrcp.pop %v1562
  %v1564 = vmul.f32 %v1562, %v1563
  %v1565 = vsub.f32 1.0, %v1564
  %v1566 = vmul.f32 %v1563, %v1565
  %v1567 = vadd.f32 %v1563, %v1566
  %vm1568 = vweird.f32 %v1562
  %vm1569 = vweird.f32 %v1563
  %vm1570 = vmor %vm1568, %vm1569
  %v1571 = vsel %vm1570, %v1563, %v1567
  %v1572 = vand.u32 2147483647, %v1562
  %vm1573 = vcmp.eq.f32.partialorder %v1572, 8.507059e+37
  %v1574 = vand.u32 %v1562, 2147483648
  %v1575 = vor.u32 1.1754944e-38, %v1574
  %v1576 = vsel %vm1573, %v1575, %v1571
  %v1577 = vmul.f32 1.0, %v1576
  %v1578 = vmul.f32 %v1557, %v1491
  %v1579 = vmul.f32 %v1557, %v1558
  %1581 = vrot.lane.b32.xlu0 %v1579, 64
  %v1582 = vpop.permute.xlu0 %1581
  %v1584 = vadd.f32 %v1578, %v1582
  %v1585 = vtanh.pop %v1584
  %v1586 = vmul.f32 %v1577, %v1585
  %1588 = vrot.lane.b32.xlu0 %v1586, 64
  %v1589 = vpop.permute.xlu0 %1588
  %1591 = vst.msk [vmem:[%s652] sm:$0xff] %vm120, %v1589
  %1592 = vst.msk [vmem:[%s654] sm:$0xff] %vm351, %v1589
  %v1593 = vpack.c.bf16 %v1586, %v1586
  %v1594 = vld [vmem:[%s563] sm:$0xff]
  %v1595 = vld [vmem:[%s563 + $0x8] sm:$0xff]
  %v1596 = vld [vmem:[%s558] sm:$0xff]
  %v1597 = vld [vmem:[%s558 + $0x8] sm:$0xff]
  %v1598 = vsel %vm60, %v1594, %v1596
  %v1599 = vsel %vm61, %v1595, %v1597
  %1601 = vrot.lane.b32.xlu0 %v1593, 64
  %v1602 = vpop.permute.xlu0 %1601
  %v1604 = vsel %vm267, %v1602, 0
  %1606 = vmatpush.bf16.msra.mxu0 0
  %1607 = vmatpush.bf16.msra.mxu0 0
  %1608 = vmatpush.bf16.msra.mxu0 0
  %1609 = vmatpush.bf16.msra.mxu0 0
  %1610 = vmatpush.bf16.msra.mxu0 %v1224
  %1611 = vmatpush.bf16.msra.mxu0 %v1222
  %1612 = vmatpush.bf16.msra.mxu0 %v1220
  %1613 = vmatpush.bf16.msra.mxu0 %v1218
  %1614 = vmatmul.bf16.gmra.mxu0 %v1604
  %v1615 = vpop.f32.mrf.mxu0
  %v1616 = vadd.f32 %v1598, %v1615
  %v1617 = vpop.f32.mrf.mxu0
  %1618 = vdwg.mxu0
  %1619 = vmatpush.bf16.msra.mxu0 0
  %1620 = vmatpush.bf16.msra.mxu0 0
  %1621 = vmatpush.bf16.msra.mxu0 0
  %1622 = vmatpush.bf16.msra.mxu0 0
  %1623 = vmatpush.bf16.msra.mxu0 %v1225
  %1624 = vmatpush.bf16.msra.mxu0 %v1223
  %1625 = vmatpush.bf16.msra.mxu0 %v1221
  %1626 = vmatpush.bf16.msra.mxu0 %v1219
  %1627 = vmatmul.bf16.gmra.mxu0 %v1604
  %v1628 = vpop.f32.mrf.mxu0
  %v1629 = vadd.f32 %v1599, %v1628
  %v1630 = vpop.f32.mrf.mxu0
  %1631 = vdwg.mxu0
  %v1632 = vxor.u32 %v1616, 2147483648
  %v1633 = vmul.f32 %v1632, 1.442695
  %v1634 = vpow.pop %v1633
  %v1635 = vadd.f32 %v1634, 1.0
  %v1636 = vrcp.pop %v1635
  %v1637 = vmul.f32 %v1635, %v1636
  %v1638 = vsub.f32 1.0, %v1637
  %v1639 = vmul.f32 %v1636, %v1638
  %v1640 = vadd.f32 %v1636, %v1639
  %vm1641 = vweird.f32 %v1635
  %vm1642 = vweird.f32 %v1636
  %vm1643 = vmor %vm1641, %vm1642
  %v1644 = vsel %vm1643, %v1636, %v1640
  %v1645 = vand.u32 2147483647, %v1635
  %vm1646 = vcmp.eq.f32.partialorder %v1645, 8.507059e+37
  %v1647 = vand.u32 %v1635, 2147483648
  %v1648 = vor.u32 1.1754944e-38, %v1647
  %v1649 = vsel %vm1646, %v1648, %v1644
  %v1650 = vmul.f32 1.0, %v1649
  %v1651 = vtanh.pop %v1629
  %v1652 = vxor.u32 %v1629, 2147483648
  %v1653 = vmul.f32 %v1652, 1.442695
  %v1654 = vpow.pop %v1653
  %v1655 = vadd.f32 %v1654, 1.0
  %v1656 = vrcp.pop %v1655
  %v1657 = vmul.f32 %v1655, %v1656
  %v1658 = vsub.f32 1.0, %v1657
  %v1659 = vmul.f32 %v1656, %v1658
  %v1660 = vadd.f32 %v1656, %v1659
  %vm1661 = vweird.f32 %v1655
  %vm1662 = vweird.f32 %v1656
  %vm1663 = vmor %vm1661, %vm1662
  %v1664 = vsel %vm1663, %v1656, %v1660
  %v1665 = vand.u32 2147483647, %v1655
  %vm1666 = vcmp.eq.f32.partialorder %v1665, 8.507059e+37
  %v1667 = vand.u32 %v1655, 2147483648
  %v1668 = vor.u32 1.1754944e-38, %v1667
  %v1669 = vsel %vm1666, %v1668, %v1664
  %v1670 = vmul.f32 1.0, %v1669
  %v1671 = vmul.f32 %v1650, %v1584
  %v1672 = vmul.f32 %v1650, %v1651
  %1674 = vrot.lane.b32.xlu0 %v1672, 64
  %v1675 = vpop.permute.xlu0 %1674
  %v1677 = vadd.f32 %v1671, %v1675
  %v1678 = vtanh.pop %v1677
  %v1679 = vmul.f32 %v1670, %v1678
  %1681 = vrot.lane.b32.xlu0 %v1679, 64
  %v1682 = vpop.permute.xlu0 %1681
  %1684 = vst.msk [vmem:[%s654] sm:$0xff] %vm120, %v1682
  %1685 = vst.msk [vmem:[%s652] sm:$0xff] %vm351, %v1682
  %v1686 = vpack.c.bf16 %v1679, %v1679
  %v1687 = vld [vmem:[%s462] sm:$0xff]
  %v1688 = vld [vmem:[%s462 + $0x8] sm:$0xff]
  %v1689 = vld [vmem:[%s457] sm:$0xff]
  %v1690 = vld [vmem:[%s457 + $0x8] sm:$0xff]
  %v1691 = vsel %vm60, %v1687, %v1689
  %v1692 = vsel %vm61, %v1688, %v1690
  %1694 = vrot.lane.b32.xlu0 %v1686, 64
  %v1695 = vpop.permute.xlu0 %1694
  %v1697 = vsel %vm267, %v1695, 0
  %1699 = vmatpush.bf16.msra.mxu0 0
  %1700 = vmatpush.bf16.msra.mxu0 0
  %1701 = vmatpush.bf16.msra.mxu0 0
  %1702 = vmatpush.bf16.msra.mxu0 0
  %1703 = vmatpush.bf16.msra.mxu0 %v1224
  %1704 = vmatpush.bf16.msra.mxu0 %v1222
  %1705 = vmatpush.bf16.msra.mxu0 %v1220
  %1706 = vmatpush.bf16.msra.mxu0 %v1218
  %1707 = vmatmul.bf16.gmra.mxu0 %v1697
  %v1708 = vpop.f32.mrf.mxu0
  %v1709 = vadd.f32 %v1691, %v1708
  %v1710 = vpop.f32.mrf.mxu0
  %1711 = vdwg.mxu0
  %1712 = vmatpush.bf16.msra.mxu0 0
  %1713 = vmatpush.bf16.msra.mxu0 0
  %1714 = vmatpush.bf16.msra.mxu0 0
  %1715 = vmatpush.bf16.msra.mxu0 0
  %1716 = vmatpush.bf16.msra.mxu0 %v1225
  %1717 = vmatpush.bf16.msra.mxu0 %v1223
  %1718 = vmatpush.bf16.msra.mxu0 %v1221
  %1719 = vmatpush.bf16.msra.mxu0 %v1219
  %1720 = vmatmul.bf16.gmra.mxu0 %v1697
  %v1721 = vpop.f32.mrf.mxu0
  %v1722 = vadd.f32 %v1692, %v1721
  %v1723 = vpop.f32.mrf.mxu0
  %1724 = vdwg.mxu0
  %v1725 = vxor.u32 %v1709, 2147483648
  %v1726 = vmul.f32 %v1725, 1.442695
  %v1727 = vpow.pop %v1726
  %v1728 = vadd.f32 %v1727, 1.0
  %v1729 = vrcp.pop %v1728
  %v1730 = vmul.f32 %v1728, %v1729
  %v1731 = vsub.f32 1.0, %v1730
  %v1732 = vmul.f32 %v1729, %v1731
  %v1733 = vadd.f32 %v1729, %v1732
  %vm1734 = vweird.f32 %v1728
  %vm1735 = vweird.f32 %v1729
  %vm1736 = vmor %vm1734, %vm1735
  %v1737 = vsel %vm1736, %v1729, %v1733
  %v1738 = vand.u32 2147483647, %v1728
  %vm1739 = vcmp.eq.f32.partialorder %v1738, 8.507059e+37
  %v1740 = vand.u32 %v1728, 2147483648
  %v1741 = vor.u32 1.1754944e-38, %v1740
  %v1742 = vsel %vm1739, %v1741, %v1737
  %v1743 = vmul.f32 1.0, %v1742
  %v1744 = vtanh.pop %v1722
  %v1745 = vxor.u32 %v1722, 2147483648
  %v1746 = vmul.f32 %v1745, 1.442695
  %v1747 = vpow.pop %v1746
  %v1748 = vadd.f32 %v1747, 1.0
  %v1749 = vrcp.pop %v1748
  %v1750 = vmul.f32 %v1748, %v1749
  %v1751 = vsub.f32 1.0, %v1750
  %v1752 = vmul.f32 %v1749, %v1751
  %v1753 = vadd.f32 %v1749, %v1752
  %vm1754 = vweird.f32 %v1748
  %vm1755 = vweird.f32 %v1749
  %vm1756 = vmor %vm1754, %vm1755
  %v1757 = vsel %vm1756, %v1749, %v1753
  %v1758 = vand.u32 2147483647, %v1748
  %vm1759 = vcmp.eq.f32.partialorder %v1758, 8.507059e+37
  %v1760 = vand.u32 %v1748, 2147483648
  %v1761 = vor.u32 1.1754944e-38, %v1760
  %v1762 = vsel %vm1759, %v1761, %v1757
  %v1763 = vmul.f32 1.0, %v1762
  %v1764 = vmul.f32 %v1743, %v1677
  %v1765 = vmul.f32 %v1743, %v1744
  %1767 = vrot.lane.b32.xlu0 %v1765, 64
  %v1768 = vpop.permute.xlu0 %1767
  %v1770 = vadd.f32 %v1764, %v1768
  %v1771 = vtanh.pop %v1770
  %v1772 = vmul.f32 %v1763, %v1771
  %1774 = vrot.lane.b32.xlu0 %v1772, 64
  %v1775 = vpop.permute.xlu0 %1774
  %1777 = vst.msk [vmem:[%s553] sm:$0xff] %vm120, %v1775
  %1778 = vst.msk [vmem:[%s551] sm:$0xff] %vm351, %v1775
  %v1779 = vpack.c.bf16 %v1772, %v1772
  %v1780 = vld [vmem:[%s361] sm:$0xff]
  %v1781 = vld [vmem:[%s361 + $0x8] sm:$0xff]
  %v1782 = vld [vmem:[%s356] sm:$0xff]
  %v1783 = vld [vmem:[%s356 + $0x8] sm:$0xff]
  %v1784 = vsel %vm60, %v1780, %v1782
  %v1785 = vsel %vm61, %v1781, %v1783
  %1787 = vrot.lane.b32.xlu0 %v1779, 64
  %v1788 = vpop.permute.xlu0 %1787
  %v1790 = vsel %vm267, %v1788, 0
  %1792 = vmatpush.bf16.msra.mxu0 0
  %1793 = vmatpush.bf16.msra.mxu0 0
  %1794 = vmatpush.bf16.msra.mxu0 0
  %1795 = vmatpush.bf16.msra.mxu0 0
  %1796 = vmatpush.bf16.msra.mxu0 %v1224
  %1797 = vmatpush.bf16.msra.mxu0 %v1222
  %1798 = vmatpush.bf16.msra.mxu0 %v1220
  %1799 = vmatpush.bf16.msra.mxu0 %v1218
  %1800 = vmatmul.bf16.gmra.mxu0 %v1790
  %v1801 = vpop.f32.mrf.mxu0
  %v1802 = vadd.f32 %v1784, %v1801
  %v1803 = vpop.f32.mrf.mxu0
  %1804 = vdwg.mxu0
  %1805 = vmatpush.bf16.msra.mxu0 0
  %1806 = vmatpush.bf16.msra.mxu0 0
  %1807 = vmatpush.bf16.msra.mxu0 0
  %1808 = vmatpush.bf16.msra.mxu0 0
  %1809 = vmatpush.bf16.msra.mxu0 %v1225
  %1810 = vmatpush.bf16.msra.mxu0 %v1223
  %1811 = vmatpush.bf16.msra.mxu0 %v1221
  %1812 = vmatpush.bf16.msra.mxu0 %v1219
  %1813 = vmatmul.bf16.gmra.mxu0 %v1790
  %v1814 = vpop.f32.mrf.mxu0
  %v1815 = vadd.f32 %v1785, %v1814
  %v1816 = vpop.f32.mrf.mxu0
  %1817 = vdwg.mxu0
  %v1818 = vxor.u32 %v1802, 2147483648
  %v1819 = vmul.f32 %v1818, 1.442695
  %v1820 = vpow.pop %v1819
  %v1821 = vadd.f32 %v1820, 1.0
  %v1822 = vrcp.pop %v1821
  %v1823 = vmul.f32 %v1821, %v1822
  %v1824 = vsub.f32 1.0, %v1823
  %v1825 = vmul.f32 %v1822, %v1824
  %v1826 = vadd.f32 %v1822, %v1825
  %vm1827 = vweird.f32 %v1821
  %vm1828 = vweird.f32 %v1822
  %vm1829 = vmor %vm1827, %vm1828
  %v1830 = vsel %vm1829, %v1822, %v1826
  %v1831 = vand.u32 2147483647, %v1821
  %vm1832 = vcmp.eq.f32.partialorder %v1831, 8.507059e+37
  %v1833 = vand.u32 %v1821, 2147483648
  %v1834 = vor.u32 1.1754944e-38, %v1833
  %v1835 = vsel %vm1832, %v1834, %v1830
  %v1836 = vmul.f32 1.0, %v1835
  %v1837 = vtanh.pop %v1815
  %v1838 = vxor.u32 %v1815, 2147483648
  %v1839 = vmul.f32 %v1838, 1.442695
  %v1840 = vpow.pop %v1839
  %v1841 = vadd.f32 %v1840, 1.0
  %v1842 = vrcp.pop %v1841
  %v1843 = vmul.f32 %v1841, %v1842
  %v1844 = vsub.f32 1.0, %v1843
  %v1845 = vmul.f32 %v1842, %v1844
  %v1846 = vadd.f32 %v1842, %v1845
  %vm1847 = vweird.f32 %v1841
  %vm1848 = vweird.f32 %v1842
  %vm1849 = vmor %vm1847, %vm1848
  %v1850 = vsel %vm1849, %v1842, %v1846
  %v1851 = vand.u32 2147483647, %v1841
  %vm1852 = vcmp.eq.f32.partialorder %v1851, 8.507059e+37
  %v1853 = vand.u32 %v1841, 2147483648
  %v1854 = vor.u32 1.1754944e-38, %v1853
  %v1855 = vsel %vm1852, %v1854, %v1850
  %v1856 = vmul.f32 1.0, %v1855
  %v1857 = vmul.f32 %v1836, %v1770
  %v1858 = vmul.f32 %v1836, %v1837
  %1860 = vrot.lane.b32.xlu0 %v1858, 64
  %v1861 = vpop.permute.xlu0 %1860
  %v1863 = vadd.f32 %v1857, %v1861
  %v1864 = vtanh.pop %v1863
  %v1865 = vmul.f32 %v1856, %v1864
  %1867 = vrot.lane.b32.xlu0 %v1865, 64
  %v1868 = vpop.permute.xlu0 %1867
  %1870 = vst.msk [vmem:[%s452] sm:$0xff] %vm120, %v1868
  %1871 = vst.msk [vmem:[%s450] sm:$0xff] %vm351, %v1868
  %v1872 = vpack.c.bf16 %v1865, %v1865
  %v1873 = vld [vmem:[%s222] sm:$0xff]
  %v1874 = vld [vmem:[%s222 + $0x8] sm:$0xff]
  %v1875 = vld [vmem:[%s217] sm:$0xff]
  %v1876 = vld [vmem:[%s217 + $0x8] sm:$0xff]
  %v1877 = vsel %vm60, %v1873, %v1875
  %v1878 = vsel %vm61, %v1874, %v1876
  %1880 = vrot.lane.b32.xlu0 %v1872, 64
  %v1881 = vpop.permute.xlu0 %1880
  %v1883 = vsel %vm267, %v1881, 0
  %1885 = vmatpush.bf16.msra.mxu0 0
  %1886 = vmatpush.bf16.msra.mxu0 0
  %1887 = vmatpush.bf16.msra.mxu0 0
  %1888 = vmatpush.bf16.msra.mxu0 0
  %1889 = vmatpush.bf16.msra.mxu0 %v1224
  %1890 = vmatpush.bf16.msra.mxu0 %v1222
  %1891 = vmatpush.bf16.msra.mxu0 %v1220
  %1892 = vmatpush.bf16.msra.mxu0 %v1218
  %1893 = vmatmul.bf16.gmra.mxu0 %v1883
  %v1894 = vpop.f32.mrf.mxu0
  %v1895 = vadd.f32 %v1877, %v1894
  %v1896 = vpop.f32.mrf.mxu0
  %1897 = vdwg.mxu0
  %1898 = vmatpush.bf16.msra.mxu0 0
  %1899 = vmatpush.bf16.msra.mxu0 0
  %1900 = vmatpush.bf16.msra.mxu0 0
  %1901 = vmatpush.bf16.msra.mxu0 0
  %1902 = vmatpush.bf16.msra.mxu0 %v1225
  %1903 = vmatpush.bf16.msra.mxu0 %v1223
  %1904 = vmatpush.bf16.msra.mxu0 %v1221
  %1905 = vmatpush.bf16.msra.mxu0 %v1219
  %1906 = vmatmul.bf16.gmra.mxu0 %v1883
  %v1907 = vpop.f32.mrf.mxu0
  %v1908 = vadd.f32 %v1878, %v1907
  %v1909 = vpop.f32.mrf.mxu0
  %1910 = vdwg.mxu0
  %v1911 = vxor.u32 %v1895, 2147483648
  %v1912 = vmul.f32 %v1911, 1.442695
  %v1913 = vpow.pop %v1912
  %v1914 = vadd.f32 %v1913, 1.0
  %v1915 = vrcp.pop %v1914
  %v1916 = vmul.f32 %v1914, %v1915
  %v1917 = vsub.f32 1.0, %v1916
  %v1918 = vmul.f32 %v1915, %v1917
  %v1919 = vadd.f32 %v1915, %v1918
  %vm1920 = vweird.f32 %v1914
  %vm1921 = vweird.f32 %v1915
  %vm1922 = vmor %vm1920, %vm1921
  %v1923 = vsel %vm1922, %v1915, %v1919
  %v1924 = vand.u32 2147483647, %v1914
  %vm1925 = vcmp.eq.f32.partialorder %v1924, 8.507059e+37
  %v1926 = vand.u32 %v1914, 2147483648
  %v1927 = vor.u32 1.1754944e-38, %v1926
  %v1928 = vsel %vm1925, %v1927, %v1923
  %v1929 = vmul.f32 1.0, %v1928
  %v1930 = vtanh.pop %v1908
  %v1931 = vxor.u32 %v1908, 2147483648
  %v1932 = vmul.f32 %v1931, 1.442695
  %v1933 = vpow.pop %v1932
  %v1934 = vadd.f32 %v1933, 1.0
  %v1935 = vrcp.pop %v1934
  %v1936 = vmul.f32 %v1934, %v1935
  %v1937 = vsub.f32 1.0, %v1936
  %v1938 = vmul.f32 %v1935, %v1937
  %v1939 = vadd.f32 %v1935, %v1938
  %vm1940 = vweird.f32 %v1934
  %vm1941 = vweird.f32 %v1935
  %vm1942 = vmor %vm1940, %vm1941
  %v1943 = vsel %vm1942, %v1935, %v1939
  %v1944 = vand.u32 2147483647, %v1934
  %vm1945 = vcmp.eq.f32.partialorder %v1944, 8.507059e+37
  %v1946 = vand.u32 %v1934, 2147483648
  %v1947 = vor.u32 1.1754944e-38, %v1946
  %v1948 = vsel %vm1945, %v1947, %v1943
  %v1949 = vmul.f32 1.0, %v1948
  %v1950 = vmul.f32 %v1929, %v1863
  %v1951 = vmul.f32 %v1929, %v1930
  %1953 = vrot.lane.b32.xlu0 %v1951, 64
  %v1954 = vpop.permute.xlu0 %1953
  %v1956 = vadd.f32 %v1950, %v1954
  %v1957 = vtanh.pop %v1956
  %v1958 = vmul.f32 %v1949, %v1957
  %1960 = vrot.lane.b32.xlu0 %v1958, 64
  %v1961 = vpop.permute.xlu0 %1960
  %1963 = vst.msk [vmem:[%s350] sm:$0xff] %vm120, %v1961
  %1964 = vst.msk [vmem:[#allocation3] sm:$0xff] %vm351, %v1961
  %v1965 = vld [vmem:[#allocation3] sm:$0xff]
  %v1966 = vld [vmem:[#allocation3 + $0x8] sm:$0xff]
  %v1967 = vld [vmem:[#allocation3 + $0x10] sm:$0xff]
  %v1968 = vld [vmem:[#allocation3 + $0x18] sm:$0xff]
  %v1969 = vld [vmem:[#allocation3 + $0x20] sm:$0xff]
  %v1970 = vld [vmem:[#allocation3 + $0x28] sm:$0xff]
  %v1971 = vld [vmem:[#allocation3 + $0x30] sm:$0xff]
  %v1972 = vld [vmem:[#allocation3 + $0x38] sm:$0xff]
  %v1973 = vpack.c.bf16 %v1966, %v1965
  %v1974 = vpack.c.bf16 %v1968, %v1967
  %v1975 = vpack.c.bf16 %v1970, %v1969
  %v1976 = vpack.c.bf16 %v1972, %v1971
  %v1977 = vld [vmem:[%s7] sm:$0xf]
  %v1978 = vld [vmem:[%s7 + $0x4] sm:$0xf]
  %v1979 = vld [vmem:[%s7 + $0x8] sm:$0xf]
  %v1980 = vld [vmem:[%s7 + $0xc] sm:$0xf]
  %v1981 = vld [vmem:[%s7 + $0x10] sm:$0xf]
  %v1982 = vld [vmem:[%s7 + $0x14] sm:$0xf]
  %v1983 = vld [vmem:[%s7 + $0x18] sm:$0xf]
  %v1984 = vld [vmem:[%s7 + $0x1c] sm:$0xf]
  %v1985 = vld [vmem:[%s8] sm:$0x1]
  %v1987 = vperm.slane %v1985, 0
  %v1997 = vunpack.c.l.b16 %v1977
  %v1998 = vunpack.c.l.b16 %v1978
  %v1999 = vunpack.c.l.b16 %v1979
  %v2000 = vunpack.c.l.b16 %v1980
  %v2001 = vunpack.c.l.b16 %v1981
  %v2002 = vunpack.c.l.b16 %v1982
  %v2003 = vunpack.c.l.b16 %v1983
  %v2004 = vunpack.c.l.b16 %v1984
  %v2005 = vpack.c.b16 %v1998, %v1997
  %v2006 = vpack.c.b16 %v2000, %v1999
  %v2007 = vpack.c.b16 %v2002, %v2001
  %v2008 = vpack.c.b16 %v2004, %v2003
  %v2014 = vsel %vm267, %v1973, 0
  %v2017 = vsel %vm267, %v1974, 0
  %v2020 = vsel %vm267, %v1975, 0
  %v2023 = vsel %vm267, %v1976, 0
  %2025 = vmatpush.bf16.msra.mxu0 0
  %2026 = vmatpush.bf16.msra.mxu0 0
  %2027 = vmatpush.bf16.msra.mxu0 0
  %2028 = vmatpush.bf16.msra.mxu0 0
  %2029 = vmatpush.bf16.msra.mxu0 %v2008
  %2030 = vmatpush.bf16.msra.mxu0 %v2007
  %2031 = vmatpush.bf16.msra.mxu0 %v2006
  %2032 = vmatpush.bf16.msra.mxu0 %v2005
  %2033 = vmatmul.bf16.gmra.mxu0 %v2014
  %v2034 = vpop.f32.mrf.mxu0
  %v2035 = vadd.f32 %v1987, %v2034
  %v2036 = vpop.f32.mrf.mxu0
  %v2037 = vadd.f32 %v1987, %v2036
  %2038 = vmatmul.bf16.gmra.mxu0 %v2017
  %v2039 = vpop.f32.mrf.mxu0
  %v2040 = vadd.f32 %v1987, %v2039
  %v2041 = vpop.f32.mrf.mxu0
  %v2042 = vadd.f32 %v1987, %v2041
  %2043 = vmatmul.bf16.gmra.mxu0 %v2020
  %v2044 = vpop.f32.mrf.mxu0
  %v2045 = vadd.f32 %v1987, %v2044
  %v2046 = vpop.f32.mrf.mxu0
  %v2047 = vadd.f32 %v1987, %v2046
  %2048 = vmatmul.bf16.gmra.mxu0 %v2023
  %v2049 = vpop.f32.mrf.mxu0
  %v2050 = vadd.f32 %v1987, %v2049
  %v2051 = vpop.f32.mrf.mxu0
  %v2052 = vadd.f32 %v1987, %v2051
  %2053 = vdwg.mxu0
  %vm2054 = vcmask 39936
  %2055 = vst.msk [vmem:[%s9] sm:$0xff] %vm2054, %v2035
  %2056 = vst.msk [vmem:[%s9 + $0x8] sm:$0xff] %vm2054, %v2037
  %2057 = vst.msk [vmem:[%s9 + $0x10] sm:$0xff] %vm2054, %v2040
  %2058 = vst.msk [vmem:[%s9 + $0x18] sm:$0xff] %vm2054, %v2042
  %2059 = vst.msk [vmem:[%s9 + $0x20] sm:$0xff] %vm2054, %v2045
  %2060 = vst.msk [vmem:[%s9 + $0x28] sm:$0xff] %vm2054, %v2047
  %2061 = vst.msk [vmem:[%s9 + $0x30] sm:$0xff] %vm2054, %v2050
  %2062 = vst.msk [vmem:[%s9 + $0x38] sm:$0xff] %vm2054, %v2052
  // Predicated region
  $region38: #{bilstm_forward.1} parent=0 // pred_check
    _
  $region39: #{bilstm_forward.1} parent=0 // pred_check_branch
    %2064 = sbr.rel (0) target = $region41
  $region40: #{bilstm_forward.1} parent=0 // pred_region
    _
  $region41: #{bilstm_forward.1} parent=0 // pred_fallthru
    _
  // Predicated region
  $region42: #{bilstm_forward.1} parent=0 // pred_check
    _
  $region43: #{bilstm_forward.1} parent=0 // pred_check_branch
    %2066 = sbr.rel (0) target = $region45
  $region44: #{bilstm_forward.1} parent=0 // pred_region
    _
  $region45: #{bilstm_forward.1} parent=0 // pred_fallthru
    _

</llo_original>
